<compile_context>
chip_gen: v6e
topology: v6e:2x2x1
jax: 0.10.0
libtpu: 0.0.40
codegen_flags: <defaults>
</compile_context>

<pallas_src>
import functools

import jax
import jax.numpy as jnp
from jax import lax
from jax.experimental import pallas as pl
from jax.experimental.pallas import tpu as pltpu

BN_EPS = 1e-5                     # PyTorch BatchNorm2d default
LANES = 128                       # TPU lane width
VMEM_LIMIT = 64 * 1024 * 1024     # scoped VMEM budget (safe on v5e/v6e/v7x)


def _round_up(x, m):
    return ((x + m - 1) // m) * m


def _conv_rows(x_ref, w_ref, b_ref, *, H, W):
    """3x3 / stride-1 / pad-1 conv (+bias) of one image as 9 MXU matmuls.

    x_ref : (1, 3, (H+2)*W, Cin) bf16 -- three width-shifted row-flattened views
    w_ref : (9, Cin, Coutp)      bf16 -- tap-major weights (resident block)
    b_ref : (1, Coutp)           f32
    returns (H*W, Coutp) f32 = conv + bias
    """
    rows = H * W
    acc = None
    for kh in range(3):
        for kw in range(3):
            lhs = x_ref[0, kw, kh * W:kh * W + rows, :]          # (rows, Cin)
            t = jnp.dot(lhs, w_ref[kh * 3 + kw],
                        preferred_element_type=jnp.float32)
            acc = t if acc is None else acc + t
    return acc + b_ref[...]


def _stats_kernel(x_ref, w_ref, b_ref, sum_ref, m2_ref, *, H, W):
    """Pass 1: per-image per-channel sum and M2 (sum of squared deviations).

    No conv writeback to HBM; tiles combined with Chan's formula in the wrapper.
    """
    acc = _conv_rows(x_ref, w_ref, b_ref, H=H, W=W)              # (rows, Coutp)
    rows = H * W
    tsum = jnp.sum(acc, axis=0, keepdims=True)                   # (1, Coutp)
    tmean = tsum * (1.0 / rows)
    d = acc - tmean
    tm2 = jnp.sum(d * d, axis=0, keepdims=True)                  # (1, Coutp)
    sum_ref[0] = tsum
    m2_ref[0] = tm2


def _bn_act_kernel(x_ref, w_ref, b_ref, scale_ref, shift_ref, o_ref, *, H, W):
    """Pass 2: recompute conv, fold BN into scale/shift, ReLU6, lane-dense store."""
    acc = _conv_rows(x_ref, w_ref, b_ref, H=H, W=W)              # (rows, Coutp)
    y = acc * scale_ref[...] + shift_ref[...]
    o_ref[0] = jnp.minimum(jnp.maximum(y, 0.0), 6.0)


def conv_bn_act(x_nchw, weight_hwio, bias, gamma, beta):
    """NCHW in -> NCHW out (PyTorch layout at the interface)."""
    N, Cin, H, W = x_nchw.shape
    KH, KW, wcin, Cout = weight_hwio.shape
    assert (KH, KW) == (3, 3) and wcin == Cin, \
        "only the 3x3 / stride 1 / pad 1 / groups 1 default is implemented"

    Coutp = _round_up(Cout, LANES)      # lane-dense output channels
    HW = H * W
    M = N * HW
    Hp2W = (H + 2) * W

    # ---- layout plumbing (plain JAX): NHWC bf16, halo pad, 3 width-shifted
    #      row-flattened views.  No im2col / no f32 intermediates in HBM. ----
    x_nhwc = jnp.transpose(x_nchw, (0, 2, 3, 1)).astype(jnp.bfloat16)
    x_pad = jnp.pad(x_nhwc, ((0, 0), (1, 1), (1, 1), (0, 0)))    # padding = 1
    xs = jnp.stack(
        [x_pad[:, :, kw:kw + W, :].reshape(N, Hp2W, Cin) for kw in range(3)],
        axis=1)                                                  # (N, 3, (H+2)*W, Cin)

    w9 = weight_hwio.astype(jnp.bfloat16).reshape(9, Cin, Cout)
    w9 = jnp.pad(w9, ((0, 0), (0, 0), (0, Coutp - Cout)))
    b_p = jnp.pad(bias.astype(jnp.float32), (0, Coutp - Cout)).reshape(1, Coutp)

    x_spec = pl.BlockSpec((1, 3, Hp2W, Cin), lambda n: (n, 0, 0, 0))
    w_spec = pl.BlockSpec((9, Cin, Coutp), lambda n: (0, 0, 0))
    vec_spec = pl.BlockSpec((1, Coutp), lambda n: (0, 0))

    cparams = pltpu.CompilerParams(
        dimension_semantics=("parallel",),     # no resident accumulators -> both v7x TCs usable
        vmem_limit_bytes=VMEM_LIMIT,
    )

    # ---- pass 1: per-image stats (sum, M2) -- conv is never written to HBM ----
    sums, m2s = pl.pallas_call(
        functools.partial(_stats_kernel, H=H, W=W),
        out_shape=(
            jax.ShapeDtypeStruct((N, 1, Coutp), jnp.float32),
            jax.ShapeDtypeStruct((N, 1, Coutp), jnp.float32),
        ),
        grid=(N,),
        in_specs=[x_spec, w_spec, vec_spec],
        out_specs=(
            pl.BlockSpec((1, 1, Coutp), lambda n: (n, 0, 0)),
            pl.BlockSpec((1, 1, Coutp), lambda n: (n, 0, 0)),
        ),
        compiler_params=cparams,
    )(xs, w9, b_p)

    sums = sums[:, 0, :]                                         # (N, Coutp)
    m2s = m2s[:, 0, :]                                           # (N, Coutp)

    # ---- fold training-mode BN into per-channel scale/shift (Chan combine) ----
    mean_i = sums / HW
    mean = jnp.sum(sums, axis=0) / M
    m2 = jnp.sum(m2s, axis=0) + HW * jnp.sum((mean_i - mean) ** 2, axis=0)
    var = m2 / M                                                 # biased variance (BN training)
    gamma_p = jnp.pad(gamma.astype(jnp.float32), (0, Coutp - Cout))
    beta_p = jnp.pad(beta.astype(jnp.float32), (0, Coutp - Cout))
    scale = gamma_p * lax.rsqrt(var + BN_EPS)
    shift = beta_p - mean * scale

    # ---- pass 2: recompute conv fused with scale/shift + ReLU6 ----
    y = pl.pallas_call(
        functools.partial(_bn_act_kernel, H=H, W=W),
        out_shape=jax.ShapeDtypeStruct((N, HW, Coutp), jnp.float32),
        grid=(N,),
        in_specs=[x_spec, w_spec, vec_spec, vec_spec, vec_spec],
        out_specs=pl.BlockSpec((1, HW, Coutp), lambda n: (n, 0, 0)),
        compiler_params=cparams,
    )(xs, w9, b_p, scale.reshape(1, Coutp), shift.reshape(1, Coutp))

    out_nhwc = y[:, :, :Cout].reshape(N, H, W, Cout)
    return jnp.transpose(out_nhwc, (0, 3, 1, 2))                 # back to NCHW
    # TODO(synk): the NCHW<->NHWC transposes are kept only because the module's
    #             interface is NCHW; drop them if the surrounding model is channels-last.


def reference(x_nchw, weight_hwio, bias, gamma, beta):
    """Pure-JAX reference (same forward pass). Conv in bf16 operands with f32
    accumulation to match the kernel's MXU dtype choice; BN / act in f32."""
    x_nhwc = jnp.transpose(x_nchw, (0, 2, 3, 1)).astype(jnp.bfloat16)
    w = weight_hwio.astype(jnp.bfloat16)
    conv = lax.conv_general_dilated(
        x_nhwc, w, window_strides=(1, 1), padding=((1, 1), (1, 1)),
        dimension_numbers=("NHWC", "HWIO", "NHWC"),
        preferred_element_type=jnp.float32,
    ) + bias.reshape(1, 1, 1, -1).astype(jnp.float32)
    mean = jnp.mean(conv, axis=(0, 1, 2), keepdims=True)
    var = jnp.mean((conv - mean) ** 2, axis=(0, 1, 2), keepdims=True)
    y = (conv - mean) * lax.rsqrt(var + BN_EPS) * gamma.reshape(1, 1, 1, -1) \
        + beta.reshape(1, 1, 1, -1)
    y = jnp.minimum(jnp.maximum(y, 0.0), 6.0)
    return jnp.transpose(y, (0, 3, 1, 2))


if __name__ == "__main__":
    # Small shapes consistent with the module: ConvBNAct(in_channels=4, out_channels=8)
    N, Cin, H, W = 2, 4, 16, 16
    Cout = 8

    key = jax.random.PRNGKey(0)
    kx, kw, kb, kg, kbeta = jax.random.split(key, 5)

    x = jax.random.normal(kx, (N, Cin, H, W), dtype=jnp.float32)
    weight = jax.random.normal(kw, (3, 3, Cin, Cout), dtype=jnp.float32) * 0.1   # HWIO
    bias = jax.random.normal(kb, (Cout,), dtype=jnp.float32) * 0.1
    gamma = 1.0 + 0.1 * jax.random.normal(kg, (Cout,), dtype=jnp.float32)        # BN weight
    beta = 0.1 * jax.random.normal(kbeta, (Cout,), dtype=jnp.float32)            # BN bias

    out = jax.block_until_ready(conv_bn_act(x, weight, bias, gamma, beta))
    ref = jax.block_until_ready(reference(x, weight, bias, gamma, beta))

    assert out.shape == (N, Cout, H, W), out.shape
    assert jnp.allclose(out, ref, rtol=1e-3, atol=1e-3), float(jnp.max(jnp.abs(out - ref)))

    print("KERNEL_OK")
</pallas_src>

<mosaic_0001>
module attributes {stable_mosaic.version = 11 : i64} {
  func.func @_stats_kernel(%arg0: i32, %arg1: memref<1x3x288x4xbf16, #tpu.memory_space<vmem>>, %arg2: memref<9x4x128xbf16, #tpu.memory_space<vmem>>, %arg3: memref<1x128xf32, #tpu.memory_space<vmem>>, %arg4: memref<1x1x128xf32, #tpu.memory_space<vmem>>, %arg5: memref<1x1x128xf32, #tpu.memory_space<vmem>>) attributes {dimension_semantics = [#tpu.dimension_semantics<parallel>], iteration_bounds = array<i64: 2>, scalar_prefetch = 0 : i64, scratch_operands = 0 : i64, tpu.core_type = #tpu.core_type<tc>, window_params = [{transform_indices = @transform_0, window_bounds = array<i64: 1, 3, 288, 4>}, {pipeline_mode = #tpu.pipeline_mode<synchronous>, transform_indices = @transform_1, window_bounds = array<i64: 9, 4, 128>}, {pipeline_mode = #tpu.pipeline_mode<synchronous>, transform_indices = @transform_2, window_bounds = array<i64: 1, 128>}, {transform_indices = @transform_3, window_bounds = array<i64: 1, 1, 128>}, {transform_indices = @transform_4, window_bounds = array<i64: 1, 1, 128>}]} {
    %c0 = arith.constant 0 : index
    %c0_0 = arith.constant 0 : index
    %c0_1 = arith.constant 0 : index
    %c0_2 = arith.constant 0 : index
    %0 = vector.load %arg1[%c0, %c0_0, %c0_1, %c0_2] : memref<1x3x288x4xbf16, #tpu.memory_space<vmem>>, vector<1x1x256x4xbf16>
    %1 = vector.shape_cast %0 : vector<1x1x256x4xbf16> to vector<256x4xbf16>
    %c0_3 = arith.constant 0 : index
    %c0_4 = arith.constant 0 : index
    %c0_5 = arith.constant 0 : index
    %2 = vector.load %arg2[%c0_3, %c0_4, %c0_5] : memref<9x4x128xbf16, #tpu.memory_space<vmem>>, vector<1x4x128xbf16>
    %3 = vector.shape_cast %2 : vector<1x4x128xbf16> to vector<4x128xbf16>
    %cst = arith.constant dense<0.000000e+00> : vector<256x128xf32>
    %4 = tpu.matmul %1, %3, %cst {dimension_numbers = #tpu.dot_dimension_numbers<[1], [0], [0], [1], [0, 0, 1, 1], [], []>} : vector<256x4xbf16>, vector<4x128xbf16>, vector<256x128xf32> -> vector<256x128xf32>
    %c0_6 = arith.constant 0 : index
    %c1 = arith.constant 1 : index
    %c0_7 = arith.constant 0 : index
    %c0_8 = arith.constant 0 : index
    %5 = vector.load %arg1[%c0_6, %c1, %c0_7, %c0_8] : memref<1x3x288x4xbf16, #tpu.memory_space<vmem>>, vector<1x1x256x4xbf16>
    %6 = vector.shape_cast %5 : vector<1x1x256x4xbf16> to vector<256x4xbf16>
    %c1_9 = arith.constant 1 : index
    %c0_10 = arith.constant 0 : index
    %c0_11 = arith.constant 0 : index
    %7 = vector.load %arg2[%c1_9, %c0_10, %c0_11] : memref<9x4x128xbf16, #tpu.memory_space<vmem>>, vector<1x4x128xbf16>
    %8 = vector.shape_cast %7 : vector<1x4x128xbf16> to vector<4x128xbf16>
    %cst_12 = arith.constant dense<0.000000e+00> : vector<256x128xf32>
    %9 = tpu.matmul %6, %8, %cst_12 {dimension_numbers = #tpu.dot_dimension_numbers<[1], [0], [0], [1], [0, 0, 1, 1], [], []>} : vector<256x4xbf16>, vector<4x128xbf16>, vector<256x128xf32> -> vector<256x128xf32>
    %10 = arith.addf %4, %9 : vector<256x128xf32>
    %c0_13 = arith.constant 0 : index
    %c2 = arith.constant 2 : index
    %c0_14 = arith.constant 0 : index
    %c0_15 = arith.constant 0 : index
    %11 = vector.load %arg1[%c0_13, %c2, %c0_14, %c0_15] : memref<1x3x288x4xbf16, #tpu.memory_space<vmem>>, vector<1x1x256x4xbf16>
    %12 = vector.shape_cast %11 : vector<1x1x256x4xbf16> to vector<256x4xbf16>
    %c2_16 = arith.constant 2 : index
    %c0_17 = arith.constant 0 : index
    %c0_18 = arith.constant 0 : index
    %13 = vector.load %arg2[%c2_16, %c0_17, %c0_18] : memref<9x4x128xbf16, #tpu.memory_space<vmem>>, vector<1x4x128xbf16>
    %14 = vector.shape_cast %13 : vector<1x4x128xbf16> to vector<4x128xbf16>
    %cst_19 = arith.constant dense<0.000000e+00> : vector<256x128xf32>
    %15 = tpu.matmul %12, %14, %cst_19 {dimension_numbers = #tpu.dot_dimension_numbers<[1], [0], [0], [1], [0, 0, 1, 1], [], []>} : vector<256x4xbf16>, vector<4x128xbf16>, vector<256x128xf32> -> vector<256x128xf32>
    %16 = arith.addf %10, %15 : vector<256x128xf32>
    %c0_20 = arith.constant 0 : index
    %c0_21 = arith.constant 0 : index
    %c16 = arith.constant 16 : index
    %c0_22 = arith.constant 0 : index
    %17 = vector.load %arg1[%c0_20, %c0_21, %c16, %c0_22] : memref<1x3x288x4xbf16, #tpu.memory_space<vmem>>, vector<1x1x256x4xbf16>
    %18 = vector.shape_cast %17 : vector<1x1x256x4xbf16> to vector<256x4xbf16>
    %c3 = arith.constant 3 : index
    %c0_23 = arith.constant 0 : index
    %c0_24 = arith.constant 0 : index
    %19 = vector.load %arg2[%c3, %c0_23, %c0_24] : memref<9x4x128xbf16, #tpu.memory_space<vmem>>, vector<1x4x128xbf16>
    %20 = vector.shape_cast %19 : vector<1x4x128xbf16> to vector<4x128xbf16>
    %cst_25 = arith.constant dense<0.000000e+00> : vector<256x128xf32>
    %21 = tpu.matmul %18, %20, %cst_25 {dimension_numbers = #tpu.dot_dimension_numbers<[1], [0], [0], [1], [0, 0, 1, 1], [], []>} : vector<256x4xbf16>, vector<4x128xbf16>, vector<256x128xf32> -> vector<256x128xf32>
    %22 = arith.addf %16, %21 : vector<256x128xf32>
    %c0_26 = arith.constant 0 : index
    %c1_27 = arith.constant 1 : index
    %c16_28 = arith.constant 16 : index
    %c0_29 = arith.constant 0 : index
    %23 = vector.load %arg1[%c0_26, %c1_27, %c16_28, %c0_29] : memref<1x3x288x4xbf16, #tpu.memory_space<vmem>>, vector<1x1x256x4xbf16>
    %24 = vector.shape_cast %23 : vector<1x1x256x4xbf16> to vector<256x4xbf16>
    %c4 = arith.constant 4 : index
    %c0_30 = arith.constant 0 : index
    %c0_31 = arith.constant 0 : index
    %25 = vector.load %arg2[%c4, %c0_30, %c0_31] : memref<9x4x128xbf16, #tpu.memory_space<vmem>>, vector<1x4x128xbf16>
    %26 = vector.shape_cast %25 : vector<1x4x128xbf16> to vector<4x128xbf16>
    %cst_32 = arith.constant dense<0.000000e+00> : vector<256x128xf32>
    %27 = tpu.matmul %24, %26, %cst_32 {dimension_numbers = #tpu.dot_dimension_numbers<[1], [0], [0], [1], [0, 0, 1, 1], [], []>} : vector<256x4xbf16>, vector<4x128xbf16>, vector<256x128xf32> -> vector<256x128xf32>
    %28 = arith.addf %22, %27 : vector<256x128xf32>
    %c0_33 = arith.constant 0 : index
    %c2_34 = arith.constant 2 : index
    %c16_35 = arith.constant 16 : index
    %c0_36 = arith.constant 0 : index
    %29 = vector.load %arg1[%c0_33, %c2_34, %c16_35, %c0_36] : memref<1x3x288x4xbf16, #tpu.memory_space<vmem>>, vector<1x1x256x4xbf16>
    %30 = vector.shape_cast %29 : vector<1x1x256x4xbf16> to vector<256x4xbf16>
    %c5 = arith.constant 5 : index
    %c0_37 = arith.constant 0 : index
    %c0_38 = arith.constant 0 : index
    %31 = vector.load %arg2[%c5, %c0_37, %c0_38] : memref<9x4x128xbf16, #tpu.memory_space<vmem>>, vector<1x4x128xbf16>
    %32 = vector.shape_cast %31 : vector<1x4x128xbf16> to vector<4x128xbf16>
    %cst_39 = arith.constant dense<0.000000e+00> : vector<256x128xf32>
    %33 = tpu.matmul %30, %32, %cst_39 {dimension_numbers = #tpu.dot_dimension_numbers<[1], [0], [0], [1], [0, 0, 1, 1], [], []>} : vector<256x4xbf16>, vector<4x128xbf16>, vector<256x128xf32> -> vector<256x128xf32>
    %34 = arith.addf %28, %33 : vector<256x128xf32>
    %c0_40 = arith.constant 0 : index
    %c0_41 = arith.constant 0 : index
    %c32 = arith.constant 32 : index
    %c0_42 = arith.constant 0 : index
    %35 = vector.load %arg1[%c0_40, %c0_41, %c32, %c0_42] : memref<1x3x288x4xbf16, #tpu.memory_space<vmem>>, vector<1x1x256x4xbf16>
    %36 = vector.shape_cast %35 : vector<1x1x256x4xbf16> to vector<256x4xbf16>
    %c6 = arith.constant 6 : index
    %c0_43 = arith.constant 0 : index
    %c0_44 = arith.constant 0 : index
    %37 = vector.load %arg2[%c6, %c0_43, %c0_44] : memref<9x4x128xbf16, #tpu.memory_space<vmem>>, vector<1x4x128xbf16>
    %38 = vector.shape_cast %37 : vector<1x4x128xbf16> to vector<4x128xbf16>
    %cst_45 = arith.constant dense<0.000000e+00> : vector<256x128xf32>
    %39 = tpu.matmul %36, %38, %cst_45 {dimension_numbers = #tpu.dot_dimension_numbers<[1], [0], [0], [1], [0, 0, 1, 1], [], []>} : vector<256x4xbf16>, vector<4x128xbf16>, vector<256x128xf32> -> vector<256x128xf32>
    %40 = arith.addf %34, %39 : vector<256x128xf32>
    %c0_46 = arith.constant 0 : index
    %c1_47 = arith.constant 1 : index
    %c32_48 = arith.constant 32 : index
    %c0_49 = arith.constant 0 : index
    %41 = vector.load %arg1[%c0_46, %c1_47, %c32_48, %c0_49] : memref<1x3x288x4xbf16, #tpu.memory_space<vmem>>, vector<1x1x256x4xbf16>
    %42 = vector.shape_cast %41 : vector<1x1x256x4xbf16> to vector<256x4xbf16>
    %c7 = arith.constant 7 : index
    %c0_50 = arith.constant 0 : index
    %c0_51 = arith.constant 0 : index
    %43 = vector.load %arg2[%c7, %c0_50, %c0_51] : memref<9x4x128xbf16, #tpu.memory_space<vmem>>, vector<1x4x128xbf16>
    %44 = vector.shape_cast %43 : vector<1x4x128xbf16> to vector<4x128xbf16>
    %cst_52 = arith.constant dense<0.000000e+00> : vector<256x128xf32>
    %45 = tpu.matmul %42, %44, %cst_52 {dimension_numbers = #tpu.dot_dimension_numbers<[1], [0], [0], [1], [0, 0, 1, 1], [], []>} : vector<256x4xbf16>, vector<4x128xbf16>, vector<256x128xf32> -> vector<256x128xf32>
    %46 = arith.addf %40, %45 : vector<256x128xf32>
    %c0_53 = arith.constant 0 : index
    %c2_54 = arith.constant 2 : index
    %c32_55 = arith.constant 32 : index
    %c0_56 = arith.constant 0 : index
    %47 = vector.load %arg1[%c0_53, %c2_54, %c32_55, %c0_56] : memref<1x3x288x4xbf16, #tpu.memory_space<vmem>>, vector<1x1x256x4xbf16>
    %48 = vector.shape_cast %47 : vector<1x1x256x4xbf16> to vector<256x4xbf16>
    %c8 = arith.constant 8 : index
    %c0_57 = arith.constant 0 : index
    %c0_58 = arith.constant 0 : index
    %49 = vector.load %arg2[%c8, %c0_57, %c0_58] : memref<9x4x128xbf16, #tpu.memory_space<vmem>>, vector<1x4x128xbf16>
    %50 = vector.shape_cast %49 : vector<1x4x128xbf16> to vector<4x128xbf16>
    %cst_59 = arith.constant dense<0.000000e+00> : vector<256x128xf32>
    %51 = tpu.matmul %48, %50, %cst_59 {dimension_numbers = #tpu.dot_dimension_numbers<[1], [0], [0], [1], [0, 0, 1, 1], [], []>} : vector<256x4xbf16>, vector<4x128xbf16>, vector<256x128xf32> -> vector<256x128xf32>
    %52 = arith.addf %46, %51 : vector<256x128xf32>
    %c0_60 = arith.constant 0 : index
    %c0_61 = arith.constant 0 : index
    %53 = vector.load %arg3[%c0_60, %c0_61] : memref<1x128xf32, #tpu.memory_space<vmem>>, vector<1x128xf32>
    %54 = vector.broadcast %53 : vector<1x128xf32> to vector<256x128xf32>
    %55 = arith.addf %52, %54 : vector<256x128xf32>
    %cst_62 = arith.constant dense<0.000000e+00> : vector<128xf32>
    %56 = vector.multi_reduction <add>, %55, %cst_62 [0] : vector<256x128xf32> to vector<128xf32>
    %57 = vector.shape_cast %56 : vector<128xf32> to vector<1x128xf32>
    %cst_63 = arith.constant 3.906250e-03 : f32
    %58 = vector.broadcast %cst_63 : f32 to vector<1x128xf32>
    %59 = arith.mulf %57, %58 : vector<1x128xf32>
    %60 = vector.broadcast %59 : vector<1x128xf32> to vector<256x128xf32>
    %61 = arith.subf %55, %60 : vector<256x128xf32>
    %62 = arith.mulf %61, %61 : vector<256x128xf32>
    %cst_64 = arith.constant dense<0.000000e+00> : vector<128xf32>
    %63 = vector.multi_reduction <add>, %62, %cst_64 [0] : vector<256x128xf32> to vector<128xf32>
    %64 = vector.shape_cast %63 : vector<128xf32> to vector<1x128xf32>
    %c0_65 = arith.constant 0 : index
    %c0_66 = arith.constant 0 : index
    %c0_67 = arith.constant 0 : index
    %65 = vector.load %arg4[%c0_65, %c0_66, %c0_67] : memref<1x1x128xf32, #tpu.memory_space<vmem>>, vector<1x1x128xf32>
    %66 = vector.shape_cast %65 : vector<1x1x128xf32> to vector<1x128xf32>
    %67 = vector.shape_cast %57 : vector<1x128xf32> to vector<1x1x128xf32>
    tpu.vector_store %arg4[%c0_65, %c0_66, %c0_67], %67 {strides = array<i32>} : memref<1x1x128xf32, #tpu.memory_space<vmem>>, vector<1x1x128xf32>,
    %c0_68 = arith.constant 0 : index
    %c0_69 = arith.constant 0 : index
    %c0_70 = arith.constant 0 : index
    %68 = vector.load %arg5[%c0_68, %c0_69, %c0_70] : memref<1x1x128xf32, #tpu.memory_space<vmem>>, vector<1x1x128xf32>
    %69 = vector.shape_cast %68 : vector<1x1x128xf32> to vector<1x128xf32>
    %70 = vector.shape_cast %64 : vector<1x128xf32> to vector<1x1x128xf32>
    tpu.vector_store %arg5[%c0_68, %c0_69, %c0_70], %70 {strides = array<i32>} : memref<1x1x128xf32, #tpu.memory_space<vmem>>, vector<1x1x128xf32>,
    return
  }
  func.func @transform_0(%arg0: i32) -> (i32, i32, i32, i32) {
    %c0_i32 = arith.constant 0 : i32
    %c0_i32_0 = arith.constant 0 : i32
    %c0_i32_1 = arith.constant 0 : i32
    %c0_i32_2 = arith.constant 0 : i32
    return %arg0, %c0_i32, %c0_i32_0, %c0_i32_1 : i32, i32, i32, i32
  }
  func.func @transform_1(%arg0: i32) -> (i32, i32, i32) {
    %c0_i32 = arith.constant 0 : i32
    %c0_i32_0 = arith.constant 0 : i32
    %c0_i32_1 = arith.constant 0 : i32
    %c0_i32_2 = arith.constant 0 : i32
    return %c0_i32, %c0_i32_0, %c0_i32_1 : i32, i32, i32
  }
  func.func @transform_2(%arg0: i32) -> (i32, i32) {
    %c0_i32 = arith.constant 0 : i32
    %c0_i32_0 = arith.constant 0 : i32
    %c0_i32_1 = arith.constant 0 : i32
    return %c0_i32, %c0_i32_0 : i32, i32
  }
  func.func @transform_3(%arg0: i32) -> (i32, i32, i32) {
    %c0_i32 = arith.constant 0 : i32
    %c0_i32_0 = arith.constant 0 : i32
    %c0_i32_1 = arith.constant 0 : i32
    return %arg0, %c0_i32, %c0_i32_0 : i32, i32, i32
  }
  func.func @transform_4(%arg0: i32) -> (i32, i32, i32) {
    %c0_i32 = arith.constant 0 : i32
    %c0_i32_0 = arith.constant 0 : i32
    %c0_i32_1 = arith.constant 0 : i32
    return %arg0, %c0_i32, %c0_i32_0 : i32, i32, i32
  }
}

</mosaic_0001>

<llo_original>
// kernel: tpu_custom_call.1
$region0: #{tpu_custom_call.1}
  #allocation0 [shape = 'u32[]', space=smem, size = 0x4, offset = 0x4, fixed_abs, tag = 'smem constant byte address 0x4 - core index']
  #allocation1 [shape = 'u32[144,128]{1,0:T(1,128)}', space=vmem, size = 0x12000, scoped, tag = 'internal scratch']
  %s0 = inlined_call_operand.vmem [shape: bf16[2,3,288,4], index: 0, kind: input, shape index: {}]
  %s1 = inlined_call_operand.vmem [shape: bf16[9,4,128], index: 1, kind: input, shape index: {}]
  %s2 = inlined_call_operand.vmem [shape: f32[1,128], index: 2, kind: input, shape index: {}]
  %s3 = inlined_call_operand.hbm [shape: f32[2,1,128], index: 3, kind: output, shape index: {0}]
  %s4 = inlined_call_operand.hbm [shape: f32[2,1,128], index: 4, kind: output, shape index: {1}]
  %5 = xla_tuple %s3, %s4
  %s6 = sld [smem:[#allocation0]]
  $region53: #{tpu_custom_call.1} parent=0
    _
  %s8 = ssub.s32 1, %s6
  %s9 = scalar_select 0, %s8, %s6
  $region1: #{tpu_custom_call.1} parent=0
    #allocation2 [shape = 'u8[1024]{0}', space=vmem, size = 0x400, scoped, tag = 'output window, operand 0']
    #allocation3 [shape = 's32[2]{0}', space=sflag, size = 0x8, scoped, tag = 'scoped memory for tpu_custom_call.1']
    #allocation4 [shape = 'u8[1024]{0}', space=vmem, size = 0x400, scoped, tag = 'output window, operand 1']
    #allocation5 [shape = 's32[2]{0}', space=sflag, size = 0x8, scoped, tag = 'scoped memory for tpu_custom_call.1']
    %10 = vsyncpa [#allocation3], 0
    %s11 = scalar_lea.sflag [#allocation3], 1
    %12 = vsyncpa %s11, 0
    %13 = vsyncpa [#allocation5], 0
    %s14 = scalar_lea.sflag [#allocation5], 1
    %15 = vsyncpa %s14, 0
    loop: start=0, step=1, limit=4
    $region2: #{tpu_custom_call.1} parent=1 // loop_pre_header
      _
    $region3: #{tpu_custom_call.1} parent=1 // loop_header
      %s17 = sphi 0, %s21
      %p18 = scmp.ge.s32.totalorder %s17, 4
      %s27 = sphi 0, %s29
      %s30 = sphi 0, %s27
      %s31 = sphi 0, %s30
      %s47 = sphi 0, %s31
      %s51 = sphi 0, %s51
      %s53 = sphi 0, %s51
      %s54 = sphi 0, %s53
      %s68 = sphi 0, %s54
      %s72 = sphi 0, %s72
      %s74 = sphi 0, %s72
      %s75 = sphi 0, %s74
      %s89 = sphi 0, %s75
      %s95 = sphi 0, %s97
      %s98 = sphi 0, %s95
      %s99 = sphi 0, %s98
      %s115 = sphi 0, %s99
      %s121 = sphi 0, %s123
      %s124 = sphi 0, %s121
      %s125 = sphi 0, %s124
      %s141 = sphi 0, %s125
    $region4: #{tpu_custom_call.1} parent=1 // loop_header_branch
      %20 = sbr.rel (%p18) target = $region8
    $region5: #{tpu_custom_call.1} parent=1 // loop_body
      %s22 = ssub.s32 %s17, 1
      %s23 = ssub.s32 %s17, 2
      %s24 = sadd.s32 %s17, 1
      %s25 = ssub.s32 %s17, %s24
      %p26 = scmp.eq.s32.totalorder %s25, 0
      %s28 = sadd.s32 %s27, 1
      %s29 = scalar_select %p26, %s27, %s28
      %p32 = pneg %p26
      %p33 = scmp.eq.s32.totalorder %s17, 1
      %p34 = por %p32, %p33
      %p35 = scmp.ne.s32.totalorder %s27, %s30
      %p36 = scmp.eq.s32.totalorder %s17, 0
      %p37 = por %p35, %p36
      %p38 = scmp.ne.s32.totalorder %s27, %s30
      %p39 = scmp.eq.s32.totalorder %s22, 1
      %p40 = por %p38, %p39
      %p41 = scmp.ne.s32.totalorder %s30, %s31
      %p42 = scmp.eq.s32.totalorder %s22, 0
      %p43 = por %p41, %p42
      %p44 = scmp.ne.s32.totalorder %s30, %s31
      %p45 = scmp.eq.s32.totalorder %s23, 1
      %p46 = por %p44, %p45
      %p48 = scmp.ne.s32.totalorder %s31, %s47
      %p49 = scmp.eq.s32.totalorder %s23, 0
      %p50 = por %p48, %p49
      %s52 = sadd.s32 %s51, 1
      %p55 = scmp.eq.s32.totalorder %s17, 1
      %p56 = scmp.ne.s32.totalorder %s51, %s53
      %p57 = scmp.eq.s32.totalorder %s17, 0
      %p58 = por %p56, %p57
      %p59 = scmp.ne.s32.totalorder %s51, %s53
      %p60 = scmp.eq.s32.totalorder %s22, 1
      %p61 = por %p59, %p60
      %p62 = scmp.ne.s32.totalorder %s53, %s54
      %p63 = scmp.eq.s32.totalorder %s22, 0
      %p64 = por %p62, %p63
      %p65 = scmp.ne.s32.totalorder %s53, %s54
      %p66 = scmp.eq.s32.totalorder %s23, 1
      %p67 = por %p65, %p66
      %p69 = scmp.ne.s32.totalorder %s54, %s68
      %p70 = scmp.eq.s32.totalorder %s23, 0
      %p71 = por %p69, %p70
      %s73 = sadd.s32 %s72, 1
      %p76 = scmp.eq.s32.totalorder %s17, 1
      %p77 = scmp.ne.s32.totalorder %s72, %s74
      %p78 = scmp.eq.s32.totalorder %s17, 0
      %p79 = por %p77, %p78
      %p80 = scmp.ne.s32.totalorder %s72, %s74
      %p81 = scmp.eq.s32.totalorder %s22, 1
      %p82 = por %p80, %p81
      %p83 = scmp.ne.s32.totalorder %s74, %s75
      %p84 = scmp.eq.s32.totalorder %s22, 0
      %p85 = por %p83, %p84
      %p86 = scmp.ne.s32.totalorder %s74, %s75
      %p87 = scmp.eq.s32.totalorder %s23, 1
      %p88 = por %p86, %p87
      %p90 = scmp.ne.s32.totalorder %s75, %s89
      %p91 = scmp.eq.s32.totalorder %s23, 0
      %p92 = por %p90, %p91
      %s93 = ssub.s32 %s17, %s24
      %p94 = scmp.eq.s32.totalorder %s93, 0
      %s96 = sadd.s32 %s95, 1
      %s97 = scalar_select %p94, %s95, %s96
      %p100 = pneg %p94
      %p101 = scmp.eq.s32.totalorder %s17, 1
      %p102 = por %p100, %p101
      %p103 = scmp.ne.s32.totalorder %s95, %s98
      %p104 = scmp.eq.s32.totalorder %s17, 0
      %p105 = por %p103, %p104
      %p106 = scmp.ne.s32.totalorder %s95, %s98
      %p107 = scmp.eq.s32.totalorder %s22, 1
      %p108 = por %p106, %p107
      %p109 = scmp.ne.s32.totalorder %s98, %s99
      %p110 = scmp.eq.s32.totalorder %s22, 0
      %p111 = por %p109, %p110
      %p112 = scmp.ne.s32.totalorder %s98, %s99
      %p113 = scmp.eq.s32.totalorder %s23, 1
      %p114 = por %p112, %p113
      %p116 = scmp.ne.s32.totalorder %s99, %s115
      %p117 = scmp.eq.s32.totalorder %s23, 0
      %p118 = por %p116, %p117
      %s119 = ssub.s32 %s17, %s24
      %p120 = scmp.eq.s32.totalorder %s119, 0
      %s122 = sadd.s32 %s121, 1
      %s123 = scalar_select %p120, %s121, %s122
      %p126 = pneg %p120
      %p127 = scmp.eq.s32.totalorder %s17, 1
      %p128 = por %p126, %p127
      %p129 = scmp.ne.s32.totalorder %s121, %s124
      %p130 = scmp.eq.s32.totalorder %s17, 0
      %p131 = por %p129, %p130
      %p132 = scmp.ne.s32.totalorder %s121, %s124
      %p133 = scmp.eq.s32.totalorder %s22, 1
      %p134 = por %p132, %p133
      %p135 = scmp.ne.s32.totalorder %s124, %s125
      %p136 = scmp.eq.s32.totalorder %s22, 0
      %p137 = por %p135, %p136
      %p138 = scmp.ne.s32.totalorder %s124, %s125
      %p139 = scmp.eq.s32.totalorder %s23, 1
      %p140 = por %p138, %p139
      %p142 = scmp.ne.s32.totalorder %s125, %s141
      %p143 = scmp.eq.s32.totalorder %s23, 0
      %p144 = por %p142, %p143
      %p145 = scmp.le.s32.totalorder 1, %s17
      %p146 = scmp.lt.s32.totalorder %s17, 3
      %p147 = pnand %p145, %p146
      %p148 = pneg %p147
      // Predicated region
      $region9: #{tpu_custom_call.1} parent=5 // pred_check
        _
      $region10: #{tpu_custom_call.1} parent=5 // pred_check_branch
        %150 = sbr.rel (%p147) target = $region12
      $region11: #{tpu_custom_call.1} parent=5 // pred_region
        %s151 = ssub.s32 %s17, 1
        // Predicated region
        $region13: #{tpu_custom_call.1} parent=11 // pred_check
          %p152 = pneg %p64
        $region14: #{tpu_custom_call.1} parent=11 // pred_check_branch
          %154 = sbr.rel (%p152) target = $region16
        $region15: #{tpu_custom_call.1} parent=11 // pred_region
          _
        $region16: #{tpu_custom_call.1} parent=11 // pred_fallthru
          _
        // Predicated region
        $region17: #{tpu_custom_call.1} parent=11 // pred_check
          %p155 = pneg %p85
        $region18: #{tpu_custom_call.1} parent=11 // pred_check_branch
          %157 = sbr.rel (%p155) target = $region20
        $region19: #{tpu_custom_call.1} parent=11 // pred_region
          _
        $region20: #{tpu_custom_call.1} parent=11 // pred_fallthru
          _
      $region12: #{tpu_custom_call.1} parent=5 // pred_fallthru
        _
      %p158 = scmp.lt.s32.totalorder %s17, 2
      // Predicated region
      $region21: #{tpu_custom_call.1} parent=5 // pred_check
        %p159 = pneg %p158
      $region22: #{tpu_custom_call.1} parent=5 // pred_check_branch
        %161 = sbr.rel (%p159) target = $region24
      $region23: #{tpu_custom_call.1} parent=5 // pred_region
        // Predicated region
        $region25: #{tpu_custom_call.1} parent=23 // pred_check
          %p162 = pneg %p37
        $region26: #{tpu_custom_call.1} parent=23 // pred_check_branch
          %164 = sbr.rel (%p162) target = $region28
        $region27: #{tpu_custom_call.1} parent=23 // pred_region
          %p165 = scmp.lt.s32.totalorder %s17, 1
          %s166 = scalar_select %p165, %s17, 1
          %s167 = smul.addr %s166, 108
          %s168 = smul.addr %s167, 4
          %s169 = scalar_lea.vmem %s0, %s168
        $region28: #{tpu_custom_call.1} parent=23 // pred_fallthru
          _
      $region24: #{tpu_custom_call.1} parent=5 // pred_fallthru
        _
      %p170 = scmp.le.s32.totalorder 1, %s17
      %p171 = scmp.lt.s32.totalorder %s17, 3
      %p172 = pnand %p170, %p171
      %p173 = pneg %p172
      // Predicated region
      $region29: #{tpu_custom_call.1} parent=5 // pred_check
        _
      $region30: #{tpu_custom_call.1} parent=5 // pred_check_branch
        %175 = sbr.rel (%p172) target = $region32
      $region31: #{tpu_custom_call.1} parent=5 // pred_region
        %s176 = ssub.s32 %s17, 1
        %p177 = scmp.lt.s32.totalorder %s22, 1
        %s178 = scalar_select %p177, %s22, 1
        %s179 = smul.addr %s178, 108
        %s180 = smul.addr %s179, 4
        %s181 = scalar_lea.vmem %s0, %s180
        %p182 = pneg %p43
        %p183 = pneg %p40
        %p184 = pneg %p64
        %p185 = pneg %p61
        %p186 = pneg %p85
        %p187 = pneg %p82
        %p188 = pneg %p111
        %p189 = pneg %p108
        %s190 = sand.u32 %s98, 1
        %s191 = scalar_lea.sflag [#allocation3], %s190
        %s192 = sand.u32 %s98, 1
        %s193 = scalar_lea.vmem [#allocation2], %s192
        %p194 = pneg %p137
        %p195 = pneg %p134
        %s196 = sand.u32 %s124, 1
        %s197 = scalar_lea.sflag [#allocation5], %s196
        %s198 = sand.u32 %s124, 1
        %s199 = scalar_lea.vmem [#allocation4], %s198
        %p200 = scmp.lt.s32.totalorder %s22, 1
        %s201 = scalar_select %p200, %s22, 1
        %s202 = smul.addr %s201, 108
        %s203 = smul.addr %s202, 4
        %s204 = scalar_lea.vmem %s0, %s203
        %v206 = vld [vmem:[%s204] sm:$0xf]
        %v207 = vld [vmem:[%s204 + $0x4] sm:$0xf]
        %v208 = vld [vmem:[%s204 + $0x8] sm:$0xf]
        %v209 = vld [vmem:[%s204 + $0xc] sm:$0xf]
        %v210 = vld [vmem:[%s204 + $0x10] sm:$0xf]
        %v211 = vld [vmem:[%s204 + $0x14] sm:$0xf]
        %v212 = vld [vmem:[%s204 + $0x18] sm:$0xf]
        %v213 = vld [vmem:[%s204 + $0x1c] sm:$0xf]
        %v214 = vld [vmem:[%s204 + $0x20] sm:$0xf]
        %v215 = vld [vmem:[%s204 + $0x24] sm:$0xf]
        %v216 = vld [vmem:[%s204 + $0x28] sm:$0xf]
        %v217 = vld [vmem:[%s204 + $0x2c] sm:$0xf]
        %v218 = vld [vmem:[%s204 + $0x30] sm:$0xf]
        %v219 = vld [vmem:[%s204 + $0x34] sm:$0xf]
        %v220 = vld [vmem:[%s204 + $0x38] sm:$0xf]
        %v221 = vld [vmem:[%s204 + $0x3c] sm:$0xf]
        %v222 = vld [vmem:[%s204 + $0x40] sm:$0xf]
        %v223 = vld [vmem:[%s204 + $0x44] sm:$0xf]
        %v224 = vld [vmem:[%s204 + $0x48] sm:$0xf]
        %v225 = vld [vmem:[%s204 + $0x4c] sm:$0xf]
        %v226 = vld [vmem:[%s204 + $0x50] sm:$0xf]
        %v227 = vld [vmem:[%s204 + $0x54] sm:$0xf]
        %v228 = vld [vmem:[%s204 + $0x58] sm:$0xf]
        %v229 = vld [vmem:[%s204 + $0x5c] sm:$0xf]
        %v230 = vld [vmem:[%s204 + $0x60] sm:$0xf]
        %v231 = vld [vmem:[%s204 + $0x64] sm:$0xf]
        %v232 = vld [vmem:[%s204 + $0x68] sm:$0xf]
        %v233 = vld [vmem:[%s204 + $0x6c] sm:$0xf]
        %v234 = vld [vmem:[%s204 + $0x70] sm:$0xf]
        %v235 = vld [vmem:[%s204 + $0x74] sm:$0xf]
        %v236 = vld [vmem:[%s204 + $0x78] sm:$0xf]
        %v237 = vld [vmem:[%s204 + $0x7c] sm:$0xf]
        %v238 = vld [vmem:[%s1] sm:$0x3]
        %s239 = scalar_lea.vmem %s204, 144
        %v240 = vld [vmem:[%s239] sm:$0xf]
        %v241 = vld [vmem:[%s239 + $0x4] sm:$0xf]
        %v242 = vld [vmem:[%s239 + $0x8] sm:$0xf]
        %v243 = vld [vmem:[%s239 + $0xc] sm:$0xf]
        %v244 = vld [vmem:[%s239 + $0x10] sm:$0xf]
        %v245 = vld [vmem:[%s239 + $0x14] sm:$0xf]
        %v246 = vld [vmem:[%s239 + $0x18] sm:$0xf]
        %v247 = vld [vmem:[%s239 + $0x1c] sm:$0xf]
        %v248 = vld [vmem:[%s239 + $0x20] sm:$0xf]
        %v249 = vld [vmem:[%s239 + $0x24] sm:$0xf]
        %v250 = vld [vmem:[%s239 + $0x28] sm:$0xf]
        %v251 = vld [vmem:[%s239 + $0x2c] sm:$0xf]
        %v252 = vld [vmem:[%s239 + $0x30] sm:$0xf]
        %v253 = vld [vmem:[%s239 + $0x34] sm:$0xf]
        %v254 = vld [vmem:[%s239 + $0x38] sm:$0xf]
        %v255 = vld [vmem:[%s239 + $0x3c] sm:$0xf]
        %v256 = vld [vmem:[%s239 + $0x40] sm:$0xf]
        %v257 = vld [vmem:[%s239 + $0x44] sm:$0xf]
        %v258 = vld [vmem:[%s239 + $0x48] sm:$0xf]
        %v259 = vld [vmem:[%s239 + $0x4c] sm:$0xf]
        %v260 = vld [vmem:[%s239 + $0x50] sm:$0xf]
        %v261 = vld [vmem:[%s239 + $0x54] sm:$0xf]
        %v262 = vld [vmem:[%s239 + $0x58] sm:$0xf]
        %v263 = vld [vmem:[%s239 + $0x5c] sm:$0xf]
        %v264 = vld [vmem:[%s239 + $0x60] sm:$0xf]
        %v265 = vld [vmem:[%s239 + $0x64] sm:$0xf]
        %v266 = vld [vmem:[%s239 + $0x68] sm:$0xf]
        %v267 = vld [vmem:[%s239 + $0x6c] sm:$0xf]
        %v268 = vld [vmem:[%s239 + $0x70] sm:$0xf]
        %v269 = vld [vmem:[%s239 + $0x74] sm:$0xf]
        %v270 = vld [vmem:[%s239 + $0x78] sm:$0xf]
        %v271 = vld [vmem:[%s239 + $0x7c] sm:$0xf]
        %s272 = scalar_lea.vmem %s1, 2
        %v273 = vld [vmem:[%s272] sm:$0x3]
        %v306 = vunpack.c.l.b16 %v240
        %v307 = vunpack.c.l.b16 %v241
        %v308 = vunpack.c.l.b16 %v242
        %v309 = vunpack.c.l.b16 %v243
        %v310 = vunpack.c.l.b16 %v244
        %v311 = vunpack.c.l.b16 %v245
        %v312 = vunpack.c.l.b16 %v246
        %v313 = vunpack.c.l.b16 %v247
        %v314 = vunpack.c.l.b16 %v248
        %v315 = vunpack.c.l.b16 %v249
        %v316 = vunpack.c.l.b16 %v250
        %v317 = vunpack.c.l.b16 %v251
        %v318 = vunpack.c.l.b16 %v252
        %v319 = vunpack.c.l.b16 %v253
        %v320 = vunpack.c.l.b16 %v254
        %v321 = vunpack.c.l.b16 %v255
        %v322 = vunpack.c.l.b16 %v256
        %v323 = vunpack.c.l.b16 %v257
        %v324 = vunpack.c.l.b16 %v258
        %v325 = vunpack.c.l.b16 %v259
        %v326 = vunpack.c.l.b16 %v260
        %v327 = vunpack.c.l.b16 %v261
        %v328 = vunpack.c.l.b16 %v262
        %v329 = vunpack.c.l.b16 %v263
        %v330 = vunpack.c.l.b16 %v264
        %v331 = vunpack.c.l.b16 %v265
        %v332 = vunpack.c.l.b16 %v266
        %v333 = vunpack.c.l.b16 %v267
        %v334 = vunpack.c.l.b16 %v268
        %v335 = vunpack.c.l.b16 %v269
        %v336 = vunpack.c.l.b16 %v270
        %v337 = vunpack.c.l.b16 %v271
        %v338 = vpack.c.b16 %v307, %v306
        %v339 = vpack.c.b16 %v309, %v308
        %v340 = vpack.c.b16 %v311, %v310
        %v341 = vpack.c.b16 %v313, %v312
        %v342 = vpack.c.b16 %v315, %v314
        %v343 = vpack.c.b16 %v317, %v316
        %v344 = vpack.c.b16 %v319, %v318
        %v345 = vpack.c.b16 %v321, %v320
        %v346 = vpack.c.b16 %v323, %v322
        %v347 = vpack.c.b16 %v325, %v324
        %v348 = vpack.c.b16 %v327, %v326
        %v349 = vpack.c.b16 %v329, %v328
        %v350 = vpack.c.b16 %v331, %v330
        %v351 = vpack.c.b16 %v333, %v332
        %v352 = vpack.c.b16 %v335, %v334
        %v353 = vpack.c.b16 %v337, %v336
        %vm354 = vcmask 31744
        %v356 = vsel %vm354, %v338, 0
        %v359 = vsel %vm354, %v339, 0
        %v362 = vsel %vm354, %v340, 0
        %v365 = vsel %vm354, %v341, 0
        %v368 = vsel %vm354, %v342, 0
        %v371 = vsel %vm354, %v343, 0
        %v374 = vsel %vm354, %v344, 0
        %v377 = vsel %vm354, %v345, 0
        %v380 = vsel %vm354, %v346, 0
        %v383 = vsel %vm354, %v347, 0
        %v386 = vsel %vm354, %v348, 0
        %v389 = vsel %vm354, %v349, 0
        %v392 = vsel %vm354, %v350, 0
        %v395 = vsel %vm354, %v351, 0
        %v398 = vsel %vm354, %v352, 0
        %v401 = vsel %vm354, %v353, 0
        %vm403 = vcmask 1041408
        %v405 = vsel %vm403, %v273, 0
        %407 = vmatprep.subr.bf16.mxu0 0
        %408 = vmatpush1.bf16.msra.mxu0 0
        %409 = vmatprep.subr.bf16.mxu0 0
        %410 = vmatpush1.bf16.msra.mxu0 0
        %411 = vmatprep.subr.bf16.mxu0 0
        %412 = vmatpush1.bf16.msra.mxu0 0
        %413 = vmatprep.subr.bf16.mxu0 0
        %414 = vmatpush1.bf16.msra.mxu0 0
        %415 = vmatprep.subr.bf16.mxu0 0
        %416 = vmatpush1.bf16.msra.mxu0 0
        %417 = vmatprep.subr.bf16.mxu0 0
        %418 = vmatpush1.bf16.msra.mxu0 0
        %419 = vmatprep.subr.bf16.mxu0 0
        %420 = vmatpush1.bf16.msra.mxu0 0
        %421 = vmatprep.subr.bf16.mxu0 0
        %422 = vmatpush1.bf16.msra.mxu0 %v405
        %423 = vmatprep.subr.bf16.mxu0 0
        %424 = vmatpush2.bf16.msra.mxu0 0
        %425 = vmatprep.subr.bf16.mxu0 0
        %426 = vmatpush2.bf16.msra.mxu0 0
        %427 = vmatprep.subr.bf16.mxu0 0
        %428 = vmatpush2.bf16.msra.mxu0 0
        %429 = vmatprep.subr.bf16.mxu0 0
        %430 = vmatpush2.bf16.msra.mxu0 0
        %431 = vmatprep.subr.bf16.mxu0 0
        %432 = vmatpush2.bf16.msra.mxu0 0
        %433 = vmatprep.subr.bf16.mxu0 0
        %434 = vmatpush2.bf16.msra.mxu0 0
        %435 = vmatprep.subr.bf16.mxu0 0
        %436 = vmatpush2.bf16.msra.mxu0 0
        %437 = vmatprep.subr.bf16.mxu0 0
        %438 = vmatpush2.bf16.msra.mxu0 0
        %439 = vmatprep.mubr.bf16.mxu0 0
        %440 = vmatmul.mubr.bf16.gmra.mxu0 %v356
        %v441 = vpop.f32.mrf.mxu0
        %v442 = vadd.f32 0.0, %v441
        %v443 = vpop.f32.mrf.mxu0
        %v444 = vpop.f32.mrf.mxu0
        %v445 = vadd.f32 0.0, %v444
        %v446 = vpop.f32.mrf.mxu0
        %447 = vmatprep.mubr.bf16.mxu0 0
        %448 = vmatmul.mubr.bf16.gmra.mxu0 %v359
        %v449 = vpop.f32.mrf.mxu0
        %v450 = vadd.f32 0.0, %v449
        %v451 = vpop.f32.mrf.mxu0
        %v452 = vpop.f32.mrf.mxu0
        %v453 = vadd.f32 0.0, %v452
        %v454 = vpop.f32.mrf.mxu0
        %455 = vmatprep.mubr.bf16.mxu0 0
        %456 = vmatmul.mubr.bf16.gmra.mxu0 %v362
        %v457 = vpop.f32.mrf.mxu0
        %v458 = vadd.f32 0.0, %v457
        %v459 = vpop.f32.mrf.mxu0
        %v460 = vpop.f32.mrf.mxu0
        %v461 = vadd.f32 0.0, %v460
        %v462 = vpop.f32.mrf.mxu0
        %463 = vmatprep.mubr.bf16.mxu0 0
        %464 = vmatmul.mubr.bf16.gmra.mxu0 %v365
        %v465 = vpop.f32.mrf.mxu0
        %v466 = vadd.f32 0.0, %v465
        %v467 = vpop.f32.mrf.mxu0
        %v468 = vpop.f32.mrf.mxu0
        %v469 = vadd.f32 0.0, %v468
        %v470 = vpop.f32.mrf.mxu0
        %471 = vmatprep.mubr.bf16.mxu0 0
        %472 = vmatmul.mubr.bf16.gmra.mxu0 %v368
        %v473 = vpop.f32.mrf.mxu0
        %v474 = vadd.f32 0.0, %v473
        %v475 = vpop.f32.mrf.mxu0
        %v476 = vpop.f32.mrf.mxu0
        %v477 = vadd.f32 0.0, %v476
        %v478 = vpop.f32.mrf.mxu0
        %479 = vmatprep.mubr.bf16.mxu0 0
        %480 = vmatmul.mubr.bf16.gmra.mxu0 %v371
        %v481 = vpop.f32.mrf.mxu0
        %v482 = vadd.f32 0.0, %v481
        %v483 = vpop.f32.mrf.mxu0
        %v484 = vpop.f32.mrf.mxu0
        %v485 = vadd.f32 0.0, %v484
        %v486 = vpop.f32.mrf.mxu0
        %487 = vmatprep.mubr.bf16.mxu0 0
        %488 = vmatmul.mubr.bf16.gmra.mxu0 %v374
        %v489 = vpop.f32.mrf.mxu0
        %v490 = vadd.f32 0.0, %v489
        %v491 = vpop.f32.mrf.mxu0
        %v492 = vpop.f32.mrf.mxu0
        %v493 = vadd.f32 0.0, %v492
        %v494 = vpop.f32.mrf.mxu0
        %495 = vmatprep.mubr.bf16.mxu0 0
        %496 = vmatmul.mubr.bf16.gmra.mxu0 %v377
        %v497 = vpop.f32.mrf.mxu0
        %v498 = vadd.f32 0.0, %v497
        %v499 = vpop.f32.mrf.mxu0
        %v500 = vpop.f32.mrf.mxu0
        %v501 = vadd.f32 0.0, %v500
        %v502 = vpop.f32.mrf.mxu0
        %503 = vmatprep.mubr.bf16.mxu0 0
        %504 = vmatmul.mubr.bf16.gmra.mxu0 %v380
        %v505 = vpop.f32.mrf.mxu0
        %v506 = vadd.f32 0.0, %v505
        %v507 = vpop.f32.mrf.mxu0
        %v508 = vpop.f32.mrf.mxu0
        %v509 = vadd.f32 0.0, %v508
        %v510 = vpop.f32.mrf.mxu0
        %511 = vmatprep.mubr.bf16.mxu0 0
        %512 = vmatmul.mubr.bf16.gmra.mxu0 %v383
        %v513 = vpop.f32.mrf.mxu0
        %v514 = vadd.f32 0.0, %v513
        %v515 = vpop.f32.mrf.mxu0
        %v516 = vpop.f32.mrf.mxu0
        %v517 = vadd.f32 0.0, %v516
        %v518 = vpop.f32.mrf.mxu0
        %519 = vmatprep.mubr.bf16.mxu0 0
        %520 = vmatmul.mubr.bf16.gmra.mxu0 %v386
        %v521 = vpop.f32.mrf.mxu0
        %v522 = vadd.f32 0.0, %v521
        %v523 = vpop.f32.mrf.mxu0
        %v524 = vpop.f32.mrf.mxu0
        %v525 = vadd.f32 0.0, %v524
        %v526 = vpop.f32.mrf.mxu0
        %527 = vmatprep.mubr.bf16.mxu0 0
        %528 = vmatmul.mubr.bf16.gmra.mxu0 %v389
        %v529 = vpop.f32.mrf.mxu0
        %v530 = vadd.f32 0.0, %v529
        %v531 = vpop.f32.mrf.mxu0
        %v532 = vpop.f32.mrf.mxu0
        %v533 = vadd.f32 0.0, %v532
        %v534 = vpop.f32.mrf.mxu0
        %535 = vmatprep.mubr.bf16.mxu0 0
        %536 = vmatmul.mubr.bf16.gmra.mxu0 %v392
        %v537 = vpop.f32.mrf.mxu0
        %v538 = vadd.f32 0.0, %v537
        %v539 = vpop.f32.mrf.mxu0
        %v540 = vpop.f32.mrf.mxu0
        %v541 = vadd.f32 0.0, %v540
        %v542 = vpop.f32.mrf.mxu0
        %543 = vmatprep.mubr.bf16.mxu0 0
        %544 = vmatmul.mubr.bf16.gmra.mxu0 %v395
        %v545 = vpop.f32.mrf.mxu0
        %v546 = vadd.f32 0.0, %v545
        %v547 = vpop.f32.mrf.mxu0
        %v548 = vpop.f32.mrf.mxu0
        %v549 = vadd.f32 0.0, %v548
        %v550 = vpop.f32.mrf.mxu0
        %551 = vmatprep.mubr.bf16.mxu0 0
        %552 = vmatmul.mubr.bf16.gmra.mxu0 %v398
        %v553 = vpop.f32.mrf.mxu0
        %v554 = vadd.f32 0.0, %v553
        %v555 = vpop.f32.mrf.mxu0
        %v556 = vpop.f32.mrf.mxu0
        %v557 = vadd.f32 0.0, %v556
        %v558 = vpop.f32.mrf.mxu0
        %559 = vmatprep.mubr.bf16.mxu0 0
        %560 = vmatmul.mubr.bf16.gmra.mxu0 %v401
        %v561 = vpop.f32.mrf.mxu0
        %v562 = vadd.f32 0.0, %v561
        %v563 = vpop.f32.mrf.mxu0
        %v564 = vpop.f32.mrf.mxu0
        %v565 = vadd.f32 0.0, %v564
        %v566 = vpop.f32.mrf.mxu0
        %567 = vdwg.mxu0
        %v600 = vunpack.c.l.b16 %v206
        %v601 = vunpack.c.l.b16 %v207
        %v602 = vunpack.c.l.b16 %v208
        %v603 = vunpack.c.l.b16 %v209
        %v604 = vunpack.c.l.b16 %v210
        %v605 = vunpack.c.l.b16 %v211
        %v606 = vunpack.c.l.b16 %v212
        %v607 = vunpack.c.l.b16 %v213
        %v608 = vunpack.c.l.b16 %v214
        %v609 = vunpack.c.l.b16 %v215
        %v610 = vunpack.c.l.b16 %v216
        %v611 = vunpack.c.l.b16 %v217
        %v612 = vunpack.c.l.b16 %v218
        %v613 = vunpack.c.l.b16 %v219
        %v614 = vunpack.c.l.b16 %v220
        %v615 = vunpack.c.l.b16 %v221
        %v616 = vunpack.c.l.b16 %v222
        %v617 = vunpack.c.l.b16 %v223
        %v618 = vunpack.c.l.b16 %v224
        %v619 = vunpack.c.l.b16 %v225
        %v620 = vunpack.c.l.b16 %v226
        %v621 = vunpack.c.l.b16 %v227
        %v622 = vunpack.c.l.b16 %v228
        %v623 = vunpack.c.l.b16 %v229
        %v624 = vunpack.c.l.b16 %v230
        %v625 = vunpack.c.l.b16 %v231
        %v626 = vunpack.c.l.b16 %v232
        %v627 = vunpack.c.l.b16 %v233
        %v628 = vunpack.c.l.b16 %v234
        %v629 = vunpack.c.l.b16 %v235
        %v630 = vunpack.c.l.b16 %v236
        %v631 = vunpack.c.l.b16 %v237
        %v632 = vpack.c.b16 %v601, %v600
        %v633 = vpack.c.b16 %v603, %v602
        %v634 = vpack.c.b16 %v605, %v604
        %v635 = vpack.c.b16 %v607, %v606
        %v636 = vpack.c.b16 %v609, %v608
        %v637 = vpack.c.b16 %v611, %v610
        %v638 = vpack.c.b16 %v613, %v612
        %v639 = vpack.c.b16 %v615, %v614
        %v640 = vpack.c.b16 %v617, %v616
        %v641 = vpack.c.b16 %v619, %v618
        %v642 = vpack.c.b16 %v621, %v620
        %v643 = vpack.c.b16 %v623, %v622
        %v644 = vpack.c.b16 %v625, %v624
        %v645 = vpack.c.b16 %v627, %v626
        %v646 = vpack.c.b16 %v629, %v628
        %v647 = vpack.c.b16 %v631, %v630
        %v649 = vsel %vm354, %v632, 0
        %v652 = vsel %vm354, %v633, 0
        %v655 = vsel %vm354, %v634, 0
        %v658 = vsel %vm354, %v635, 0
        %v661 = vsel %vm354, %v636, 0
        %v664 = vsel %vm354, %v637, 0
        %v667 = vsel %vm354, %v638, 0
        %v670 = vsel %vm354, %v639, 0
        %v673 = vsel %vm354, %v640, 0
        %v676 = vsel %vm354, %v641, 0
        %v679 = vsel %vm354, %v642, 0
        %v682 = vsel %vm354, %v643, 0
        %v685 = vsel %vm354, %v644, 0
        %v688 = vsel %vm354, %v645, 0
        %v691 = vsel %vm354, %v646, 0
        %v694 = vsel %vm354, %v647, 0
        %v697 = vsel %vm403, %v238, 0
        %699 = vmatprep.subr.bf16.mxu0 0
        %700 = vmatpush1.bf16.msra.mxu0 0
        %701 = vmatprep.subr.bf16.mxu0 0
        %702 = vmatpush1.bf16.msra.mxu0 0
        %703 = vmatprep.subr.bf16.mxu0 0
        %704 = vmatpush1.bf16.msra.mxu0 0
        %705 = vmatprep.subr.bf16.mxu0 0
        %706 = vmatpush1.bf16.msra.mxu0 0
        %707 = vmatprep.subr.bf16.mxu0 0
        %708 = vmatpush1.bf16.msra.mxu0 0
        %709 = vmatprep.subr.bf16.mxu0 0
        %710 = vmatpush1.bf16.msra.mxu0 0
        %711 = vmatprep.subr.bf16.mxu0 0
        %712 = vmatpush1.bf16.msra.mxu0 0
        %713 = vmatprep.subr.bf16.mxu0 0
        %714 = vmatpush1.bf16.msra.mxu0 %v697
        %715 = vmatprep.subr.bf16.mxu0 0
        %716 = vmatpush2.bf16.msra.mxu0 0
        %717 = vmatprep.subr.bf16.mxu0 0
        %718 = vmatpush2.bf16.msra.mxu0 0
        %719 = vmatprep.subr.bf16.mxu0 0
        %720 = vmatpush2.bf16.msra.mxu0 0
        %721 = vmatprep.subr.bf16.mxu0 0
        %722 = vmatpush2.bf16.msra.mxu0 0
        %723 = vmatprep.subr.bf16.mxu0 0
        %724 = vmatpush2.bf16.msra.mxu0 0
        %725 = vmatprep.subr.bf16.mxu0 0
        %726 = vmatpush2.bf16.msra.mxu0 0
        %727 = vmatprep.subr.bf16.mxu0 0
        %728 = vmatpush2.bf16.msra.mxu0 0
        %729 = vmatprep.subr.bf16.mxu0 0
        %730 = vmatpush2.bf16.msra.mxu0 0
        %731 = vmatprep.mubr.bf16.mxu0 0
        %732 = vmatmul.mubr.bf16.gmra.mxu0 %v649
        %v733 = vpop.f32.mrf.mxu0
        %v734 = vadd.f32 %v442, %v733
        %v735 = vpop.f32.mrf.mxu0
        %v736 = vpop.f32.mrf.mxu0
        %v737 = vadd.f32 %v445, %v736
        %v738 = vpop.f32.mrf.mxu0
        %739 = vmatprep.mubr.bf16.mxu0 0
        %740 = vmatmul.mubr.bf16.gmra.mxu0 %v652
        %v741 = vpop.f32.mrf.mxu0
        %v742 = vadd.f32 %v450, %v741
        %v743 = vpop.f32.mrf.mxu0
        %v744 = vpop.f32.mrf.mxu0
        %v745 = vadd.f32 %v453, %v744
        %v746 = vpop.f32.mrf.mxu0
        %747 = vmatprep.mubr.bf16.mxu0 0
        %748 = vmatmul.mubr.bf16.gmra.mxu0 %v655
        %v749 = vpop.f32.mrf.mxu0
        %v750 = vadd.f32 %v458, %v749
        %v751 = vpop.f32.mrf.mxu0
        %v752 = vpop.f32.mrf.mxu0
        %v753 = vadd.f32 %v461, %v752
        %v754 = vpop.f32.mrf.mxu0
        %755 = vmatprep.mubr.bf16.mxu0 0
        %756 = vmatmul.mubr.bf16.gmra.mxu0 %v658
        %v757 = vpop.f32.mrf.mxu0
        %v758 = vadd.f32 %v466, %v757
        %v759 = vpop.f32.mrf.mxu0
        %v760 = vpop.f32.mrf.mxu0
        %v761 = vadd.f32 %v469, %v760
        %v762 = vpop.f32.mrf.mxu0
        %763 = vmatprep.mubr.bf16.mxu0 0
        %764 = vmatmul.mubr.bf16.gmra.mxu0 %v661
        %v765 = vpop.f32.mrf.mxu0
        %v766 = vadd.f32 %v474, %v765
        %v767 = vpop.f32.mrf.mxu0
        %v768 = vpop.f32.mrf.mxu0
        %v769 = vadd.f32 %v477, %v768
        %v770 = vpop.f32.mrf.mxu0
        %771 = vmatprep.mubr.bf16.mxu0 0
        %772 = vmatmul.mubr.bf16.gmra.mxu0 %v664
        %v773 = vpop.f32.mrf.mxu0
        %v774 = vadd.f32 %v482, %v773
        %v775 = vpop.f32.mrf.mxu0
        %v776 = vpop.f32.mrf.mxu0
        %v777 = vadd.f32 %v485, %v776
        %v778 = vpop.f32.mrf.mxu0
        %779 = vmatprep.mubr.bf16.mxu0 0
        %780 = vmatmul.mubr.bf16.gmra.mxu0 %v667
        %v781 = vpop.f32.mrf.mxu0
        %v782 = vadd.f32 %v490, %v781
        %v783 = vpop.f32.mrf.mxu0
        %v784 = vpop.f32.mrf.mxu0
        %v785 = vadd.f32 %v493, %v784
        %v786 = vpop.f32.mrf.mxu0
        %787 = vmatprep.mubr.bf16.mxu0 0
        %788 = vmatmul.mubr.bf16.gmra.mxu0 %v670
        %v789 = vpop.f32.mrf.mxu0
        %v790 = vadd.f32 %v498, %v789
        %v791 = vpop.f32.mrf.mxu0
        %v792 = vpop.f32.mrf.mxu0
        %v793 = vadd.f32 %v501, %v792
        %v794 = vpop.f32.mrf.mxu0
        %795 = vmatprep.mubr.bf16.mxu0 0
        %796 = vmatmul.mubr.bf16.gmra.mxu0 %v673
        %v797 = vpop.f32.mrf.mxu0
        %v798 = vadd.f32 %v506, %v797
        %v799 = vpop.f32.mrf.mxu0
        %v800 = vpop.f32.mrf.mxu0
        %v801 = vadd.f32 %v509, %v800
        %v802 = vpop.f32.mrf.mxu0
        %803 = vmatprep.mubr.bf16.mxu0 0
        %804 = vmatmul.mubr.bf16.gmra.mxu0 %v676
        %v805 = vpop.f32.mrf.mxu0
        %v806 = vadd.f32 %v514, %v805
        %v807 = vpop.f32.mrf.mxu0
        %v808 = vpop.f32.mrf.mxu0
        %v809 = vadd.f32 %v517, %v808
        %v810 = vpop.f32.mrf.mxu0
        %811 = vmatprep.mubr.bf16.mxu0 0
        %812 = vmatmul.mubr.bf16.gmra.mxu0 %v679
        %v813 = vpop.f32.mrf.mxu0
        %v814 = vadd.f32 %v522, %v813
        %v815 = vpop.f32.mrf.mxu0
        %v816 = vpop.f32.mrf.mxu0
        %v817 = vadd.f32 %v525, %v816
        %v818 = vpop.f32.mrf.mxu0
        %819 = vmatprep.mubr.bf16.mxu0 0
        %820 = vmatmul.mubr.bf16.gmra.mxu0 %v682
        %v821 = vpop.f32.mrf.mxu0
        %v822 = vadd.f32 %v530, %v821
        %v823 = vpop.f32.mrf.mxu0
        %v824 = vpop.f32.mrf.mxu0
        %v825 = vadd.f32 %v533, %v824
        %v826 = vpop.f32.mrf.mxu0
        %827 = vmatprep.mubr.bf16.mxu0 0
        %828 = vmatmul.mubr.bf16.gmra.mxu0 %v685
        %v829 = vpop.f32.mrf.mxu0
        %v830 = vadd.f32 %v538, %v829
        %v831 = vpop.f32.mrf.mxu0
        %v832 = vpop.f32.mrf.mxu0
        %v833 = vadd.f32 %v541, %v832
        %v834 = vpop.f32.mrf.mxu0
        %835 = vmatprep.mubr.bf16.mxu0 0
        %836 = vmatmul.mubr.bf16.gmra.mxu0 %v688
        %v837 = vpop.f32.mrf.mxu0
        %v838 = vadd.f32 %v546, %v837
        %v839 = vpop.f32.mrf.mxu0
        %v840 = vpop.f32.mrf.mxu0
        %v841 = vadd.f32 %v549, %v840
        %v842 = vpop.f32.mrf.mxu0
        %843 = vmatprep.mubr.bf16.mxu0 0
        %844 = vmatmul.mubr.bf16.gmra.mxu0 %v691
        %v845 = vpop.f32.mrf.mxu0
        %v846 = vadd.f32 %v554, %v845
        %v847 = vpop.f32.mrf.mxu0
        %v848 = vpop.f32.mrf.mxu0
        %v849 = vadd.f32 %v557, %v848
        %v850 = vpop.f32.mrf.mxu0
        %851 = vmatprep.mubr.bf16.mxu0 0
        %852 = vmatmul.mubr.bf16.gmra.mxu0 %v694
        %v853 = vpop.f32.mrf.mxu0
        %v854 = vadd.f32 %v562, %v853
        %v855 = vpop.f32.mrf.mxu0
        %v856 = vpop.f32.mrf.mxu0
        %v857 = vadd.f32 %v565, %v856
        %v858 = vpop.f32.mrf.mxu0
        %859 = vdwg.mxu0
        %s860 = scalar_lea.vmem %s204, 288
        %v861 = vld [vmem:[%s860] sm:$0xf]
        %v862 = vld [vmem:[%s860 + $0x4] sm:$0xf]
        %v863 = vld [vmem:[%s860 + $0x8] sm:$0xf]
        %v864 = vld [vmem:[%s860 + $0xc] sm:$0xf]
        %v865 = vld [vmem:[%s860 + $0x10] sm:$0xf]
        %v866 = vld [vmem:[%s860 + $0x14] sm:$0xf]
        %v867 = vld [vmem:[%s860 + $0x18] sm:$0xf]
        %v868 = vld [vmem:[%s860 + $0x1c] sm:$0xf]
        %v869 = vld [vmem:[%s860 + $0x20] sm:$0xf]
        %v870 = vld [vmem:[%s860 + $0x24] sm:$0xf]
        %v871 = vld [vmem:[%s860 + $0x28] sm:$0xf]
        %v872 = vld [vmem:[%s860 + $0x2c] sm:$0xf]
        %v873 = vld [vmem:[%s860 + $0x30] sm:$0xf]
        %v874 = vld [vmem:[%s860 + $0x34] sm:$0xf]
        %v875 = vld [vmem:[%s860 + $0x38] sm:$0xf]
        %v876 = vld [vmem:[%s860 + $0x3c] sm:$0xf]
        %v877 = vld [vmem:[%s860 + $0x40] sm:$0xf]
        %v878 = vld [vmem:[%s860 + $0x44] sm:$0xf]
        %v879 = vld [vmem:[%s860 + $0x48] sm:$0xf]
        %v880 = vld [vmem:[%s860 + $0x4c] sm:$0xf]
        %v881 = vld [vmem:[%s860 + $0x50] sm:$0xf]
        %v882 = vld [vmem:[%s860 + $0x54] sm:$0xf]
        %v883 = vld [vmem:[%s860 + $0x58] sm:$0xf]
        %v884 = vld [vmem:[%s860 + $0x5c] sm:$0xf]
        %v885 = vld [vmem:[%s860 + $0x60] sm:$0xf]
        %v886 = vld [vmem:[%s860 + $0x64] sm:$0xf]
        %v887 = vld [vmem:[%s860 + $0x68] sm:$0xf]
        %v888 = vld [vmem:[%s860 + $0x6c] sm:$0xf]
        %v889 = vld [vmem:[%s860 + $0x70] sm:$0xf]
        %v890 = vld [vmem:[%s860 + $0x74] sm:$0xf]
        %v891 = vld [vmem:[%s860 + $0x78] sm:$0xf]
        %v892 = vld [vmem:[%s860 + $0x7c] sm:$0xf]
        %s893 = scalar_lea.vmem %s1, 4
        %v894 = vld [vmem:[%s893] sm:$0x3]
        %v927 = vunpack.c.l.b16 %v861
        %v928 = vunpack.c.l.b16 %v862
        %v929 = vunpack.c.l.b16 %v863
        %v930 = vunpack.c.l.b16 %v864
        %v931 = vunpack.c.l.b16 %v865
        %v932 = vunpack.c.l.b16 %v866
        %v933 = vunpack.c.l.b16 %v867
        %v934 = vunpack.c.l.b16 %v868
        %v935 = vunpack.c.l.b16 %v869
        %v936 = vunpack.c.l.b16 %v870
        %v937 = vunpack.c.l.b16 %v871
        %v938 = vunpack.c.l.b16 %v872
        %v939 = vunpack.c.l.b16 %v873
        %v940 = vunpack.c.l.b16 %v874
        %v941 = vunpack.c.l.b16 %v875
        %v942 = vunpack.c.l.b16 %v876
        %v943 = vunpack.c.l.b16 %v877
        %v944 = vunpack.c.l.b16 %v878
        %v945 = vunpack.c.l.b16 %v879
        %v946 = vunpack.c.l.b16 %v880
        %v947 = vunpack.c.l.b16 %v881
        %v948 = vunpack.c.l.b16 %v882
        %v949 = vunpack.c.l.b16 %v883
        %v950 = vunpack.c.l.b16 %v884
        %v951 = vunpack.c.l.b16 %v885
        %v952 = vunpack.c.l.b16 %v886
        %v953 = vunpack.c.l.b16 %v887
        %v954 = vunpack.c.l.b16 %v888
        %v955 = vunpack.c.l.b16 %v889
        %v956 = vunpack.c.l.b16 %v890
        %v957 = vunpack.c.l.b16 %v891
        %v958 = vunpack.c.l.b16 %v892
        %v959 = vpack.c.b16 %v928, %v927
        %v960 = vpack.c.b16 %v930, %v929
        %v961 = vpack.c.b16 %v932, %v931
        %v962 = vpack.c.b16 %v934, %v933
        %v963 = vpack.c.b16 %v936, %v935
        %v964 = vpack.c.b16 %v938, %v937
        %v965 = vpack.c.b16 %v940, %v939
        %v966 = vpack.c.b16 %v942, %v941
        %v967 = vpack.c.b16 %v944, %v943
        %v968 = vpack.c.b16 %v946, %v945
        %v969 = vpack.c.b16 %v948, %v947
        %v970 = vpack.c.b16 %v950, %v949
        %v971 = vpack.c.b16 %v952, %v951
        %v972 = vpack.c.b16 %v954, %v953
        %v973 = vpack.c.b16 %v956, %v955
        %v974 = vpack.c.b16 %v958, %v957
        %v976 = vsel %vm354, %v959, 0
        %v979 = vsel %vm354, %v960, 0
        %v982 = vsel %vm354, %v961, 0
        %v985 = vsel %vm354, %v962, 0
        %v988 = vsel %vm354, %v963, 0
        %v991 = vsel %vm354, %v964, 0
        %v994 = vsel %vm354, %v965, 0
        %v997 = vsel %vm354, %v966, 0
        %v1000 = vsel %vm354, %v967, 0
        %v1003 = vsel %vm354, %v968, 0
        %v1006 = vsel %vm354, %v969, 0
        %v1009 = vsel %vm354, %v970, 0
        %v1012 = vsel %vm354, %v971, 0
        %v1015 = vsel %vm354, %v972, 0
        %v1018 = vsel %vm354, %v973, 0
        %v1021 = vsel %vm354, %v974, 0
        %v1024 = vsel %vm403, %v894, 0
        %1026 = vmatprep.subr.bf16.mxu0 0
        %1027 = vmatpush1.bf16.msra.mxu0 0
        %1028 = vmatprep.subr.bf16.mxu0 0
        %1029 = vmatpush1.bf16.msra.mxu0 0
        %1030 = vmatprep.subr.bf16.mxu0 0
        %1031 = vmatpush1.bf16.msra.mxu0 0
        %1032 = vmatprep.subr.bf16.mxu0 0
        %1033 = vmatpush1.bf16.msra.mxu0 0
        %1034 = vmatprep.subr.bf16.mxu0 0
        %1035 = vmatpush1.bf16.msra.mxu0 0
        %1036 = vmatprep.subr.bf16.mxu0 0
        %1037 = vmatpush1.bf16.msra.mxu0 0
        %1038 = vmatprep.subr.bf16.mxu0 0
        %1039 = vmatpush1.bf16.msra.mxu0 0
        %1040 = vmatprep.subr.bf16.mxu0 0
        %1041 = vmatpush1.bf16.msra.mxu0 %v1024
        %1042 = vmatprep.subr.bf16.mxu0 0
        %1043 = vmatpush2.bf16.msra.mxu0 0
        %1044 = vmatprep.subr.bf16.mxu0 0
        %1045 = vmatpush2.bf16.msra.mxu0 0
        %1046 = vmatprep.subr.bf16.mxu0 0
        %1047 = vmatpush2.bf16.msra.mxu0 0
        %1048 = vmatprep.subr.bf16.mxu0 0
        %1049 = vmatpush2.bf16.msra.mxu0 0
        %1050 = vmatprep.subr.bf16.mxu0 0
        %1051 = vmatpush2.bf16.msra.mxu0 0
        %1052 = vmatprep.subr.bf16.mxu0 0
        %1053 = vmatpush2.bf16.msra.mxu0 0
        %1054 = vmatprep.subr.bf16.mxu0 0
        %1055 = vmatpush2.bf16.msra.mxu0 0
        %1056 = vmatprep.subr.bf16.mxu0 0
        %1057 = vmatpush2.bf16.msra.mxu0 0
        %1058 = vmatprep.mubr.bf16.mxu0 0
        %1059 = vmatmul.mubr.bf16.gmra.mxu0 %v976
        %v1060 = vpop.f32.mrf.mxu0
        %v1061 = vadd.f32 0.0, %v1060
        %v1062 = vpop.f32.mrf.mxu0
        %v1063 = vpop.f32.mrf.mxu0
        %v1064 = vadd.f32 0.0, %v1063
        %v1065 = vpop.f32.mrf.mxu0
        %1066 = vmatprep.mubr.bf16.mxu0 0
        %1067 = vmatmul.mubr.bf16.gmra.mxu0 %v979
        %v1068 = vpop.f32.mrf.mxu0
        %v1069 = vadd.f32 0.0, %v1068
        %v1070 = vpop.f32.mrf.mxu0
        %v1071 = vpop.f32.mrf.mxu0
        %v1072 = vadd.f32 0.0, %v1071
        %v1073 = vpop.f32.mrf.mxu0
        %1074 = vmatprep.mubr.bf16.mxu0 0
        %1075 = vmatmul.mubr.bf16.gmra.mxu0 %v982
        %v1076 = vpop.f32.mrf.mxu0
        %v1077 = vadd.f32 0.0, %v1076
        %v1078 = vpop.f32.mrf.mxu0
        %v1079 = vpop.f32.mrf.mxu0
        %v1080 = vadd.f32 0.0, %v1079
        %v1081 = vpop.f32.mrf.mxu0
        %1082 = vmatprep.mubr.bf16.mxu0 0
        %1083 = vmatmul.mubr.bf16.gmra.mxu0 %v985
        %v1084 = vpop.f32.mrf.mxu0
        %v1085 = vadd.f32 0.0, %v1084
        %v1086 = vpop.f32.mrf.mxu0
        %v1087 = vpop.f32.mrf.mxu0
        %v1088 = vadd.f32 0.0, %v1087
        %v1089 = vpop.f32.mrf.mxu0
        %1090 = vmatprep.mubr.bf16.mxu0 0
        %1091 = vmatmul.mubr.bf16.gmra.mxu0 %v988
        %v1092 = vpop.f32.mrf.mxu0
        %v1093 = vadd.f32 0.0, %v1092
        %v1094 = vpop.f32.mrf.mxu0
        %v1095 = vpop.f32.mrf.mxu0
        %v1096 = vadd.f32 0.0, %v1095
        %v1097 = vpop.f32.mrf.mxu0
        %1098 = vmatprep.mubr.bf16.mxu0 0
        %1099 = vmatmul.mubr.bf16.gmra.mxu0 %v991
        %v1100 = vpop.f32.mrf.mxu0
        %v1101 = vadd.f32 0.0, %v1100
        %v1102 = vpop.f32.mrf.mxu0
        %v1103 = vpop.f32.mrf.mxu0
        %v1104 = vadd.f32 0.0, %v1103
        %v1105 = vpop.f32.mrf.mxu0
        %1106 = vmatprep.mubr.bf16.mxu0 0
        %1107 = vmatmul.mubr.bf16.gmra.mxu0 %v994
        %v1108 = vpop.f32.mrf.mxu0
        %v1109 = vadd.f32 0.0, %v1108
        %v1110 = vpop.f32.mrf.mxu0
        %v1111 = vpop.f32.mrf.mxu0
        %v1112 = vadd.f32 0.0, %v1111
        %v1113 = vpop.f32.mrf.mxu0
        %1114 = vmatprep.mubr.bf16.mxu0 0
        %1115 = vmatmul.mubr.bf16.gmra.mxu0 %v997
        %v1116 = vpop.f32.mrf.mxu0
        %v1117 = vadd.f32 0.0, %v1116
        %v1118 = vpop.f32.mrf.mxu0
        %v1119 = vpop.f32.mrf.mxu0
        %v1120 = vadd.f32 0.0, %v1119
        %v1121 = vpop.f32.mrf.mxu0
        %1122 = vmatprep.mubr.bf16.mxu0 0
        %1123 = vmatmul.mubr.bf16.gmra.mxu0 %v1000
        %v1124 = vpop.f32.mrf.mxu0
        %v1125 = vadd.f32 0.0, %v1124
        %v1126 = vpop.f32.mrf.mxu0
        %v1127 = vpop.f32.mrf.mxu0
        %v1128 = vadd.f32 0.0, %v1127
        %v1129 = vpop.f32.mrf.mxu0
        %1130 = vmatprep.mubr.bf16.mxu0 0
        %1131 = vmatmul.mubr.bf16.gmra.mxu0 %v1003
        %v1132 = vpop.f32.mrf.mxu0
        %v1133 = vadd.f32 0.0, %v1132
        %v1134 = vpop.f32.mrf.mxu0
        %v1135 = vpop.f32.mrf.mxu0
        %v1136 = vadd.f32 0.0, %v1135
        %v1137 = vpop.f32.mrf.mxu0
        %1138 = vmatprep.mubr.bf16.mxu0 0
        %1139 = vmatmul.mubr.bf16.gmra.mxu0 %v1006
        %v1140 = vpop.f32.mrf.mxu0
        %v1141 = vadd.f32 0.0, %v1140
        %v1142 = vpop.f32.mrf.mxu0
        %v1143 = vpop.f32.mrf.mxu0
        %v1144 = vadd.f32 0.0, %v1143
        %v1145 = vpop.f32.mrf.mxu0
        %1146 = vmatprep.mubr.bf16.mxu0 0
        %1147 = vmatmul.mubr.bf16.gmra.mxu0 %v1009
        %v1148 = vpop.f32.mrf.mxu0
        %v1149 = vadd.f32 0.0, %v1148
        %v1150 = vpop.f32.mrf.mxu0
        %v1151 = vpop.f32.mrf.mxu0
        %v1152 = vadd.f32 0.0, %v1151
        %v1153 = vpop.f32.mrf.mxu0
        %1154 = vmatprep.mubr.bf16.mxu0 0
        %1155 = vmatmul.mubr.bf16.gmra.mxu0 %v1012
        %v1156 = vpop.f32.mrf.mxu0
        %v1157 = vadd.f32 0.0, %v1156
        %v1158 = vpop.f32.mrf.mxu0
        %v1159 = vpop.f32.mrf.mxu0
        %v1160 = vadd.f32 0.0, %v1159
        %v1161 = vpop.f32.mrf.mxu0
        %1162 = vmatprep.mubr.bf16.mxu0 0
        %1163 = vmatmul.mubr.bf16.gmra.mxu0 %v1015
        %v1164 = vpop.f32.mrf.mxu0
        %v1165 = vadd.f32 0.0, %v1164
        %v1166 = vpop.f32.mrf.mxu0
        %v1167 = vpop.f32.mrf.mxu0
        %v1168 = vadd.f32 0.0, %v1167
        %v1169 = vpop.f32.mrf.mxu0
        %1170 = vmatprep.mubr.bf16.mxu0 0
        %1171 = vmatmul.mubr.bf16.gmra.mxu0 %v1018
        %v1172 = vpop.f32.mrf.mxu0
        %v1173 = vadd.f32 0.0, %v1172
        %v1174 = vpop.f32.mrf.mxu0
        %v1175 = vpop.f32.mrf.mxu0
        %v1176 = vadd.f32 0.0, %v1175
        %v1177 = vpop.f32.mrf.mxu0
        %1178 = vmatprep.mubr.bf16.mxu0 0
        %1179 = vmatmul.mubr.bf16.gmra.mxu0 %v1021
        %v1180 = vpop.f32.mrf.mxu0
        %v1181 = vadd.f32 0.0, %v1180
        %v1182 = vpop.f32.mrf.mxu0
        %v1183 = vpop.f32.mrf.mxu0
        %v1184 = vadd.f32 0.0, %v1183
        %v1185 = vpop.f32.mrf.mxu0
        %1186 = vdwg.mxu0
        %v1187 = vadd.f32 %v734, %v1061
        %v1188 = vadd.f32 %v737, %v1064
        %v1189 = vadd.f32 %v742, %v1069
        %v1190 = vadd.f32 %v745, %v1072
        %v1191 = vadd.f32 %v750, %v1077
        %v1192 = vadd.f32 %v753, %v1080
        %v1193 = vadd.f32 %v758, %v1085
        %v1194 = vadd.f32 %v761, %v1088
        %v1195 = vadd.f32 %v766, %v1093
        %v1196 = vadd.f32 %v769, %v1096
        %v1197 = vadd.f32 %v774, %v1101
        %v1198 = vadd.f32 %v777, %v1104
        %v1199 = vadd.f32 %v782, %v1109
        %v1200 = vadd.f32 %v785, %v1112
        %v1201 = vadd.f32 %v790, %v1117
        %v1202 = vadd.f32 %v793, %v1120
        %v1203 = vadd.f32 %v798, %v1125
        %v1204 = vadd.f32 %v801, %v1128
        %v1205 = vadd.f32 %v806, %v1133
        %v1206 = vadd.f32 %v809, %v1136
        %v1207 = vadd.f32 %v814, %v1141
        %v1208 = vadd.f32 %v817, %v1144
        %v1209 = vadd.f32 %v822, %v1149
        %v1210 = vadd.f32 %v825, %v1152
        %v1211 = vadd.f32 %v830, %v1157
        %v1212 = vadd.f32 %v833, %v1160
        %v1213 = vadd.f32 %v838, %v1165
        %v1214 = vadd.f32 %v841, %v1168
        %v1215 = vadd.f32 %v846, %v1173
        %v1216 = vadd.f32 %v849, %v1176
        %v1217 = vadd.f32 %v854, %v1181
        %v1218 = vadd.f32 %v857, %v1184
        %v1219 = vld [vmem:[%s204 + $0x8] sm:$0xf]
        %v1220 = vld [vmem:[%s204 + $0xc] sm:$0xf]
        %v1221 = vld [vmem:[%s204 + $0x10] sm:$0xf]
        %v1222 = vld [vmem:[%s204 + $0x14] sm:$0xf]
        %v1223 = vld [vmem:[%s204 + $0x18] sm:$0xf]
        %v1224 = vld [vmem:[%s204 + $0x1c] sm:$0xf]
        %v1225 = vld [vmem:[%s204 + $0x20] sm:$0xf]
        %v1226 = vld [vmem:[%s204 + $0x24] sm:$0xf]
        %v1227 = vld [vmem:[%s204 + $0x28] sm:$0xf]
        %v1228 = vld [vmem:[%s204 + $0x2c] sm:$0xf]
        %v1229 = vld [vmem:[%s204 + $0x30] sm:$0xf]
        %v1230 = vld [vmem:[%s204 + $0x34] sm:$0xf]
        %v1231 = vld [vmem:[%s204 + $0x38] sm:$0xf]
        %v1232 = vld [vmem:[%s204 + $0x3c] sm:$0xf]
        %v1233 = vld [vmem:[%s204 + $0x40] sm:$0xf]
        %v1234 = vld [vmem:[%s204 + $0x44] sm:$0xf]
        %v1235 = vld [vmem:[%s204 + $0x48] sm:$0xf]
        %v1236 = vld [vmem:[%s204 + $0x4c] sm:$0xf]
        %v1237 = vld [vmem:[%s204 + $0x50] sm:$0xf]
        %v1238 = vld [vmem:[%s204 + $0x54] sm:$0xf]
        %v1239 = vld [vmem:[%s204 + $0x58] sm:$0xf]
        %v1240 = vld [vmem:[%s204 + $0x5c] sm:$0xf]
        %v1241 = vld [vmem:[%s204 + $0x60] sm:$0xf]
        %v1242 = vld [vmem:[%s204 + $0x64] sm:$0xf]
        %v1243 = vld [vmem:[%s204 + $0x68] sm:$0xf]
        %v1244 = vld [vmem:[%s204 + $0x6c] sm:$0xf]
        %v1245 = vld [vmem:[%s204 + $0x70] sm:$0xf]
        %v1246 = vld [vmem:[%s204 + $0x74] sm:$0xf]
        %v1247 = vld [vmem:[%s204 + $0x78] sm:$0xf]
        %v1248 = vld [vmem:[%s204 + $0x7c] sm:$0xf]
        %v1249 = vld [vmem:[%s204 + $0x80] sm:$0xf]
        %v1250 = vld [vmem:[%s204 + $0x84] sm:$0xf]
        %s1251 = scalar_lea.vmem %s1, 6
        %v1252 = vld [vmem:[%s1251] sm:$0x3]
        %v1285 = vunpack.c.l.b16 %v1219
        %v1286 = vunpack.c.l.b16 %v1220
        %v1287 = vunpack.c.l.b16 %v1221
        %v1288 = vunpack.c.l.b16 %v1222
        %v1289 = vunpack.c.l.b16 %v1223
        %v1290 = vunpack.c.l.b16 %v1224
        %v1291 = vunpack.c.l.b16 %v1225
        %v1292 = vunpack.c.l.b16 %v1226
        %v1293 = vunpack.c.l.b16 %v1227
        %v1294 = vunpack.c.l.b16 %v1228
        %v1295 = vunpack.c.l.b16 %v1229
        %v1296 = vunpack.c.l.b16 %v1230
        %v1297 = vunpack.c.l.b16 %v1231
        %v1298 = vunpack.c.l.b16 %v1232
        %v1299 = vunpack.c.l.b16 %v1233
        %v1300 = vunpack.c.l.b16 %v1234
        %v1301 = vunpack.c.l.b16 %v1235
        %v1302 = vunpack.c.l.b16 %v1236
        %v1303 = vunpack.c.l.b16 %v1237
        %v1304 = vunpack.c.l.b16 %v1238
        %v1305 = vunpack.c.l.b16 %v1239
        %v1306 = vunpack.c.l.b16 %v1240
        %v1307 = vunpack.c.l.b16 %v1241
        %v1308 = vunpack.c.l.b16 %v1242
        %v1309 = vunpack.c.l.b16 %v1243
        %v1310 = vunpack.c.l.b16 %v1244
        %v1311 = vunpack.c.l.b16 %v1245
        %v1312 = vunpack.c.l.b16 %v1246
        %v1313 = vunpack.c.l.b16 %v1247
        %v1314 = vunpack.c.l.b16 %v1248
        %v1315 = vunpack.c.l.b16 %v1249
        %v1316 = vunpack.c.l.b16 %v1250
        %v1317 = vpack.c.b16 %v1286, %v1285
        %v1318 = vpack.c.b16 %v1288, %v1287
        %v1319 = vpack.c.b16 %v1290, %v1289
        %v1320 = vpack.c.b16 %v1292, %v1291
        %v1321 = vpack.c.b16 %v1294, %v1293
        %v1322 = vpack.c.b16 %v1296, %v1295
        %v1323 = vpack.c.b16 %v1298, %v1297
        %v1324 = vpack.c.b16 %v1300, %v1299
        %v1325 = vpack.c.b16 %v1302, %v1301
        %v1326 = vpack.c.b16 %v1304, %v1303
        %v1327 = vpack.c.b16 %v1306, %v1305
        %v1328 = vpack.c.b16 %v1308, %v1307
        %v1329 = vpack.c.b16 %v1310, %v1309
        %v1330 = vpack.c.b16 %v1312, %v1311
        %v1331 = vpack.c.b16 %v1314, %v1313
        %v1332 = vpack.c.b16 %v1316, %v1315
        %v1334 = vsel %vm354, %v1317, 0
        %v1337 = vsel %vm354, %v1318, 0
        %v1340 = vsel %vm354, %v1319, 0
        %v1343 = vsel %vm354, %v1320, 0
        %v1346 = vsel %vm354, %v1321, 0
        %v1349 = vsel %vm354, %v1322, 0
        %v1352 = vsel %vm354, %v1323, 0
        %v1355 = vsel %vm354, %v1324, 0
        %v1358 = vsel %vm354, %v1325, 0
        %v1361 = vsel %vm354, %v1326, 0
        %v1364 = vsel %vm354, %v1327, 0
        %v1367 = vsel %vm354, %v1328, 0
        %v1370 = vsel %vm354, %v1329, 0
        %v1373 = vsel %vm354, %v1330, 0
        %v1376 = vsel %vm354, %v1331, 0
        %v1379 = vsel %vm354, %v1332, 0
        %v1382 = vsel %vm403, %v1252, 0
        %1384 = vmatprep.subr.bf16.mxu0 0
        %1385 = vmatpush1.bf16.msra.mxu0 0
        %1386 = vmatprep.subr.bf16.mxu0 0
        %1387 = vmatpush1.bf16.msra.mxu0 0
        %1388 = vmatprep.subr.bf16.mxu0 0
        %1389 = vmatpush1.bf16.msra.mxu0 0
        %1390 = vmatprep.subr.bf16.mxu0 0
        %1391 = vmatpush1.bf16.msra.mxu0 0
        %1392 = vmatprep.subr.bf16.mxu0 0
        %1393 = vmatpush1.bf16.msra.mxu0 0
        %1394 = vmatprep.subr.bf16.mxu0 0
        %1395 = vmatpush1.bf16.msra.mxu0 0
        %1396 = vmatprep.subr.bf16.mxu0 0
        %1397 = vmatpush1.bf16.msra.mxu0 0
        %1398 = vmatprep.subr.bf16.mxu0 0
        %1399 = vmatpush1.bf16.msra.mxu0 %v1382
        %1400 = vmatprep.subr.bf16.mxu0 0
        %1401 = vmatpush2.bf16.msra.mxu0 0
        %1402 = vmatprep.subr.bf16.mxu0 0
        %1403 = vmatpush2.bf16.msra.mxu0 0
        %1404 = vmatprep.subr.bf16.mxu0 0
        %1405 = vmatpush2.bf16.msra.mxu0 0
        %1406 = vmatprep.subr.bf16.mxu0 0
        %1407 = vmatpush2.bf16.msra.mxu0 0
        %1408 = vmatprep.subr.bf16.mxu0 0
        %1409 = vmatpush2.bf16.msra.mxu0 0
        %1410 = vmatprep.subr.bf16.mxu0 0
        %1411 = vmatpush2.bf16.msra.mxu0 0
        %1412 = vmatprep.subr.bf16.mxu0 0
        %1413 = vmatpush2.bf16.msra.mxu0 0
        %1414 = vmatprep.subr.bf16.mxu0 0
        %1415 = vmatpush2.bf16.msra.mxu0 0
        %1416 = vmatprep.mubr.bf16.mxu0 0
        %1417 = vmatmul.mubr.bf16.gmra.mxu0 %v1334
        %v1418 = vpop.f32.mrf.mxu0
        %v1419 = vadd.f32 0.0, %v1418
        %v1420 = vpop.f32.mrf.mxu0
        %v1421 = vpop.f32.mrf.mxu0
        %v1422 = vadd.f32 0.0, %v1421
        %v1423 = vpop.f32.mrf.mxu0
        %1424 = vmatprep.mubr.bf16.mxu0 0
        %1425 = vmatmul.mubr.bf16.gmra.mxu0 %v1337
        %v1426 = vpop.f32.mrf.mxu0
        %v1427 = vadd.f32 0.0, %v1426
        %v1428 = vpop.f32.mrf.mxu0
        %v1429 = vpop.f32.mrf.mxu0
        %v1430 = vadd.f32 0.0, %v1429
        %v1431 = vpop.f32.mrf.mxu0
        %1432 = vmatprep.mubr.bf16.mxu0 0
        %1433 = vmatmul.mubr.bf16.gmra.mxu0 %v1340
        %v1434 = vpop.f32.mrf.mxu0
        %v1435 = vadd.f32 0.0, %v1434
        %v1436 = vpop.f32.mrf.mxu0
        %v1437 = vpop.f32.mrf.mxu0
        %v1438 = vadd.f32 0.0, %v1437
        %v1439 = vpop.f32.mrf.mxu0
        %1440 = vmatprep.mubr.bf16.mxu0 0
        %1441 = vmatmul.mubr.bf16.gmra.mxu0 %v1343
        %v1442 = vpop.f32.mrf.mxu0
        %v1443 = vadd.f32 0.0, %v1442
        %v1444 = vpop.f32.mrf.mxu0
        %v1445 = vpop.f32.mrf.mxu0
        %v1446 = vadd.f32 0.0, %v1445
        %v1447 = vpop.f32.mrf.mxu0
        %1448 = vmatprep.mubr.bf16.mxu0 0
        %1449 = vmatmul.mubr.bf16.gmra.mxu0 %v1346
        %v1450 = vpop.f32.mrf.mxu0
        %v1451 = vadd.f32 0.0, %v1450
        %v1452 = vpop.f32.mrf.mxu0
        %v1453 = vpop.f32.mrf.mxu0
        %v1454 = vadd.f32 0.0, %v1453
        %v1455 = vpop.f32.mrf.mxu0
        %1456 = vmatprep.mubr.bf16.mxu0 0
        %1457 = vmatmul.mubr.bf16.gmra.mxu0 %v1349
        %v1458 = vpop.f32.mrf.mxu0
        %v1459 = vadd.f32 0.0, %v1458
        %v1460 = vpop.f32.mrf.mxu0
        %v1461 = vpop.f32.mrf.mxu0
        %v1462 = vadd.f32 0.0, %v1461
        %v1463 = vpop.f32.mrf.mxu0
        %1464 = vmatprep.mubr.bf16.mxu0 0
        %1465 = vmatmul.mubr.bf16.gmra.mxu0 %v1352
        %v1466 = vpop.f32.mrf.mxu0
        %v1467 = vadd.f32 0.0, %v1466
        %v1468 = vpop.f32.mrf.mxu0
        %v1469 = vpop.f32.mrf.mxu0
        %v1470 = vadd.f32 0.0, %v1469
        %v1471 = vpop.f32.mrf.mxu0
        %1472 = vmatprep.mubr.bf16.mxu0 0
        %1473 = vmatmul.mubr.bf16.gmra.mxu0 %v1355
        %v1474 = vpop.f32.mrf.mxu0
        %v1475 = vadd.f32 0.0, %v1474
        %v1476 = vpop.f32.mrf.mxu0
        %v1477 = vpop.f32.mrf.mxu0
        %v1478 = vadd.f32 0.0, %v1477
        %v1479 = vpop.f32.mrf.mxu0
        %1480 = vmatprep.mubr.bf16.mxu0 0
        %1481 = vmatmul.mubr.bf16.gmra.mxu0 %v1358
        %v1482 = vpop.f32.mrf.mxu0
        %v1483 = vadd.f32 0.0, %v1482
        %v1484 = vpop.f32.mrf.mxu0
        %v1485 = vpop.f32.mrf.mxu0
        %v1486 = vadd.f32 0.0, %v1485
        %v1487 = vpop.f32.mrf.mxu0
        %1488 = vmatprep.mubr.bf16.mxu0 0
        %1489 = vmatmul.mubr.bf16.gmra.mxu0 %v1361
        %v1490 = vpop.f32.mrf.mxu0
        %v1491 = vadd.f32 0.0, %v1490
        %v1492 = vpop.f32.mrf.mxu0
        %v1493 = vpop.f32.mrf.mxu0
        %v1494 = vadd.f32 0.0, %v1493
        %v1495 = vpop.f32.mrf.mxu0
        %1496 = vmatprep.mubr.bf16.mxu0 0
        %1497 = vmatmul.mubr.bf16.gmra.mxu0 %v1364
        %v1498 = vpop.f32.mrf.mxu0
        %v1499 = vadd.f32 0.0, %v1498
        %v1500 = vpop.f32.mrf.mxu0
        %v1501 = vpop.f32.mrf.mxu0
        %v1502 = vadd.f32 0.0, %v1501
        %v1503 = vpop.f32.mrf.mxu0
        %1504 = vmatprep.mubr.bf16.mxu0 0
        %1505 = vmatmul.mubr.bf16.gmra.mxu0 %v1367
        %v1506 = vpop.f32.mrf.mxu0
        %v1507 = vadd.f32 0.0, %v1506
        %v1508 = vpop.f32.mrf.mxu0
        %v1509 = vpop.f32.mrf.mxu0
        %v1510 = vadd.f32 0.0, %v1509
        %v1511 = vpop.f32.mrf.mxu0
        %1512 = vmatprep.mubr.bf16.mxu0 0
        %1513 = vmatmul.mubr.bf16.gmra.mxu0 %v1370
        %v1514 = vpop.f32.mrf.mxu0
        %v1515 = vadd.f32 0.0, %v1514
        %v1516 = vpop.f32.mrf.mxu0
        %v1517 = vpop.f32.mrf.mxu0
        %v1518 = vadd.f32 0.0, %v1517
        %v1519 = vpop.f32.mrf.mxu0
        %1520 = vmatprep.mubr.bf16.mxu0 0
        %1521 = vmatmul.mubr.bf16.gmra.mxu0 %v1373
        %v1522 = vpop.f32.mrf.mxu0
        %v1523 = vadd.f32 0.0, %v1522
        %v1524 = vpop.f32.mrf.mxu0
        %v1525 = vpop.f32.mrf.mxu0
        %v1526 = vadd.f32 0.0, %v1525
        %v1527 = vpop.f32.mrf.mxu0
        %1528 = vmatprep.mubr.bf16.mxu0 0
        %1529 = vmatmul.mubr.bf16.gmra.mxu0 %v1376
        %v1530 = vpop.f32.mrf.mxu0
        %v1531 = vadd.f32 0.0, %v1530
        %v1532 = vpop.f32.mrf.mxu0
        %v1533 = vpop.f32.mrf.mxu0
        %v1534 = vadd.f32 0.0, %v1533
        %v1535 = vpop.f32.mrf.mxu0
        %1536 = vmatprep.mubr.bf16.mxu0 0
        %1537 = vmatmul.mubr.bf16.gmra.mxu0 %v1379
        %v1538 = vpop.f32.mrf.mxu0
        %v1539 = vadd.f32 0.0, %v1538
        %v1540 = vpop.f32.mrf.mxu0
        %v1541 = vpop.f32.mrf.mxu0
        %v1542 = vadd.f32 0.0, %v1541
        %v1543 = vpop.f32.mrf.mxu0
        %1544 = vdwg.mxu0
        %v1545 = vadd.f32 %v1187, %v1419
        %v1546 = vadd.f32 %v1188, %v1422
        %v1547 = vadd.f32 %v1189, %v1427
        %v1548 = vadd.f32 %v1190, %v1430
        %v1549 = vadd.f32 %v1191, %v1435
        %v1550 = vadd.f32 %v1192, %v1438
        %v1551 = vadd.f32 %v1193, %v1443
        %v1552 = vadd.f32 %v1194, %v1446
        %v1553 = vadd.f32 %v1195, %v1451
        %v1554 = vadd.f32 %v1196, %v1454
        %v1555 = vadd.f32 %v1197, %v1459
        %v1556 = vadd.f32 %v1198, %v1462
        %v1557 = vadd.f32 %v1199, %v1467
        %v1558 = vadd.f32 %v1200, %v1470
        %v1559 = vadd.f32 %v1201, %v1475
        %v1560 = vadd.f32 %v1202, %v1478
        %v1561 = vadd.f32 %v1203, %v1483
        %v1562 = vadd.f32 %v1204, %v1486
        %v1563 = vadd.f32 %v1205, %v1491
        %v1564 = vadd.f32 %v1206, %v1494
        %v1565 = vadd.f32 %v1207, %v1499
        %v1566 = vadd.f32 %v1208, %v1502
        %v1567 = vadd.f32 %v1209, %v1507
        %v1568 = vadd.f32 %v1210, %v1510
        %v1569 = vadd.f32 %v1211, %v1515
        %v1570 = vadd.f32 %v1212, %v1518
        %v1571 = vadd.f32 %v1213, %v1523
        %v1572 = vadd.f32 %v1214, %v1526
        %v1573 = vadd.f32 %v1215, %v1531
        %v1574 = vadd.f32 %v1216, %v1534
        %v1575 = vadd.f32 %v1217, %v1539
        %v1576 = vadd.f32 %v1218, %v1542
        %v1577 = vld [vmem:[%s239 + $0x8] sm:$0xf]
        %v1578 = vld [vmem:[%s239 + $0xc] sm:$0xf]
        %v1579 = vld [vmem:[%s239 + $0x10] sm:$0xf]
        %v1580 = vld [vmem:[%s239 + $0x14] sm:$0xf]
        %v1581 = vld [vmem:[%s239 + $0x18] sm:$0xf]
        %v1582 = vld [vmem:[%s239 + $0x1c] sm:$0xf]
        %v1583 = vld [vmem:[%s239 + $0x20] sm:$0xf]
        %v1584 = vld [vmem:[%s239 + $0x24] sm:$0xf]
        %v1585 = vld [vmem:[%s239 + $0x28] sm:$0xf]
        %v1586 = vld [vmem:[%s239 + $0x2c] sm:$0xf]
        %v1587 = vld [vmem:[%s239 + $0x30] sm:$0xf]
        %v1588 = vld [vmem:[%s239 + $0x34] sm:$0xf]
        %v1589 = vld [vmem:[%s239 + $0x38] sm:$0xf]
        %v1590 = vld [vmem:[%s239 + $0x3c] sm:$0xf]
        %v1591 = vld [vmem:[%s239 + $0x40] sm:$0xf]
        %v1592 = vld [vmem:[%s239 + $0x44] sm:$0xf]
        %v1593 = vld [vmem:[%s239 + $0x48] sm:$0xf]
        %v1594 = vld [vmem:[%s239 + $0x4c] sm:$0xf]
        %v1595 = vld [vmem:[%s239 + $0x50] sm:$0xf]
        %v1596 = vld [vmem:[%s239 + $0x54] sm:$0xf]
        %v1597 = vld [vmem:[%s239 + $0x58] sm:$0xf]
        %v1598 = vld [vmem:[%s239 + $0x5c] sm:$0xf]
        %v1599 = vld [vmem:[%s239 + $0x60] sm:$0xf]
        %v1600 = vld [vmem:[%s239 + $0x64] sm:$0xf]
        %v1601 = vld [vmem:[%s239 + $0x68] sm:$0xf]
        %v1602 = vld [vmem:[%s239 + $0x6c] sm:$0xf]
        %v1603 = vld [vmem:[%s239 + $0x70] sm:$0xf]
        %v1604 = vld [vmem:[%s239 + $0x74] sm:$0xf]
        %v1605 = vld [vmem:[%s239 + $0x78] sm:$0xf]
        %v1606 = vld [vmem:[%s239 + $0x7c] sm:$0xf]
        %v1607 = vld [vmem:[%s239 + $0x80] sm:$0xf]
        %v1608 = vld [vmem:[%s239 + $0x84] sm:$0xf]
        %s1609 = scalar_lea.vmem %s1, 8
        %v1610 = vld [vmem:[%s1609] sm:$0x3]
        %v1643 = vunpack.c.l.b16 %v1577
        %v1644 = vunpack.c.l.b16 %v1578
        %v1645 = vunpack.c.l.b16 %v1579
        %v1646 = vunpack.c.l.b16 %v1580
        %v1647 = vunpack.c.l.b16 %v1581
        %v1648 = vunpack.c.l.b16 %v1582
        %v1649 = vunpack.c.l.b16 %v1583
        %v1650 = vunpack.c.l.b16 %v1584
        %v1651 = vunpack.c.l.b16 %v1585
        %v1652 = vunpack.c.l.b16 %v1586
        %v1653 = vunpack.c.l.b16 %v1587
        %v1654 = vunpack.c.l.b16 %v1588
        %v1655 = vunpack.c.l.b16 %v1589
        %v1656 = vunpack.c.l.b16 %v1590
        %v1657 = vunpack.c.l.b16 %v1591
        %v1658 = vunpack.c.l.b16 %v1592
        %v1659 = vunpack.c.l.b16 %v1593
        %v1660 = vunpack.c.l.b16 %v1594
        %v1661 = vunpack.c.l.b16 %v1595
        %v1662 = vunpack.c.l.b16 %v1596
        %v1663 = vunpack.c.l.b16 %v1597
        %v1664 = vunpack.c.l.b16 %v1598
        %v1665 = vunpack.c.l.b16 %v1599
        %v1666 = vunpack.c.l.b16 %v1600
        %v1667 = vunpack.c.l.b16 %v1601
        %v1668 = vunpack.c.l.b16 %v1602
        %v1669 = vunpack.c.l.b16 %v1603
        %v1670 = vunpack.c.l.b16 %v1604
        %v1671 = vunpack.c.l.b16 %v1605
        %v1672 = vunpack.c.l.b16 %v1606
        %v1673 = vunpack.c.l.b16 %v1607
        %v1674 = vunpack.c.l.b16 %v1608
        %v1675 = vpack.c.b16 %v1644, %v1643
        %v1676 = vpack.c.b16 %v1646, %v1645
        %v1677 = vpack.c.b16 %v1648, %v1647
        %v1678 = vpack.c.b16 %v1650, %v1649
        %v1679 = vpack.c.b16 %v1652, %v1651
        %v1680 = vpack.c.b16 %v1654, %v1653
        %v1681 = vpack.c.b16 %v1656, %v1655
        %v1682 = vpack.c.b16 %v1658, %v1657
        %v1683 = vpack.c.b16 %v1660, %v1659
        %v1684 = vpack.c.b16 %v1662, %v1661
        %v1685 = vpack.c.b16 %v1664, %v1663
        %v1686 = vpack.c.b16 %v1666, %v1665
        %v1687 = vpack.c.b16 %v1668, %v1667
        %v1688 = vpack.c.b16 %v1670, %v1669
        %v1689 = vpack.c.b16 %v1672, %v1671
        %v1690 = vpack.c.b16 %v1674, %v1673
        %v1692 = vsel %vm354, %v1675, 0
        %v1695 = vsel %vm354, %v1676, 0
        %v1698 = vsel %vm354, %v1677, 0
        %v1701 = vsel %vm354, %v1678, 0
        %v1704 = vsel %vm354, %v1679, 0
        %v1707 = vsel %vm354, %v1680, 0
        %v1710 = vsel %vm354, %v1681, 0
        %v1713 = vsel %vm354, %v1682, 0
        %v1716 = vsel %vm354, %v1683, 0
        %v1719 = vsel %vm354, %v1684, 0
        %v1722 = vsel %vm354, %v1685, 0
        %v1725 = vsel %vm354, %v1686, 0
        %v1728 = vsel %vm354, %v1687, 0
        %v1731 = vsel %vm354, %v1688, 0
        %v1734 = vsel %vm354, %v1689, 0
        %v1737 = vsel %vm354, %v1690, 0
        %v1740 = vsel %vm403, %v1610, 0
        %1742 = vmatprep.subr.bf16.mxu0 0
        %1743 = vmatpush1.bf16.msra.mxu0 0
        %1744 = vmatprep.subr.bf16.mxu0 0
        %1745 = vmatpush1.bf16.msra.mxu0 0
        %1746 = vmatprep.subr.bf16.mxu0 0
        %1747 = vmatpush1.bf16.msra.mxu0 0
        %1748 = vmatprep.subr.bf16.mxu0 0
        %1749 = vmatpush1.bf16.msra.mxu0 0
        %1750 = vmatprep.subr.bf16.mxu0 0
        %1751 = vmatpush1.bf16.msra.mxu0 0
        %1752 = vmatprep.subr.bf16.mxu0 0
        %1753 = vmatpush1.bf16.msra.mxu0 0
        %1754 = vmatprep.subr.bf16.mxu0 0
        %1755 = vmatpush1.bf16.msra.mxu0 0
        %1756 = vmatprep.subr.bf16.mxu0 0
        %1757 = vmatpush1.bf16.msra.mxu0 %v1740
        %1758 = vmatprep.subr.bf16.mxu0 0
        %1759 = vmatpush2.bf16.msra.mxu0 0
        %1760 = vmatprep.subr.bf16.mxu0 0
        %1761 = vmatpush2.bf16.msra.mxu0 0
        %1762 = vmatprep.subr.bf16.mxu0 0
        %1763 = vmatpush2.bf16.msra.mxu0 0
        %1764 = vmatprep.subr.bf16.mxu0 0
        %1765 = vmatpush2.bf16.msra.mxu0 0
        %1766 = vmatprep.subr.bf16.mxu0 0
        %1767 = vmatpush2.bf16.msra.mxu0 0
        %1768 = vmatprep.subr.bf16.mxu0 0
        %1769 = vmatpush2.bf16.msra.mxu0 0
        %1770 = vmatprep.subr.bf16.mxu0 0
        %1771 = vmatpush2.bf16.msra.mxu0 0
        %1772 = vmatprep.subr.bf16.mxu0 0
        %1773 = vmatpush2.bf16.msra.mxu0 0
        %1774 = vmatprep.mubr.bf16.mxu0 0
        %1775 = vmatmul.mubr.bf16.gmra.mxu0 %v1692
        %v1776 = vpop.f32.mrf.mxu0
        %v1777 = vadd.f32 0.0, %v1776
        %v1778 = vpop.f32.mrf.mxu0
        %v1779 = vpop.f32.mrf.mxu0
        %v1780 = vadd.f32 0.0, %v1779
        %v1781 = vpop.f32.mrf.mxu0
        %1782 = vmatprep.mubr.bf16.mxu0 0
        %1783 = vmatmul.mubr.bf16.gmra.mxu0 %v1695
        %v1784 = vpop.f32.mrf.mxu0
        %v1785 = vadd.f32 0.0, %v1784
        %v1786 = vpop.f32.mrf.mxu0
        %v1787 = vpop.f32.mrf.mxu0
        %v1788 = vadd.f32 0.0, %v1787
        %v1789 = vpop.f32.mrf.mxu0
        %1790 = vmatprep.mubr.bf16.mxu0 0
        %1791 = vmatmul.mubr.bf16.gmra.mxu0 %v1698
        %v1792 = vpop.f32.mrf.mxu0
        %v1793 = vadd.f32 0.0, %v1792
        %v1794 = vpop.f32.mrf.mxu0
        %v1795 = vpop.f32.mrf.mxu0
        %v1796 = vadd.f32 0.0, %v1795
        %v1797 = vpop.f32.mrf.mxu0
        %1798 = vmatprep.mubr.bf16.mxu0 0
        %1799 = vmatmul.mubr.bf16.gmra.mxu0 %v1701
        %v1800 = vpop.f32.mrf.mxu0
        %v1801 = vadd.f32 0.0, %v1800
        %v1802 = vpop.f32.mrf.mxu0
        %v1803 = vpop.f32.mrf.mxu0
        %v1804 = vadd.f32 0.0, %v1803
        %v1805 = vpop.f32.mrf.mxu0
        %1806 = vmatprep.mubr.bf16.mxu0 0
        %1807 = vmatmul.mubr.bf16.gmra.mxu0 %v1704
        %v1808 = vpop.f32.mrf.mxu0
        %v1809 = vadd.f32 0.0, %v1808
        %v1810 = vpop.f32.mrf.mxu0
        %v1811 = vpop.f32.mrf.mxu0
        %v1812 = vadd.f32 0.0, %v1811
        %v1813 = vpop.f32.mrf.mxu0
        %1814 = vmatprep.mubr.bf16.mxu0 0
        %1815 = vmatmul.mubr.bf16.gmra.mxu0 %v1707
        %v1816 = vpop.f32.mrf.mxu0
        %v1817 = vadd.f32 0.0, %v1816
        %v1818 = vpop.f32.mrf.mxu0
        %v1819 = vpop.f32.mrf.mxu0
        %v1820 = vadd.f32 0.0, %v1819
        %v1821 = vpop.f32.mrf.mxu0
        %1822 = vmatprep.mubr.bf16.mxu0 0
        %1823 = vmatmul.mubr.bf16.gmra.mxu0 %v1710
        %v1824 = vpop.f32.mrf.mxu0
        %v1825 = vadd.f32 0.0, %v1824
        %v1826 = vpop.f32.mrf.mxu0
        %v1827 = vpop.f32.mrf.mxu0
        %v1828 = vadd.f32 0.0, %v1827
        %v1829 = vpop.f32.mrf.mxu0
        %1830 = vmatprep.mubr.bf16.mxu0 0
        %1831 = vmatmul.mubr.bf16.gmra.mxu0 %v1713
        %v1832 = vpop.f32.mrf.mxu0
        %v1833 = vadd.f32 0.0, %v1832
        %v1834 = vpop.f32.mrf.mxu0
        %v1835 = vpop.f32.mrf.mxu0
        %v1836 = vadd.f32 0.0, %v1835
        %v1837 = vpop.f32.mrf.mxu0
        %1838 = vmatprep.mubr.bf16.mxu0 0
        %1839 = vmatmul.mubr.bf16.gmra.mxu0 %v1716
        %v1840 = vpop.f32.mrf.mxu0
        %v1841 = vadd.f32 0.0, %v1840
        %v1842 = vpop.f32.mrf.mxu0
        %v1843 = vpop.f32.mrf.mxu0
        %v1844 = vadd.f32 0.0, %v1843
        %v1845 = vpop.f32.mrf.mxu0
        %1846 = vmatprep.mubr.bf16.mxu0 0
        %1847 = vmatmul.mubr.bf16.gmra.mxu0 %v1719
        %v1848 = vpop.f32.mrf.mxu0
        %v1849 = vadd.f32 0.0, %v1848
        %v1850 = vpop.f32.mrf.mxu0
        %v1851 = vpop.f32.mrf.mxu0
        %v1852 = vadd.f32 0.0, %v1851
        %v1853 = vpop.f32.mrf.mxu0
        %1854 = vmatprep.mubr.bf16.mxu0 0
        %1855 = vmatmul.mubr.bf16.gmra.mxu0 %v1722
        %v1856 = vpop.f32.mrf.mxu0
        %v1857 = vadd.f32 0.0, %v1856
        %v1858 = vpop.f32.mrf.mxu0
        %v1859 = vpop.f32.mrf.mxu0
        %v1860 = vadd.f32 0.0, %v1859
        %v1861 = vpop.f32.mrf.mxu0
        %1862 = vmatprep.mubr.bf16.mxu0 0
        %1863 = vmatmul.mubr.bf16.gmra.mxu0 %v1725
        %v1864 = vpop.f32.mrf.mxu0
        %v1865 = vadd.f32 0.0, %v1864
        %v1866 = vpop.f32.mrf.mxu0
        %v1867 = vpop.f32.mrf.mxu0
        %v1868 = vadd.f32 0.0, %v1867
        %v1869 = vpop.f32.mrf.mxu0
        %1870 = vmatprep.mubr.bf16.mxu0 0
        %1871 = vmatmul.mubr.bf16.gmra.mxu0 %v1728
        %v1872 = vpop.f32.mrf.mxu0
        %v1873 = vadd.f32 0.0, %v1872
        %v1874 = vpop.f32.mrf.mxu0
        %v1875 = vpop.f32.mrf.mxu0
        %v1876 = vadd.f32 0.0, %v1875
        %v1877 = vpop.f32.mrf.mxu0
        %1878 = vmatprep.mubr.bf16.mxu0 0
        %1879 = vmatmul.mubr.bf16.gmra.mxu0 %v1731
        %v1880 = vpop.f32.mrf.mxu0
        %v1881 = vadd.f32 0.0, %v1880
        %v1882 = vpop.f32.mrf.mxu0
        %v1883 = vpop.f32.mrf.mxu0
        %v1884 = vadd.f32 0.0, %v1883
        %v1885 = vpop.f32.mrf.mxu0
        %1886 = vmatprep.mubr.bf16.mxu0 0
        %1887 = vmatmul.mubr.bf16.gmra.mxu0 %v1734
        %v1888 = vpop.f32.mrf.mxu0
        %v1889 = vadd.f32 0.0, %v1888
        %v1890 = vpop.f32.mrf.mxu0
        %v1891 = vpop.f32.mrf.mxu0
        %v1892 = vadd.f32 0.0, %v1891
        %v1893 = vpop.f32.mrf.mxu0
        %1894 = vmatprep.mubr.bf16.mxu0 0
        %1895 = vmatmul.mubr.bf16.gmra.mxu0 %v1737
        %v1896 = vpop.f32.mrf.mxu0
        %v1897 = vadd.f32 0.0, %v1896
        %v1898 = vpop.f32.mrf.mxu0
        %v1899 = vpop.f32.mrf.mxu0
        %v1900 = vadd.f32 0.0, %v1899
        %v1901 = vpop.f32.mrf.mxu0
        %1902 = vdwg.mxu0
        %v1903 = vadd.f32 %v1545, %v1777
        %v1904 = vadd.f32 %v1546, %v1780
        %v1905 = vadd.f32 %v1547, %v1785
        %v1906 = vadd.f32 %v1548, %v1788
        %v1907 = vadd.f32 %v1549, %v1793
        %v1908 = vadd.f32 %v1550, %v1796
        %v1909 = vadd.f32 %v1551, %v1801
        %v1910 = vadd.f32 %v1552, %v1804
        %v1911 = vadd.f32 %v1553, %v1809
        %v1912 = vadd.f32 %v1554, %v1812
        %v1913 = vadd.f32 %v1555, %v1817
        %v1914 = vadd.f32 %v1556, %v1820
        %v1915 = vadd.f32 %v1557, %v1825
        %v1916 = vadd.f32 %v1558, %v1828
        %v1917 = vadd.f32 %v1559, %v1833
        %v1918 = vadd.f32 %v1560, %v1836
        %v1919 = vadd.f32 %v1561, %v1841
        %v1920 = vadd.f32 %v1562, %v1844
        %v1921 = vadd.f32 %v1563, %v1849
        %v1922 = vadd.f32 %v1564, %v1852
        %v1923 = vadd.f32 %v1565, %v1857
        %v1924 = vadd.f32 %v1566, %v1860
        %v1925 = vadd.f32 %v1567, %v1865
        %v1926 = vadd.f32 %v1568, %v1868
        %v1927 = vadd.f32 %v1569, %v1873
        %v1928 = vadd.f32 %v1570, %v1876
        %v1929 = vadd.f32 %v1571, %v1881
        %v1930 = vadd.f32 %v1572, %v1884
        %v1931 = vadd.f32 %v1573, %v1889
        %v1932 = vadd.f32 %v1574, %v1892
        %v1933 = vadd.f32 %v1575, %v1897
        %v1934 = vadd.f32 %v1576, %v1900
        %v1935 = vld [vmem:[%s860 + $0x8] sm:$0xf]
        %v1936 = vld [vmem:[%s860 + $0xc] sm:$0xf]
        %v1937 = vld [vmem:[%s860 + $0x10] sm:$0xf]
        %v1938 = vld [vmem:[%s860 + $0x14] sm:$0xf]
        %v1939 = vld [vmem:[%s860 + $0x18] sm:$0xf]
        %v1940 = vld [vmem:[%s860 + $0x1c] sm:$0xf]
        %v1941 = vld [vmem:[%s860 + $0x20] sm:$0xf]
        %v1942 = vld [vmem:[%s860 + $0x24] sm:$0xf]
        %v1943 = vld [vmem:[%s860 + $0x28] sm:$0xf]
        %v1944 = vld [vmem:[%s860 + $0x2c] sm:$0xf]
        %v1945 = vld [vmem:[%s860 + $0x30] sm:$0xf]
        %v1946 = vld [vmem:[%s860 + $0x34] sm:$0xf]
        %v1947 = vld [vmem:[%s860 + $0x38] sm:$0xf]
        %v1948 = vld [vmem:[%s860 + $0x3c] sm:$0xf]
        %v1949 = vld [vmem:[%s860 + $0x40] sm:$0xf]
        %v1950 = vld [vmem:[%s860 + $0x44] sm:$0xf]
        %v1951 = vld [vmem:[%s860 + $0x48] sm:$0xf]
        %v1952 = vld [vmem:[%s860 + $0x4c] sm:$0xf]
        %v1953 = vld [vmem:[%s860 + $0x50] sm:$0xf]
        %v1954 = vld [vmem:[%s860 + $0x54] sm:$0xf]
        %v1955 = vld [vmem:[%s860 + $0x58] sm:$0xf]
        %v1956 = vld [vmem:[%s860 + $0x5c] sm:$0xf]
        %v1957 = vld [vmem:[%s860 + $0x60] sm:$0xf]
        %v1958 = vld [vmem:[%s860 + $0x64] sm:$0xf]
        %v1959 = vld [vmem:[%s860 + $0x68] sm:$0xf]
        %v1960 = vld [vmem:[%s860 + $0x6c] sm:$0xf]
        %v1961 = vld [vmem:[%s860 + $0x70] sm:$0xf]
        %v1962 = vld [vmem:[%s860 + $0x74] sm:$0xf]
        %v1963 = vld [vmem:[%s860 + $0x78] sm:$0xf]
        %v1964 = vld [vmem:[%s860 + $0x7c] sm:$0xf]
        %v1965 = vld [vmem:[%s860 + $0x80] sm:$0xf]
        %v1966 = vld [vmem:[%s860 + $0x84] sm:$0xf]
        %s1967 = scalar_lea.vmem %s1, 10
        %v1968 = vld [vmem:[%s1967] sm:$0x3]
        %v2001 = vunpack.c.l.b16 %v1935
        %v2002 = vunpack.c.l.b16 %v1936
        %v2003 = vunpack.c.l.b16 %v1937
        %v2004 = vunpack.c.l.b16 %v1938
        %v2005 = vunpack.c.l.b16 %v1939
        %v2006 = vunpack.c.l.b16 %v1940
        %v2007 = vunpack.c.l.b16 %v1941
        %v2008 = vunpack.c.l.b16 %v1942
        %v2009 = vunpack.c.l.b16 %v1943
        %v2010 = vunpack.c.l.b16 %v1944
        %v2011 = vunpack.c.l.b16 %v1945
        %v2012 = vunpack.c.l.b16 %v1946
        %v2013 = vunpack.c.l.b16 %v1947
        %v2014 = vunpack.c.l.b16 %v1948
        %v2015 = vunpack.c.l.b16 %v1949
        %v2016 = vunpack.c.l.b16 %v1950
        %v2017 = vunpack.c.l.b16 %v1951
        %v2018 = vunpack.c.l.b16 %v1952
        %v2019 = vunpack.c.l.b16 %v1953
        %v2020 = vunpack.c.l.b16 %v1954
        %v2021 = vunpack.c.l.b16 %v1955
        %v2022 = vunpack.c.l.b16 %v1956
        %v2023 = vunpack.c.l.b16 %v1957
        %v2024 = vunpack.c.l.b16 %v1958
        %v2025 = vunpack.c.l.b16 %v1959
        %v2026 = vunpack.c.l.b16 %v1960
        %v2027 = vunpack.c.l.b16 %v1961
        %v2028 = vunpack.c.l.b16 %v1962
        %v2029 = vunpack.c.l.b16 %v1963
        %v2030 = vunpack.c.l.b16 %v1964
        %v2031 = vunpack.c.l.b16 %v1965
        %v2032 = vunpack.c.l.b16 %v1966
        %v2033 = vpack.c.b16 %v2002, %v2001
        %v2034 = vpack.c.b16 %v2004, %v2003
        %v2035 = vpack.c.b16 %v2006, %v2005
        %v2036 = vpack.c.b16 %v2008, %v2007
        %v2037 = vpack.c.b16 %v2010, %v2009
        %v2038 = vpack.c.b16 %v2012, %v2011
        %v2039 = vpack.c.b16 %v2014, %v2013
        %v2040 = vpack.c.b16 %v2016, %v2015
        %v2041 = vpack.c.b16 %v2018, %v2017
        %v2042 = vpack.c.b16 %v2020, %v2019
        %v2043 = vpack.c.b16 %v2022, %v2021
        %v2044 = vpack.c.b16 %v2024, %v2023
        %v2045 = vpack.c.b16 %v2026, %v2025
        %v2046 = vpack.c.b16 %v2028, %v2027
        %v2047 = vpack.c.b16 %v2030, %v2029
        %v2048 = vpack.c.b16 %v2032, %v2031
        %v2050 = vsel %vm354, %v2033, 0
        %v2053 = vsel %vm354, %v2034, 0
        %v2056 = vsel %vm354, %v2035, 0
        %v2059 = vsel %vm354, %v2036, 0
        %v2062 = vsel %vm354, %v2037, 0
        %v2065 = vsel %vm354, %v2038, 0
        %v2068 = vsel %vm354, %v2039, 0
        %v2071 = vsel %vm354, %v2040, 0
        %v2074 = vsel %vm354, %v2041, 0
        %v2077 = vsel %vm354, %v2042, 0
        %v2080 = vsel %vm354, %v2043, 0
        %v2083 = vsel %vm354, %v2044, 0
        %v2086 = vsel %vm354, %v2045, 0
        %v2089 = vsel %vm354, %v2046, 0
        %v2092 = vsel %vm354, %v2047, 0
        %v2095 = vsel %vm354, %v2048, 0
        %v2098 = vsel %vm403, %v1968, 0
        %2100 = vmatprep.subr.bf16.mxu0 0
        %2101 = vmatpush1.bf16.msra.mxu0 0
        %2102 = vmatprep.subr.bf16.mxu0 0
        %2103 = vmatpush1.bf16.msra.mxu0 0
        %2104 = vmatprep.subr.bf16.mxu0 0
        %2105 = vmatpush1.bf16.msra.mxu0 0
        %2106 = vmatprep.subr.bf16.mxu0 0
        %2107 = vmatpush1.bf16.msra.mxu0 0
        %2108 = vmatprep.subr.bf16.mxu0 0
        %2109 = vmatpush1.bf16.msra.mxu0 0
        %2110 = vmatprep.subr.bf16.mxu0 0
        %2111 = vmatpush1.bf16.msra.mxu0 0
        %2112 = vmatprep.subr.bf16.mxu0 0
        %2113 = vmatpush1.bf16.msra.mxu0 0
        %2114 = vmatprep.subr.bf16.mxu0 0
        %2115 = vmatpush1.bf16.msra.mxu0 %v2098
        %2116 = vmatprep.subr.bf16.mxu0 0
        %2117 = vmatpush2.bf16.msra.mxu0 0
        %2118 = vmatprep.subr.bf16.mxu0 0
        %2119 = vmatpush2.bf16.msra.mxu0 0
        %2120 = vmatprep.subr.bf16.mxu0 0
        %2121 = vmatpush2.bf16.msra.mxu0 0
        %2122 = vmatprep.subr.bf16.mxu0 0
        %2123 = vmatpush2.bf16.msra.mxu0 0
        %2124 = vmatprep.subr.bf16.mxu0 0
        %2125 = vmatpush2.bf16.msra.mxu0 0
        %2126 = vmatprep.subr.bf16.mxu0 0
        %2127 = vmatpush2.bf16.msra.mxu0 0
        %2128 = vmatprep.subr.bf16.mxu0 0
        %2129 = vmatpush2.bf16.msra.mxu0 0
        %2130 = vmatprep.subr.bf16.mxu0 0
        %2131 = vmatpush2.bf16.msra.mxu0 0
        %2132 = vmatprep.mubr.bf16.mxu0 0
        %2133 = vmatmul.mubr.bf16.gmra.mxu0 %v2050
        %v2134 = vpop.f32.mrf.mxu0
        %v2135 = vadd.f32 0.0, %v2134
        %v2136 = vpop.f32.mrf.mxu0
        %v2137 = vpop.f32.mrf.mxu0
        %v2138 = vadd.f32 0.0, %v2137
        %v2139 = vpop.f32.mrf.mxu0
        %2140 = vmatprep.mubr.bf16.mxu0 0
        %2141 = vmatmul.mubr.bf16.gmra.mxu0 %v2053
        %v2142 = vpop.f32.mrf.mxu0
        %v2143 = vadd.f32 0.0, %v2142
        %v2144 = vpop.f32.mrf.mxu0
        %v2145 = vpop.f32.mrf.mxu0
        %v2146 = vadd.f32 0.0, %v2145
        %v2147 = vpop.f32.mrf.mxu0
        %2148 = vmatprep.mubr.bf16.mxu0 0
        %2149 = vmatmul.mubr.bf16.gmra.mxu0 %v2056
        %v2150 = vpop.f32.mrf.mxu0
        %v2151 = vadd.f32 0.0, %v2150
        %v2152 = vpop.f32.mrf.mxu0
        %v2153 = vpop.f32.mrf.mxu0
        %v2154 = vadd.f32 0.0, %v2153
        %v2155 = vpop.f32.mrf.mxu0
        %2156 = vmatprep.mubr.bf16.mxu0 0
        %2157 = vmatmul.mubr.bf16.gmra.mxu0 %v2059
        %v2158 = vpop.f32.mrf.mxu0
        %v2159 = vadd.f32 0.0, %v2158
        %v2160 = vpop.f32.mrf.mxu0
        %v2161 = vpop.f32.mrf.mxu0
        %v2162 = vadd.f32 0.0, %v2161
        %v2163 = vpop.f32.mrf.mxu0
        %2164 = vmatprep.mubr.bf16.mxu0 0
        %2165 = vmatmul.mubr.bf16.gmra.mxu0 %v2062
        %v2166 = vpop.f32.mrf.mxu0
        %v2167 = vadd.f32 0.0, %v2166
        %v2168 = vpop.f32.mrf.mxu0
        %v2169 = vpop.f32.mrf.mxu0
        %v2170 = vadd.f32 0.0, %v2169
        %v2171 = vpop.f32.mrf.mxu0
        %2172 = vmatprep.mubr.bf16.mxu0 0
        %2173 = vmatmul.mubr.bf16.gmra.mxu0 %v2065
        %v2174 = vpop.f32.mrf.mxu0
        %v2175 = vadd.f32 0.0, %v2174
        %v2176 = vpop.f32.mrf.mxu0
        %v2177 = vpop.f32.mrf.mxu0
        %v2178 = vadd.f32 0.0, %v2177
        %v2179 = vpop.f32.mrf.mxu0
        %2180 = vmatprep.mubr.bf16.mxu0 0
        %2181 = vmatmul.mubr.bf16.gmra.mxu0 %v2068
        %v2182 = vpop.f32.mrf.mxu0
        %v2183 = vadd.f32 0.0, %v2182
        %v2184 = vpop.f32.mrf.mxu0
        %v2185 = vpop.f32.mrf.mxu0
        %v2186 = vadd.f32 0.0, %v2185
        %v2187 = vpop.f32.mrf.mxu0
        %2188 = vmatprep.mubr.bf16.mxu0 0
        %2189 = vmatmul.mubr.bf16.gmra.mxu0 %v2071
        %v2190 = vpop.f32.mrf.mxu0
        %v2191 = vadd.f32 0.0, %v2190
        %v2192 = vpop.f32.mrf.mxu0
        %v2193 = vpop.f32.mrf.mxu0
        %v2194 = vadd.f32 0.0, %v2193
        %v2195 = vpop.f32.mrf.mxu0
        %2196 = vmatprep.mubr.bf16.mxu0 0
        %2197 = vmatmul.mubr.bf16.gmra.mxu0 %v2074
        %v2198 = vpop.f32.mrf.mxu0
        %v2199 = vadd.f32 0.0, %v2198
        %v2200 = vpop.f32.mrf.mxu0
        %v2201 = vpop.f32.mrf.mxu0
        %v2202 = vadd.f32 0.0, %v2201
        %v2203 = vpop.f32.mrf.mxu0
        %2204 = vmatprep.mubr.bf16.mxu0 0
        %2205 = vmatmul.mubr.bf16.gmra.mxu0 %v2077
        %v2206 = vpop.f32.mrf.mxu0
        %v2207 = vadd.f32 0.0, %v2206
        %v2208 = vpop.f32.mrf.mxu0
        %v2209 = vpop.f32.mrf.mxu0
        %v2210 = vadd.f32 0.0, %v2209
        %v2211 = vpop.f32.mrf.mxu0
        %2212 = vmatprep.mubr.bf16.mxu0 0
        %2213 = vmatmul.mubr.bf16.gmra.mxu0 %v2080
        %v2214 = vpop.f32.mrf.mxu0
        %v2215 = vadd.f32 0.0, %v2214
        %v2216 = vpop.f32.mrf.mxu0
        %v2217 = vpop.f32.mrf.mxu0
        %v2218 = vadd.f32 0.0, %v2217
        %v2219 = vpop.f32.mrf.mxu0
        %2220 = vmatprep.mubr.bf16.mxu0 0
        %2221 = vmatmul.mubr.bf16.gmra.mxu0 %v2083
        %v2222 = vpop.f32.mrf.mxu0
        %v2223 = vadd.f32 0.0, %v2222
        %v2224 = vpop.f32.mrf.mxu0
        %v2225 = vpop.f32.mrf.mxu0
        %v2226 = vadd.f32 0.0, %v2225
        %v2227 = vpop.f32.mrf.mxu0
        %2228 = vmatprep.mubr.bf16.mxu0 0
        %2229 = vmatmul.mubr.bf16.gmra.mxu0 %v2086
        %v2230 = vpop.f32.mrf.mxu0
        %v2231 = vadd.f32 0.0, %v2230
        %v2232 = vpop.f32.mrf.mxu0
        %v2233 = vpop.f32.mrf.mxu0
        %v2234 = vadd.f32 0.0, %v2233
        %v2235 = vpop.f32.mrf.mxu0
        %2236 = vmatprep.mubr.bf16.mxu0 0
        %2237 = vmatmul.mubr.bf16.gmra.mxu0 %v2089
        %v2238 = vpop.f32.mrf.mxu0
        %v2239 = vadd.f32 0.0, %v2238
        %v2240 = vpop.f32.mrf.mxu0
        %v2241 = vpop.f32.mrf.mxu0
        %v2242 = vadd.f32 0.0, %v2241
        %v2243 = vpop.f32.mrf.mxu0
        %2244 = vmatprep.mubr.bf16.mxu0 0
        %2245 = vmatmul.mubr.bf16.gmra.mxu0 %v2092
        %v2246 = vpop.f32.mrf.mxu0
        %v2247 = vadd.f32 0.0, %v2246
        %v2248 = vpop.f32.mrf.mxu0
        %v2249 = vpop.f32.mrf.mxu0
        %v2250 = vadd.f32 0.0, %v2249
        %v2251 = vpop.f32.mrf.mxu0
        %2252 = vmatprep.mubr.bf16.mxu0 0
        %2253 = vmatmul.mubr.bf16.gmra.mxu0 %v2095
        %v2254 = vpop.f32.mrf.mxu0
        %v2255 = vadd.f32 0.0, %v2254
        %v2256 = vpop.f32.mrf.mxu0
        %v2257 = vpop.f32.mrf.mxu0
        %v2258 = vadd.f32 0.0, %v2257
        %v2259 = vpop.f32.mrf.mxu0
        %2260 = vdwg.mxu0
        %v2261 = vadd.f32 %v1903, %v2135
        %v2262 = vadd.f32 %v1904, %v2138
        %v2263 = vadd.f32 %v1905, %v2143
        %v2264 = vadd.f32 %v1906, %v2146
        %v2265 = vadd.f32 %v1907, %v2151
        %v2266 = vadd.f32 %v1908, %v2154
        %v2267 = vadd.f32 %v1909, %v2159
        %v2268 = vadd.f32 %v1910, %v2162
        %v2269 = vadd.f32 %v1911, %v2167
        %v2270 = vadd.f32 %v1912, %v2170
        %v2271 = vadd.f32 %v1913, %v2175
        %v2272 = vadd.f32 %v1914, %v2178
        %v2273 = vadd.f32 %v1915, %v2183
        %v2274 = vadd.f32 %v1916, %v2186
        %v2275 = vadd.f32 %v1917, %v2191
        %v2276 = vadd.f32 %v1918, %v2194
        %v2277 = vadd.f32 %v1919, %v2199
        %v2278 = vadd.f32 %v1920, %v2202
        %v2279 = vadd.f32 %v1921, %v2207
        %v2280 = vadd.f32 %v1922, %v2210
        %v2281 = vadd.f32 %v1923, %v2215
        %v2282 = vadd.f32 %v1924, %v2218
        %v2283 = vadd.f32 %v1925, %v2223
        %v2284 = vadd.f32 %v1926, %v2226
        %v2285 = vadd.f32 %v1927, %v2231
        %v2286 = vadd.f32 %v1928, %v2234
        %v2287 = vadd.f32 %v1929, %v2239
        %v2288 = vadd.f32 %v1930, %v2242
        %v2289 = vadd.f32 %v1931, %v2247
        %v2290 = vadd.f32 %v1932, %v2250
        %v2291 = vadd.f32 %v1933, %v2255
        %v2292 = vadd.f32 %v1934, %v2258
        %v2293 = vld [vmem:[%s204 + $0x10] sm:$0xf]
        %v2294 = vld [vmem:[%s204 + $0x14] sm:$0xf]
        %v2295 = vld [vmem:[%s204 + $0x18] sm:$0xf]
        %v2296 = vld [vmem:[%s204 + $0x1c] sm:$0xf]
        %v2297 = vld [vmem:[%s204 + $0x20] sm:$0xf]
        %v2298 = vld [vmem:[%s204 + $0x24] sm:$0xf]
        %v2299 = vld [vmem:[%s204 + $0x28] sm:$0xf]
        %v2300 = vld [vmem:[%s204 + $0x2c] sm:$0xf]
        %v2301 = vld [vmem:[%s204 + $0x30] sm:$0xf]
        %v2302 = vld [vmem:[%s204 + $0x34] sm:$0xf]
        %v2303 = vld [vmem:[%s204 + $0x38] sm:$0xf]
        %v2304 = vld [vmem:[%s204 + $0x3c] sm:$0xf]
        %v2305 = vld [vmem:[%s204 + $0x40] sm:$0xf]
        %v2306 = vld [vmem:[%s204 + $0x44] sm:$0xf]
        %v2307 = vld [vmem:[%s204 + $0x48] sm:$0xf]
        %v2308 = vld [vmem:[%s204 + $0x4c] sm:$0xf]
        %v2309 = vld [vmem:[%s204 + $0x50] sm:$0xf]
        %v2310 = vld [vmem:[%s204 + $0x54] sm:$0xf]
        %v2311 = vld [vmem:[%s204 + $0x58] sm:$0xf]
        %v2312 = vld [vmem:[%s204 + $0x5c] sm:$0xf]
        %v2313 = vld [vmem:[%s204 + $0x60] sm:$0xf]
        %v2314 = vld [vmem:[%s204 + $0x64] sm:$0xf]
        %v2315 = vld [vmem:[%s204 + $0x68] sm:$0xf]
        %v2316 = vld [vmem:[%s204 + $0x6c] sm:$0xf]
        %v2317 = vld [vmem:[%s204 + $0x70] sm:$0xf]
        %v2318 = vld [vmem:[%s204 + $0x74] sm:$0xf]
        %v2319 = vld [vmem:[%s204 + $0x78] sm:$0xf]
        %v2320 = vld [vmem:[%s204 + $0x7c] sm:$0xf]
        %v2321 = vld [vmem:[%s204 + $0x80] sm:$0xf]
        %v2322 = vld [vmem:[%s204 + $0x84] sm:$0xf]
        %v2323 = vld [vmem:[%s204 + $0x88] sm:$0xf]
        %v2324 = vld [vmem:[%s204 + $0x8c] sm:$0xf]
        %s2325 = scalar_lea.vmem %s1, 12
        %v2326 = vld [vmem:[%s2325] sm:$0x3]
        %v2359 = vunpack.c.l.b16 %v2293
        %v2360 = vunpack.c.l.b16 %v2294
        %v2361 = vunpack.c.l.b16 %v2295
        %v2362 = vunpack.c.l.b16 %v2296
        %v2363 = vunpack.c.l.b16 %v2297
        %v2364 = vunpack.c.l.b16 %v2298
        %v2365 = vunpack.c.l.b16 %v2299
        %v2366 = vunpack.c.l.b16 %v2300
        %v2367 = vunpack.c.l.b16 %v2301
        %v2368 = vunpack.c.l.b16 %v2302
        %v2369 = vunpack.c.l.b16 %v2303
        %v2370 = vunpack.c.l.b16 %v2304
        %v2371 = vunpack.c.l.b16 %v2305
        %v2372 = vunpack.c.l.b16 %v2306
        %v2373 = vunpack.c.l.b16 %v2307
        %v2374 = vunpack.c.l.b16 %v2308
        %v2375 = vunpack.c.l.b16 %v2309
        %v2376 = vunpack.c.l.b16 %v2310
        %v2377 = vunpack.c.l.b16 %v2311
        %v2378 = vunpack.c.l.b16 %v2312
        %v2379 = vunpack.c.l.b16 %v2313
        %v2380 = vunpack.c.l.b16 %v2314
        %v2381 = vunpack.c.l.b16 %v2315
        %v2382 = vunpack.c.l.b16 %v2316
        %v2383 = vunpack.c.l.b16 %v2317
        %v2384 = vunpack.c.l.b16 %v2318
        %v2385 = vunpack.c.l.b16 %v2319
        %v2386 = vunpack.c.l.b16 %v2320
        %v2387 = vunpack.c.l.b16 %v2321
        %v2388 = vunpack.c.l.b16 %v2322
        %v2389 = vunpack.c.l.b16 %v2323
        %v2390 = vunpack.c.l.b16 %v2324
        %v2391 = vpack.c.b16 %v2360, %v2359
        %v2392 = vpack.c.b16 %v2362, %v2361
        %v2393 = vpack.c.b16 %v2364, %v2363
        %v2394 = vpack.c.b16 %v2366, %v2365
        %v2395 = vpack.c.b16 %v2368, %v2367
        %v2396 = vpack.c.b16 %v2370, %v2369
        %v2397 = vpack.c.b16 %v2372, %v2371
        %v2398 = vpack.c.b16 %v2374, %v2373
        %v2399 = vpack.c.b16 %v2376, %v2375
        %v2400 = vpack.c.b16 %v2378, %v2377
        %v2401 = vpack.c.b16 %v2380, %v2379
        %v2402 = vpack.c.b16 %v2382, %v2381
        %v2403 = vpack.c.b16 %v2384, %v2383
        %v2404 = vpack.c.b16 %v2386, %v2385
        %v2405 = vpack.c.b16 %v2388, %v2387
        %v2406 = vpack.c.b16 %v2390, %v2389
        %v2408 = vsel %vm354, %v2391, 0
        %v2411 = vsel %vm354, %v2392, 0
        %v2414 = vsel %vm354, %v2393, 0
        %v2417 = vsel %vm354, %v2394, 0
        %v2420 = vsel %vm354, %v2395, 0
        %v2423 = vsel %vm354, %v2396, 0
        %v2426 = vsel %vm354, %v2397, 0
        %v2429 = vsel %vm354, %v2398, 0
        %v2432 = vsel %vm354, %v2399, 0
        %v2435 = vsel %vm354, %v2400, 0
        %v2438 = vsel %vm354, %v2401, 0
        %v2441 = vsel %vm354, %v2402, 0
        %v2444 = vsel %vm354, %v2403, 0
        %v2447 = vsel %vm354, %v2404, 0
        %v2450 = vsel %vm354, %v2405, 0
        %v2453 = vsel %vm354, %v2406, 0
        %v2456 = vsel %vm403, %v2326, 0
        %2458 = vmatprep.subr.bf16.mxu0 0
        %2459 = vmatpush1.bf16.msra.mxu0 0
        %2460 = vmatprep.subr.bf16.mxu0 0
        %2461 = vmatpush1.bf16.msra.mxu0 0
        %2462 = vmatprep.subr.bf16.mxu0 0
        %2463 = vmatpush1.bf16.msra.mxu0 0
        %2464 = vmatprep.subr.bf16.mxu0 0
        %2465 = vmatpush1.bf16.msra.mxu0 0
        %2466 = vmatprep.subr.bf16.mxu0 0
        %2467 = vmatpush1.bf16.msra.mxu0 0
        %2468 = vmatprep.subr.bf16.mxu0 0
        %2469 = vmatpush1.bf16.msra.mxu0 0
        %2470 = vmatprep.subr.bf16.mxu0 0
        %2471 = vmatpush1.bf16.msra.mxu0 0
        %2472 = vmatprep.subr.bf16.mxu0 0
        %2473 = vmatpush1.bf16.msra.mxu0 %v2456
        %2474 = vmatprep.subr.bf16.mxu0 0
        %2475 = vmatpush2.bf16.msra.mxu0 0
        %2476 = vmatprep.subr.bf16.mxu0 0
        %2477 = vmatpush2.bf16.msra.mxu0 0
        %2478 = vmatprep.subr.bf16.mxu0 0
        %2479 = vmatpush2.bf16.msra.mxu0 0
        %2480 = vmatprep.subr.bf16.mxu0 0
        %2481 = vmatpush2.bf16.msra.mxu0 0
        %2482 = vmatprep.subr.bf16.mxu0 0
        %2483 = vmatpush2.bf16.msra.mxu0 0
        %2484 = vmatprep.subr.bf16.mxu0 0
        %2485 = vmatpush2.bf16.msra.mxu0 0
        %2486 = vmatprep.subr.bf16.mxu0 0
        %2487 = vmatpush2.bf16.msra.mxu0 0
        %2488 = vmatprep.subr.bf16.mxu0 0
        %2489 = vmatpush2.bf16.msra.mxu0 0
        %2490 = vmatprep.mubr.bf16.mxu0 0
        %2491 = vmatmul.mubr.bf16.gmra.mxu0 %v2408
        %v2492 = vpop.f32.mrf.mxu0
        %v2493 = vadd.f32 0.0, %v2492
        %v2494 = vpop.f32.mrf.mxu0
        %v2495 = vpop.f32.mrf.mxu0
        %v2496 = vadd.f32 0.0, %v2495
        %v2497 = vpop.f32.mrf.mxu0
        %2498 = vmatprep.mubr.bf16.mxu0 0
        %2499 = vmatmul.mubr.bf16.gmra.mxu0 %v2411
        %v2500 = vpop.f32.mrf.mxu0
        %v2501 = vadd.f32 0.0, %v2500
        %v2502 = vpop.f32.mrf.mxu0
        %v2503 = vpop.f32.mrf.mxu0
        %v2504 = vadd.f32 0.0, %v2503
        %v2505 = vpop.f32.mrf.mxu0
        %2506 = vmatprep.mubr.bf16.mxu0 0
        %2507 = vmatmul.mubr.bf16.gmra.mxu0 %v2414
        %v2508 = vpop.f32.mrf.mxu0
        %v2509 = vadd.f32 0.0, %v2508
        %v2510 = vpop.f32.mrf.mxu0
        %v2511 = vpop.f32.mrf.mxu0
        %v2512 = vadd.f32 0.0, %v2511
        %v2513 = vpop.f32.mrf.mxu0
        %2514 = vmatprep.mubr.bf16.mxu0 0
        %2515 = vmatmul.mubr.bf16.gmra.mxu0 %v2417
        %v2516 = vpop.f32.mrf.mxu0
        %v2517 = vadd.f32 0.0, %v2516
        %v2518 = vpop.f32.mrf.mxu0
        %v2519 = vpop.f32.mrf.mxu0
        %v2520 = vadd.f32 0.0, %v2519
        %v2521 = vpop.f32.mrf.mxu0
        %2522 = vmatprep.mubr.bf16.mxu0 0
        %2523 = vmatmul.mubr.bf16.gmra.mxu0 %v2420
        %v2524 = vpop.f32.mrf.mxu0
        %v2525 = vadd.f32 0.0, %v2524
        %v2526 = vpop.f32.mrf.mxu0
        %v2527 = vpop.f32.mrf.mxu0
        %v2528 = vadd.f32 0.0, %v2527
        %v2529 = vpop.f32.mrf.mxu0
        %2530 = vmatprep.mubr.bf16.mxu0 0
        %2531 = vmatmul.mubr.bf16.gmra.mxu0 %v2423
        %v2532 = vpop.f32.mrf.mxu0
        %v2533 = vadd.f32 0.0, %v2532
        %v2534 = vpop.f32.mrf.mxu0
        %v2535 = vpop.f32.mrf.mxu0
        %v2536 = vadd.f32 0.0, %v2535
        %v2537 = vpop.f32.mrf.mxu0
        %2538 = vmatprep.mubr.bf16.mxu0 0
        %2539 = vmatmul.mubr.bf16.gmra.mxu0 %v2426
        %v2540 = vpop.f32.mrf.mxu0
        %v2541 = vadd.f32 0.0, %v2540
        %v2542 = vpop.f32.mrf.mxu0
        %v2543 = vpop.f32.mrf.mxu0
        %v2544 = vadd.f32 0.0, %v2543
        %v2545 = vpop.f32.mrf.mxu0
        %2546 = vmatprep.mubr.bf16.mxu0 0
        %2547 = vmatmul.mubr.bf16.gmra.mxu0 %v2429
        %v2548 = vpop.f32.mrf.mxu0
        %v2549 = vadd.f32 0.0, %v2548
        %v2550 = vpop.f32.mrf.mxu0
        %v2551 = vpop.f32.mrf.mxu0
        %v2552 = vadd.f32 0.0, %v2551
        %v2553 = vpop.f32.mrf.mxu0
        %2554 = vmatprep.mubr.bf16.mxu0 0
        %2555 = vmatmul.mubr.bf16.gmra.mxu0 %v2432
        %v2556 = vpop.f32.mrf.mxu0
        %v2557 = vadd.f32 0.0, %v2556
        %v2558 = vpop.f32.mrf.mxu0
        %v2559 = vpop.f32.mrf.mxu0
        %v2560 = vadd.f32 0.0, %v2559
        %v2561 = vpop.f32.mrf.mxu0
        %2562 = vmatprep.mubr.bf16.mxu0 0
        %2563 = vmatmul.mubr.bf16.gmra.mxu0 %v2435
        %v2564 = vpop.f32.mrf.mxu0
        %v2565 = vadd.f32 0.0, %v2564
        %v2566 = vpop.f32.mrf.mxu0
        %v2567 = vpop.f32.mrf.mxu0
        %v2568 = vadd.f32 0.0, %v2567
        %v2569 = vpop.f32.mrf.mxu0
        %2570 = vmatprep.mubr.bf16.mxu0 0
        %2571 = vmatmul.mubr.bf16.gmra.mxu0 %v2438
        %v2572 = vpop.f32.mrf.mxu0
        %v2573 = vadd.f32 0.0, %v2572
        %v2574 = vpop.f32.mrf.mxu0
        %v2575 = vpop.f32.mrf.mxu0
        %v2576 = vadd.f32 0.0, %v2575
        %v2577 = vpop.f32.mrf.mxu0
        %2578 = vmatprep.mubr.bf16.mxu0 0
        %2579 = vmatmul.mubr.bf16.gmra.mxu0 %v2441
        %v2580 = vpop.f32.mrf.mxu0
        %v2581 = vadd.f32 0.0, %v2580
        %v2582 = vpop.f32.mrf.mxu0
        %v2583 = vpop.f32.mrf.mxu0
        %v2584 = vadd.f32 0.0, %v2583
        %v2585 = vpop.f32.mrf.mxu0
        %2586 = vmatprep.mubr.bf16.mxu0 0
        %2587 = vmatmul.mubr.bf16.gmra.mxu0 %v2444
        %v2588 = vpop.f32.mrf.mxu0
        %v2589 = vadd.f32 0.0, %v2588
        %v2590 = vpop.f32.mrf.mxu0
        %v2591 = vpop.f32.mrf.mxu0
        %v2592 = vadd.f32 0.0, %v2591
        %v2593 = vpop.f32.mrf.mxu0
        %2594 = vmatprep.mubr.bf16.mxu0 0
        %2595 = vmatmul.mubr.bf16.gmra.mxu0 %v2447
        %v2596 = vpop.f32.mrf.mxu0
        %v2597 = vadd.f32 0.0, %v2596
        %v2598 = vpop.f32.mrf.mxu0
        %v2599 = vpop.f32.mrf.mxu0
        %v2600 = vadd.f32 0.0, %v2599
        %v2601 = vpop.f32.mrf.mxu0
        %2602 = vmatprep.mubr.bf16.mxu0 0
        %2603 = vmatmul.mubr.bf16.gmra.mxu0 %v2450
        %v2604 = vpop.f32.mrf.mxu0
        %v2605 = vadd.f32 0.0, %v2604
        %v2606 = vpop.f32.mrf.mxu0
        %v2607 = vpop.f32.mrf.mxu0
        %v2608 = vadd.f32 0.0, %v2607
        %v2609 = vpop.f32.mrf.mxu0
        %2610 = vmatprep.mubr.bf16.mxu0 0
        %2611 = vmatmul.mubr.bf16.gmra.mxu0 %v2453
        %v2612 = vpop.f32.mrf.mxu0
        %v2613 = vadd.f32 0.0, %v2612
        %v2614 = vpop.f32.mrf.mxu0
        %v2615 = vpop.f32.mrf.mxu0
        %v2616 = vadd.f32 0.0, %v2615
        %v2617 = vpop.f32.mrf.mxu0
        %2618 = vdwg.mxu0
        %v2619 = vadd.f32 %v2261, %v2493
        %v2620 = vadd.f32 %v2262, %v2496
        %v2621 = vadd.f32 %v2263, %v2501
        %v2622 = vadd.f32 %v2264, %v2504
        %v2623 = vadd.f32 %v2265, %v2509
        %v2624 = vadd.f32 %v2266, %v2512
        %v2625 = vadd.f32 %v2267, %v2517
        %v2626 = vadd.f32 %v2268, %v2520
        %v2627 = vadd.f32 %v2269, %v2525
        %v2628 = vadd.f32 %v2270, %v2528
        %v2629 = vadd.f32 %v2271, %v2533
        %v2630 = vadd.f32 %v2272, %v2536
        %v2631 = vadd.f32 %v2273, %v2541
        %v2632 = vadd.f32 %v2274, %v2544
        %v2633 = vadd.f32 %v2275, %v2549
        %v2634 = vadd.f32 %v2276, %v2552
        %v2635 = vadd.f32 %v2277, %v2557
        %v2636 = vadd.f32 %v2278, %v2560
        %v2637 = vadd.f32 %v2279, %v2565
        %v2638 = vadd.f32 %v2280, %v2568
        %v2639 = vadd.f32 %v2281, %v2573
        %v2640 = vadd.f32 %v2282, %v2576
        %v2641 = vadd.f32 %v2283, %v2581
        %v2642 = vadd.f32 %v2284, %v2584
        %v2643 = vadd.f32 %v2285, %v2589
        %v2644 = vadd.f32 %v2286, %v2592
        %v2645 = vadd.f32 %v2287, %v2597
        %v2646 = vadd.f32 %v2288, %v2600
        %v2647 = vadd.f32 %v2289, %v2605
        %v2648 = vadd.f32 %v2290, %v2608
        %v2649 = vadd.f32 %v2291, %v2613
        %v2650 = vadd.f32 %v2292, %v2616
        %v2651 = vld [vmem:[%s239 + $0x10] sm:$0xf]
        %v2652 = vld [vmem:[%s239 + $0x14] sm:$0xf]
        %v2653 = vld [vmem:[%s239 + $0x18] sm:$0xf]
        %v2654 = vld [vmem:[%s239 + $0x1c] sm:$0xf]
        %v2655 = vld [vmem:[%s239 + $0x20] sm:$0xf]
        %v2656 = vld [vmem:[%s239 + $0x24] sm:$0xf]
        %v2657 = vld [vmem:[%s239 + $0x28] sm:$0xf]
        %v2658 = vld [vmem:[%s239 + $0x2c] sm:$0xf]
        %v2659 = vld [vmem:[%s239 + $0x30] sm:$0xf]
        %v2660 = vld [vmem:[%s239 + $0x34] sm:$0xf]
        %v2661 = vld [vmem:[%s239 + $0x38] sm:$0xf]
        %v2662 = vld [vmem:[%s239 + $0x3c] sm:$0xf]
        %v2663 = vld [vmem:[%s239 + $0x40] sm:$0xf]
        %v2664 = vld [vmem:[%s239 + $0x44] sm:$0xf]
        %v2665 = vld [vmem:[%s239 + $0x48] sm:$0xf]
        %v2666 = vld [vmem:[%s239 + $0x4c] sm:$0xf]
        %v2667 = vld [vmem:[%s239 + $0x50] sm:$0xf]
        %v2668 = vld [vmem:[%s239 + $0x54] sm:$0xf]
        %v2669 = vld [vmem:[%s239 + $0x58] sm:$0xf]
        %v2670 = vld [vmem:[%s239 + $0x5c] sm:$0xf]
        %v2671 = vld [vmem:[%s239 + $0x60] sm:$0xf]
        %v2672 = vld [vmem:[%s239 + $0x64] sm:$0xf]
        %v2673 = vld [vmem:[%s239 + $0x68] sm:$0xf]
        %v2674 = vld [vmem:[%s239 + $0x6c] sm:$0xf]
        %v2675 = vld [vmem:[%s239 + $0x70] sm:$0xf]
        %v2676 = vld [vmem:[%s239 + $0x74] sm:$0xf]
        %v2677 = vld [vmem:[%s239 + $0x78] sm:$0xf]
        %v2678 = vld [vmem:[%s239 + $0x7c] sm:$0xf]
        %v2679 = vld [vmem:[%s239 + $0x80] sm:$0xf]
        %v2680 = vld [vmem:[%s239 + $0x84] sm:$0xf]
        %v2681 = vld [vmem:[%s239 + $0x88] sm:$0xf]
        %v2682 = vld [vmem:[%s239 + $0x8c] sm:$0xf]
        %s2683 = scalar_lea.vmem %s1, 14
        %v2684 = vld [vmem:[%s2683] sm:$0x3]
        %v2717 = vunpack.c.l.b16 %v2651
        %v2718 = vunpack.c.l.b16 %v2652
        %v2719 = vunpack.c.l.b16 %v2653
        %v2720 = vunpack.c.l.b16 %v2654
        %v2721 = vunpack.c.l.b16 %v2655
        %v2722 = vunpack.c.l.b16 %v2656
        %v2723 = vunpack.c.l.b16 %v2657
        %v2724 = vunpack.c.l.b16 %v2658
        %v2725 = vunpack.c.l.b16 %v2659
        %v2726 = vunpack.c.l.b16 %v2660
        %v2727 = vunpack.c.l.b16 %v2661
        %v2728 = vunpack.c.l.b16 %v2662
        %v2729 = vunpack.c.l.b16 %v2663
        %v2730 = vunpack.c.l.b16 %v2664
        %v2731 = vunpack.c.l.b16 %v2665
        %v2732 = vunpack.c.l.b16 %v2666
        %v2733 = vunpack.c.l.b16 %v2667
        %v2734 = vunpack.c.l.b16 %v2668
        %v2735 = vunpack.c.l.b16 %v2669
        %v2736 = vunpack.c.l.b16 %v2670
        %v2737 = vunpack.c.l.b16 %v2671
        %v2738 = vunpack.c.l.b16 %v2672
        %v2739 = vunpack.c.l.b16 %v2673
        %v2740 = vunpack.c.l.b16 %v2674
        %v2741 = vunpack.c.l.b16 %v2675
        %v2742 = vunpack.c.l.b16 %v2676
        %v2743 = vunpack.c.l.b16 %v2677
        %v2744 = vunpack.c.l.b16 %v2678
        %v2745 = vunpack.c.l.b16 %v2679
        %v2746 = vunpack.c.l.b16 %v2680
        %v2747 = vunpack.c.l.b16 %v2681
        %v2748 = vunpack.c.l.b16 %v2682
        %v2749 = vpack.c.b16 %v2718, %v2717
        %v2750 = vpack.c.b16 %v2720, %v2719
        %v2751 = vpack.c.b16 %v2722, %v2721
        %v2752 = vpack.c.b16 %v2724, %v2723
        %v2753 = vpack.c.b16 %v2726, %v2725
        %v2754 = vpack.c.b16 %v2728, %v2727
        %v2755 = vpack.c.b16 %v2730, %v2729
        %v2756 = vpack.c.b16 %v2732, %v2731
        %v2757 = vpack.c.b16 %v2734, %v2733
        %v2758 = vpack.c.b16 %v2736, %v2735
        %v2759 = vpack.c.b16 %v2738, %v2737
        %v2760 = vpack.c.b16 %v2740, %v2739
        %v2761 = vpack.c.b16 %v2742, %v2741
        %v2762 = vpack.c.b16 %v2744, %v2743
        %v2763 = vpack.c.b16 %v2746, %v2745
        %v2764 = vpack.c.b16 %v2748, %v2747
        %v2766 = vsel %vm354, %v2749, 0
        %v2769 = vsel %vm354, %v2750, 0
        %v2772 = vsel %vm354, %v2751, 0
        %v2775 = vsel %vm354, %v2752, 0
        %v2778 = vsel %vm354, %v2753, 0
        %v2781 = vsel %vm354, %v2754, 0
        %v2784 = vsel %vm354, %v2755, 0
        %v2787 = vsel %vm354, %v2756, 0
        %v2790 = vsel %vm354, %v2757, 0
        %v2793 = vsel %vm354, %v2758, 0
        %v2796 = vsel %vm354, %v2759, 0
        %v2799 = vsel %vm354, %v2760, 0
        %v2802 = vsel %vm354, %v2761, 0
        %v2805 = vsel %vm354, %v2762, 0
        %v2808 = vsel %vm354, %v2763, 0
        %v2811 = vsel %vm354, %v2764, 0
        %v2814 = vsel %vm403, %v2684, 0
        %2816 = vmatprep.subr.bf16.mxu0 0
        %2817 = vmatpush1.bf16.msra.mxu0 0
        %2818 = vmatprep.subr.bf16.mxu0 0
        %2819 = vmatpush1.bf16.msra.mxu0 0
        %2820 = vmatprep.subr.bf16.mxu0 0
        %2821 = vmatpush1.bf16.msra.mxu0 0
        %2822 = vmatprep.subr.bf16.mxu0 0
        %2823 = vmatpush1.bf16.msra.mxu0 0
        %2824 = vmatprep.subr.bf16.mxu0 0
        %2825 = vmatpush1.bf16.msra.mxu0 0
        %2826 = vmatprep.subr.bf16.mxu0 0
        %2827 = vmatpush1.bf16.msra.mxu0 0
        %2828 = vmatprep.subr.bf16.mxu0 0
        %2829 = vmatpush1.bf16.msra.mxu0 0
        %2830 = vmatprep.subr.bf16.mxu0 0
        %2831 = vmatpush1.bf16.msra.mxu0 %v2814
        %2832 = vmatprep.subr.bf16.mxu0 0
        %2833 = vmatpush2.bf16.msra.mxu0 0
        %2834 = vmatprep.subr.bf16.mxu0 0
        %2835 = vmatpush2.bf16.msra.mxu0 0
        %2836 = vmatprep.subr.bf16.mxu0 0
        %2837 = vmatpush2.bf16.msra.mxu0 0
        %2838 = vmatprep.subr.bf16.mxu0 0
        %2839 = vmatpush2.bf16.msra.mxu0 0
        %2840 = vmatprep.subr.bf16.mxu0 0
        %2841 = vmatpush2.bf16.msra.mxu0 0
        %2842 = vmatprep.subr.bf16.mxu0 0
        %2843 = vmatpush2.bf16.msra.mxu0 0
        %2844 = vmatprep.subr.bf16.mxu0 0
        %2845 = vmatpush2.bf16.msra.mxu0 0
        %2846 = vmatprep.subr.bf16.mxu0 0
        %2847 = vmatpush2.bf16.msra.mxu0 0
        %2848 = vmatprep.mubr.bf16.mxu0 0
        %2849 = vmatmul.mubr.bf16.gmra.mxu0 %v2766
        %v2850 = vpop.f32.mrf.mxu0
        %v2851 = vadd.f32 0.0, %v2850
        %v2852 = vpop.f32.mrf.mxu0
        %v2853 = vpop.f32.mrf.mxu0
        %v2854 = vadd.f32 0.0, %v2853
        %v2855 = vpop.f32.mrf.mxu0
        %2856 = vmatprep.mubr.bf16.mxu0 0
        %2857 = vmatmul.mubr.bf16.gmra.mxu0 %v2769
        %v2858 = vpop.f32.mrf.mxu0
        %v2859 = vadd.f32 0.0, %v2858
        %v2860 = vpop.f32.mrf.mxu0
        %v2861 = vpop.f32.mrf.mxu0
        %v2862 = vadd.f32 0.0, %v2861
        %v2863 = vpop.f32.mrf.mxu0
        %2864 = vmatprep.mubr.bf16.mxu0 0
        %2865 = vmatmul.mubr.bf16.gmra.mxu0 %v2772
        %v2866 = vpop.f32.mrf.mxu0
        %v2867 = vadd.f32 0.0, %v2866
        %v2868 = vpop.f32.mrf.mxu0
        %v2869 = vpop.f32.mrf.mxu0
        %v2870 = vadd.f32 0.0, %v2869
        %v2871 = vpop.f32.mrf.mxu0
        %2872 = vmatprep.mubr.bf16.mxu0 0
        %2873 = vmatmul.mubr.bf16.gmra.mxu0 %v2775
        %v2874 = vpop.f32.mrf.mxu0
        %v2875 = vadd.f32 0.0, %v2874
        %v2876 = vpop.f32.mrf.mxu0
        %v2877 = vpop.f32.mrf.mxu0
        %v2878 = vadd.f32 0.0, %v2877
        %v2879 = vpop.f32.mrf.mxu0
        %2880 = vmatprep.mubr.bf16.mxu0 0
        %2881 = vmatmul.mubr.bf16.gmra.mxu0 %v2778
        %v2882 = vpop.f32.mrf.mxu0
        %v2883 = vadd.f32 0.0, %v2882
        %v2884 = vpop.f32.mrf.mxu0
        %v2885 = vpop.f32.mrf.mxu0
        %v2886 = vadd.f32 0.0, %v2885
        %v2887 = vpop.f32.mrf.mxu0
        %2888 = vmatprep.mubr.bf16.mxu0 0
        %2889 = vmatmul.mubr.bf16.gmra.mxu0 %v2781
        %v2890 = vpop.f32.mrf.mxu0
        %v2891 = vadd.f32 0.0, %v2890
        %v2892 = vpop.f32.mrf.mxu0
        %v2893 = vpop.f32.mrf.mxu0
        %v2894 = vadd.f32 0.0, %v2893
        %v2895 = vpop.f32.mrf.mxu0
        %2896 = vmatprep.mubr.bf16.mxu0 0
        %2897 = vmatmul.mubr.bf16.gmra.mxu0 %v2784
        %v2898 = vpop.f32.mrf.mxu0
        %v2899 = vadd.f32 0.0, %v2898
        %v2900 = vpop.f32.mrf.mxu0
        %v2901 = vpop.f32.mrf.mxu0
        %v2902 = vadd.f32 0.0, %v2901
        %v2903 = vpop.f32.mrf.mxu0
        %2904 = vmatprep.mubr.bf16.mxu0 0
        %2905 = vmatmul.mubr.bf16.gmra.mxu0 %v2787
        %v2906 = vpop.f32.mrf.mxu0
        %v2907 = vadd.f32 0.0, %v2906
        %v2908 = vpop.f32.mrf.mxu0
        %v2909 = vpop.f32.mrf.mxu0
        %v2910 = vadd.f32 0.0, %v2909
        %v2911 = vpop.f32.mrf.mxu0
        %2912 = vmatprep.mubr.bf16.mxu0 0
        %2913 = vmatmul.mubr.bf16.gmra.mxu0 %v2790
        %v2914 = vpop.f32.mrf.mxu0
        %v2915 = vadd.f32 0.0, %v2914
        %v2916 = vpop.f32.mrf.mxu0
        %v2917 = vpop.f32.mrf.mxu0
        %v2918 = vadd.f32 0.0, %v2917
        %v2919 = vpop.f32.mrf.mxu0
        %2920 = vmatprep.mubr.bf16.mxu0 0
        %2921 = vmatmul.mubr.bf16.gmra.mxu0 %v2793
        %v2922 = vpop.f32.mrf.mxu0
        %v2923 = vadd.f32 0.0, %v2922
        %v2924 = vpop.f32.mrf.mxu0
        %v2925 = vpop.f32.mrf.mxu0
        %v2926 = vadd.f32 0.0, %v2925
        %v2927 = vpop.f32.mrf.mxu0
        %2928 = vmatprep.mubr.bf16.mxu0 0
        %2929 = vmatmul.mubr.bf16.gmra.mxu0 %v2796
        %v2930 = vpop.f32.mrf.mxu0
        %v2931 = vadd.f32 0.0, %v2930
        %v2932 = vpop.f32.mrf.mxu0
        %v2933 = vpop.f32.mrf.mxu0
        %v2934 = vadd.f32 0.0, %v2933
        %v2935 = vpop.f32.mrf.mxu0
        %2936 = vmatprep.mubr.bf16.mxu0 0
        %2937 = vmatmul.mubr.bf16.gmra.mxu0 %v2799
        %v2938 = vpop.f32.mrf.mxu0
        %v2939 = vadd.f32 0.0, %v2938
        %v2940 = vpop.f32.mrf.mxu0
        %v2941 = vpop.f32.mrf.mxu0
        %v2942 = vadd.f32 0.0, %v2941
        %v2943 = vpop.f32.mrf.mxu0
        %2944 = vmatprep.mubr.bf16.mxu0 0
        %2945 = vmatmul.mubr.bf16.gmra.mxu0 %v2802
        %v2946 = vpop.f32.mrf.mxu0
        %v2947 = vadd.f32 0.0, %v2946
        %v2948 = vpop.f32.mrf.mxu0
        %v2949 = vpop.f32.mrf.mxu0
        %v2950 = vadd.f32 0.0, %v2949
        %v2951 = vpop.f32.mrf.mxu0
        %2952 = vmatprep.mubr.bf16.mxu0 0
        %2953 = vmatmul.mubr.bf16.gmra.mxu0 %v2805
        %v2954 = vpop.f32.mrf.mxu0
        %v2955 = vadd.f32 0.0, %v2954
        %v2956 = vpop.f32.mrf.mxu0
        %v2957 = vpop.f32.mrf.mxu0
        %v2958 = vadd.f32 0.0, %v2957
        %v2959 = vpop.f32.mrf.mxu0
        %2960 = vmatprep.mubr.bf16.mxu0 0
        %2961 = vmatmul.mubr.bf16.gmra.mxu0 %v2808
        %v2962 = vpop.f32.mrf.mxu0
        %v2963 = vadd.f32 0.0, %v2962
        %v2964 = vpop.f32.mrf.mxu0
        %v2965 = vpop.f32.mrf.mxu0
        %v2966 = vadd.f32 0.0, %v2965
        %v2967 = vpop.f32.mrf.mxu0
        %2968 = vmatprep.mubr.bf16.mxu0 0
        %2969 = vmatmul.mubr.bf16.gmra.mxu0 %v2811
        %v2970 = vpop.f32.mrf.mxu0
        %v2971 = vadd.f32 0.0, %v2970
        %v2972 = vpop.f32.mrf.mxu0
        %v2973 = vpop.f32.mrf.mxu0
        %v2974 = vadd.f32 0.0, %v2973
        %v2975 = vpop.f32.mrf.mxu0
        %2976 = vdwg.mxu0
        %v2977 = vadd.f32 %v2619, %v2851
        %v2978 = vadd.f32 %v2620, %v2854
        %v2979 = vadd.f32 %v2621, %v2859
        %v2980 = vadd.f32 %v2622, %v2862
        %v2981 = vadd.f32 %v2623, %v2867
        %v2982 = vadd.f32 %v2624, %v2870
        %v2983 = vadd.f32 %v2625, %v2875
        %v2984 = vadd.f32 %v2626, %v2878
        %v2985 = vadd.f32 %v2627, %v2883
        %v2986 = vadd.f32 %v2628, %v2886
        %v2987 = vadd.f32 %v2629, %v2891
        %v2988 = vadd.f32 %v2630, %v2894
        %v2989 = vadd.f32 %v2631, %v2899
        %v2990 = vadd.f32 %v2632, %v2902
        %v2991 = vadd.f32 %v2633, %v2907
        %v2992 = vadd.f32 %v2634, %v2910
        %v2993 = vadd.f32 %v2635, %v2915
        %v2994 = vadd.f32 %v2636, %v2918
        %v2995 = vadd.f32 %v2637, %v2923
        %v2996 = vadd.f32 %v2638, %v2926
        %v2997 = vadd.f32 %v2639, %v2931
        %v2998 = vadd.f32 %v2640, %v2934
        %v2999 = vadd.f32 %v2641, %v2939
        %v3000 = vadd.f32 %v2642, %v2942
        %v3001 = vadd.f32 %v2643, %v2947
        %v3002 = vadd.f32 %v2644, %v2950
        %v3003 = vadd.f32 %v2645, %v2955
        %v3004 = vadd.f32 %v2646, %v2958
        %v3005 = vadd.f32 %v2647, %v2963
        %v3006 = vadd.f32 %v2648, %v2966
        %v3007 = vadd.f32 %v2649, %v2971
        %v3008 = vadd.f32 %v2650, %v2974
        %v3009 = vld [vmem:[%s860 + $0x10] sm:$0xf]
        %v3010 = vld [vmem:[%s860 + $0x14] sm:$0xf]
        %v3011 = vld [vmem:[%s860 + $0x18] sm:$0xf]
        %v3012 = vld [vmem:[%s860 + $0x1c] sm:$0xf]
        %v3013 = vld [vmem:[%s860 + $0x20] sm:$0xf]
        %v3014 = vld [vmem:[%s860 + $0x24] sm:$0xf]
        %v3015 = vld [vmem:[%s860 + $0x28] sm:$0xf]
        %v3016 = vld [vmem:[%s860 + $0x2c] sm:$0xf]
        %v3017 = vld [vmem:[%s860 + $0x30] sm:$0xf]
        %v3018 = vld [vmem:[%s860 + $0x34] sm:$0xf]
        %v3019 = vld [vmem:[%s860 + $0x38] sm:$0xf]
        %v3020 = vld [vmem:[%s860 + $0x3c] sm:$0xf]
        %v3021 = vld [vmem:[%s860 + $0x40] sm:$0xf]
        %v3022 = vld [vmem:[%s860 + $0x44] sm:$0xf]
        %v3023 = vld [vmem:[%s860 + $0x48] sm:$0xf]
        %v3024 = vld [vmem:[%s860 + $0x4c] sm:$0xf]
        %v3025 = vld [vmem:[%s860 + $0x50] sm:$0xf]
        %v3026 = vld [vmem:[%s860 + $0x54] sm:$0xf]
        %v3027 = vld [vmem:[%s860 + $0x58] sm:$0xf]
        %v3028 = vld [vmem:[%s860 + $0x5c] sm:$0xf]
        %v3029 = vld [vmem:[%s860 + $0x60] sm:$0xf]
        %v3030 = vld [vmem:[%s860 + $0x64] sm:$0xf]
        %v3031 = vld [vmem:[%s860 + $0x68] sm:$0xf]
        %v3032 = vld [vmem:[%s860 + $0x6c] sm:$0xf]
        %v3033 = vld [vmem:[%s860 + $0x70] sm:$0xf]
        %v3034 = vld [vmem:[%s860 + $0x74] sm:$0xf]
        %v3035 = vld [vmem:[%s860 + $0x78] sm:$0xf]
        %v3036 = vld [vmem:[%s860 + $0x7c] sm:$0xf]
        %v3037 = vld [vmem:[%s860 + $0x80] sm:$0xf]
        %v3038 = vld [vmem:[%s860 + $0x84] sm:$0xf]
        %v3039 = vld [vmem:[%s860 + $0x88] sm:$0xf]
        %v3040 = vld [vmem:[%s860 + $0x8c] sm:$0xf]
        %s3041 = scalar_lea.vmem %s1, 16
        %v3042 = vld [vmem:[%s3041] sm:$0x3]
        %v3075 = vunpack.c.l.b16 %v3009
        %v3076 = vunpack.c.l.b16 %v3010
        %v3077 = vunpack.c.l.b16 %v3011
        %v3078 = vunpack.c.l.b16 %v3012
        %v3079 = vunpack.c.l.b16 %v3013
        %v3080 = vunpack.c.l.b16 %v3014
        %v3081 = vunpack.c.l.b16 %v3015
        %v3082 = vunpack.c.l.b16 %v3016
        %v3083 = vunpack.c.l.b16 %v3017
        %v3084 = vunpack.c.l.b16 %v3018
        %v3085 = vunpack.c.l.b16 %v3019
        %v3086 = vunpack.c.l.b16 %v3020
        %v3087 = vunpack.c.l.b16 %v3021
        %v3088 = vunpack.c.l.b16 %v3022
        %v3089 = vunpack.c.l.b16 %v3023
        %v3090 = vunpack.c.l.b16 %v3024
        %v3091 = vunpack.c.l.b16 %v3025
        %v3092 = vunpack.c.l.b16 %v3026
        %v3093 = vunpack.c.l.b16 %v3027
        %v3094 = vunpack.c.l.b16 %v3028
        %v3095 = vunpack.c.l.b16 %v3029
        %v3096 = vunpack.c.l.b16 %v3030
        %v3097 = vunpack.c.l.b16 %v3031
        %v3098 = vunpack.c.l.b16 %v3032
        %v3099 = vunpack.c.l.b16 %v3033
        %v3100 = vunpack.c.l.b16 %v3034
        %v3101 = vunpack.c.l.b16 %v3035
        %v3102 = vunpack.c.l.b16 %v3036
        %v3103 = vunpack.c.l.b16 %v3037
        %v3104 = vunpack.c.l.b16 %v3038
        %v3105 = vunpack.c.l.b16 %v3039
        %v3106 = vunpack.c.l.b16 %v3040
        %v3107 = vpack.c.b16 %v3076, %v3075
        %v3108 = vpack.c.b16 %v3078, %v3077
        %v3109 = vpack.c.b16 %v3080, %v3079
        %v3110 = vpack.c.b16 %v3082, %v3081
        %v3111 = vpack.c.b16 %v3084, %v3083
        %v3112 = vpack.c.b16 %v3086, %v3085
        %v3113 = vpack.c.b16 %v3088, %v3087
        %v3114 = vpack.c.b16 %v3090, %v3089
        %v3115 = vpack.c.b16 %v3092, %v3091
        %v3116 = vpack.c.b16 %v3094, %v3093
        %v3117 = vpack.c.b16 %v3096, %v3095
        %v3118 = vpack.c.b16 %v3098, %v3097
        %v3119 = vpack.c.b16 %v3100, %v3099
        %v3120 = vpack.c.b16 %v3102, %v3101
        %v3121 = vpack.c.b16 %v3104, %v3103
        %v3122 = vpack.c.b16 %v3106, %v3105
        %v3124 = vsel %vm354, %v3107, 0
        %v3127 = vsel %vm354, %v3108, 0
        %v3130 = vsel %vm354, %v3109, 0
        %v3133 = vsel %vm354, %v3110, 0
        %v3136 = vsel %vm354, %v3111, 0
        %v3139 = vsel %vm354, %v3112, 0
        %v3142 = vsel %vm354, %v3113, 0
        %v3145 = vsel %vm354, %v3114, 0
        %v3148 = vsel %vm354, %v3115, 0
        %v3151 = vsel %vm354, %v3116, 0
        %v3154 = vsel %vm354, %v3117, 0
        %v3157 = vsel %vm354, %v3118, 0
        %v3160 = vsel %vm354, %v3119, 0
        %v3163 = vsel %vm354, %v3120, 0
        %v3166 = vsel %vm354, %v3121, 0
        %v3169 = vsel %vm354, %v3122, 0
        %v3172 = vsel %vm403, %v3042, 0
        %3174 = vmatprep.subr.bf16.mxu0 0
        %3175 = vmatpush1.bf16.msra.mxu0 0
        %3176 = vmatprep.subr.bf16.mxu0 0
        %3177 = vmatpush1.bf16.msra.mxu0 0
        %3178 = vmatprep.subr.bf16.mxu0 0
        %3179 = vmatpush1.bf16.msra.mxu0 0
        %3180 = vmatprep.subr.bf16.mxu0 0
        %3181 = vmatpush1.bf16.msra.mxu0 0
        %3182 = vmatprep.subr.bf16.mxu0 0
        %3183 = vmatpush1.bf16.msra.mxu0 0
        %3184 = vmatprep.subr.bf16.mxu0 0
        %3185 = vmatpush1.bf16.msra.mxu0 0
        %3186 = vmatprep.subr.bf16.mxu0 0
        %3187 = vmatpush1.bf16.msra.mxu0 0
        %3188 = vmatprep.subr.bf16.mxu0 0
        %3189 = vmatpush1.bf16.msra.mxu0 %v3172
        %3190 = vmatprep.subr.bf16.mxu0 0
        %3191 = vmatpush2.bf16.msra.mxu0 0
        %3192 = vmatprep.subr.bf16.mxu0 0
        %3193 = vmatpush2.bf16.msra.mxu0 0
        %3194 = vmatprep.subr.bf16.mxu0 0
        %3195 = vmatpush2.bf16.msra.mxu0 0
        %3196 = vmatprep.subr.bf16.mxu0 0
        %3197 = vmatpush2.bf16.msra.mxu0 0
        %3198 = vmatprep.subr.bf16.mxu0 0
        %3199 = vmatpush2.bf16.msra.mxu0 0
        %3200 = vmatprep.subr.bf16.mxu0 0
        %3201 = vmatpush2.bf16.msra.mxu0 0
        %3202 = vmatprep.subr.bf16.mxu0 0
        %3203 = vmatpush2.bf16.msra.mxu0 0
        %3204 = vmatprep.subr.bf16.mxu0 0
        %3205 = vmatpush2.bf16.msra.mxu0 0
        %3206 = vmatprep.mubr.bf16.mxu0 0
        %3207 = vmatmul.mubr.bf16.gmra.mxu0 %v3124
        %v3208 = vpop.f32.mrf.mxu0
        %v3209 = vadd.f32 0.0, %v3208
        %v3210 = vpop.f32.mrf.mxu0
        %v3211 = vpop.f32.mrf.mxu0
        %v3212 = vadd.f32 0.0, %v3211
        %v3213 = vpop.f32.mrf.mxu0
        %3214 = vmatprep.mubr.bf16.mxu0 0
        %3215 = vmatmul.mubr.bf16.gmra.mxu0 %v3127
        %v3216 = vpop.f32.mrf.mxu0
        %v3217 = vadd.f32 0.0, %v3216
        %v3218 = vpop.f32.mrf.mxu0
        %v3219 = vpop.f32.mrf.mxu0
        %v3220 = vadd.f32 0.0, %v3219
        %v3221 = vpop.f32.mrf.mxu0
        %3222 = vmatprep.mubr.bf16.mxu0 0
        %3223 = vmatmul.mubr.bf16.gmra.mxu0 %v3130
        %v3224 = vpop.f32.mrf.mxu0
        %v3225 = vadd.f32 0.0, %v3224
        %v3226 = vpop.f32.mrf.mxu0
        %v3227 = vpop.f32.mrf.mxu0
        %v3228 = vadd.f32 0.0, %v3227
        %v3229 = vpop.f32.mrf.mxu0
        %3230 = vmatprep.mubr.bf16.mxu0 0
        %3231 = vmatmul.mubr.bf16.gmra.mxu0 %v3133
        %v3232 = vpop.f32.mrf.mxu0
        %v3233 = vadd.f32 0.0, %v3232
        %v3234 = vpop.f32.mrf.mxu0
        %v3235 = vpop.f32.mrf.mxu0
        %v3236 = vadd.f32 0.0, %v3235
        %v3237 = vpop.f32.mrf.mxu0
        %3238 = vmatprep.mubr.bf16.mxu0 0
        %3239 = vmatmul.mubr.bf16.gmra.mxu0 %v3136
        %v3240 = vpop.f32.mrf.mxu0
        %v3241 = vadd.f32 0.0, %v3240
        %v3242 = vpop.f32.mrf.mxu0
        %v3243 = vpop.f32.mrf.mxu0
        %v3244 = vadd.f32 0.0, %v3243
        %v3245 = vpop.f32.mrf.mxu0
        %3246 = vmatprep.mubr.bf16.mxu0 0
        %3247 = vmatmul.mubr.bf16.gmra.mxu0 %v3139
        %v3248 = vpop.f32.mrf.mxu0
        %v3249 = vadd.f32 0.0, %v3248
        %v3250 = vpop.f32.mrf.mxu0
        %v3251 = vpop.f32.mrf.mxu0
        %v3252 = vadd.f32 0.0, %v3251
        %v3253 = vpop.f32.mrf.mxu0
        %3254 = vmatprep.mubr.bf16.mxu0 0
        %3255 = vmatmul.mubr.bf16.gmra.mxu0 %v3142
        %v3256 = vpop.f32.mrf.mxu0
        %v3257 = vadd.f32 0.0, %v3256
        %v3258 = vpop.f32.mrf.mxu0
        %v3259 = vpop.f32.mrf.mxu0
        %v3260 = vadd.f32 0.0, %v3259
        %v3261 = vpop.f32.mrf.mxu0
        %3262 = vmatprep.mubr.bf16.mxu0 0
        %3263 = vmatmul.mubr.bf16.gmra.mxu0 %v3145
        %v3264 = vpop.f32.mrf.mxu0
        %v3265 = vadd.f32 0.0, %v3264
        %v3266 = vpop.f32.mrf.mxu0
        %v3267 = vpop.f32.mrf.mxu0
        %v3268 = vadd.f32 0.0, %v3267
        %v3269 = vpop.f32.mrf.mxu0
        %3270 = vmatprep.mubr.bf16.mxu0 0
        %3271 = vmatmul.mubr.bf16.gmra.mxu0 %v3148
        %v3272 = vpop.f32.mrf.mxu0
        %v3273 = vadd.f32 0.0, %v3272
        %v3274 = vpop.f32.mrf.mxu0
        %v3275 = vpop.f32.mrf.mxu0
        %v3276 = vadd.f32 0.0, %v3275
        %v3277 = vpop.f32.mrf.mxu0
        %3278 = vmatprep.mubr.bf16.mxu0 0
        %3279 = vmatmul.mubr.bf16.gmra.mxu0 %v3151
        %v3280 = vpop.f32.mrf.mxu0
        %v3281 = vadd.f32 0.0, %v3280
        %v3282 = vpop.f32.mrf.mxu0
        %v3283 = vpop.f32.mrf.mxu0
        %v3284 = vadd.f32 0.0, %v3283
        %v3285 = vpop.f32.mrf.mxu0
        %3286 = vmatprep.mubr.bf16.mxu0 0
        %3287 = vmatmul.mubr.bf16.gmra.mxu0 %v3154
        %v3288 = vpop.f32.mrf.mxu0
        %v3289 = vadd.f32 0.0, %v3288
        %v3290 = vpop.f32.mrf.mxu0
        %v3291 = vpop.f32.mrf.mxu0
        %v3292 = vadd.f32 0.0, %v3291
        %v3293 = vpop.f32.mrf.mxu0
        %3294 = vmatprep.mubr.bf16.mxu0 0
        %3295 = vmatmul.mubr.bf16.gmra.mxu0 %v3157
        %v3296 = vpop.f32.mrf.mxu0
        %v3297 = vadd.f32 0.0, %v3296
        %v3298 = vpop.f32.mrf.mxu0
        %v3299 = vpop.f32.mrf.mxu0
        %v3300 = vadd.f32 0.0, %v3299
        %v3301 = vpop.f32.mrf.mxu0
        %3302 = vmatprep.mubr.bf16.mxu0 0
        %3303 = vmatmul.mubr.bf16.gmra.mxu0 %v3160
        %v3304 = vpop.f32.mrf.mxu0
        %v3305 = vadd.f32 0.0, %v3304
        %v3306 = vpop.f32.mrf.mxu0
        %v3307 = vpop.f32.mrf.mxu0
        %v3308 = vadd.f32 0.0, %v3307
        %v3309 = vpop.f32.mrf.mxu0
        %3310 = vmatprep.mubr.bf16.mxu0 0
        %3311 = vmatmul.mubr.bf16.gmra.mxu0 %v3163
        %v3312 = vpop.f32.mrf.mxu0
        %v3313 = vadd.f32 0.0, %v3312
        %v3314 = vpop.f32.mrf.mxu0
        %v3315 = vpop.f32.mrf.mxu0
        %v3316 = vadd.f32 0.0, %v3315
        %v3317 = vpop.f32.mrf.mxu0
        %3318 = vmatprep.mubr.bf16.mxu0 0
        %3319 = vmatmul.mubr.bf16.gmra.mxu0 %v3166
        %v3320 = vpop.f32.mrf.mxu0
        %v3321 = vadd.f32 0.0, %v3320
        %v3322 = vpop.f32.mrf.mxu0
        %v3323 = vpop.f32.mrf.mxu0
        %v3324 = vadd.f32 0.0, %v3323
        %v3325 = vpop.f32.mrf.mxu0
        %3326 = vmatprep.mubr.bf16.mxu0 0
        %3327 = vmatmul.mubr.bf16.gmra.mxu0 %v3169
        %v3328 = vpop.f32.mrf.mxu0
        %v3329 = vadd.f32 0.0, %v3328
        %v3330 = vpop.f32.mrf.mxu0
        %v3331 = vpop.f32.mrf.mxu0
        %v3332 = vadd.f32 0.0, %v3331
        %v3333 = vpop.f32.mrf.mxu0
        %3334 = vdwg.mxu0
        %v3335 = vadd.f32 %v2977, %v3209
        %v3336 = vadd.f32 %v2978, %v3212
        %v3337 = vadd.f32 %v2979, %v3217
        %v3338 = vadd.f32 %v2980, %v3220
        %v3339 = vadd.f32 %v2981, %v3225
        %v3340 = vadd.f32 %v2982, %v3228
        %v3341 = vadd.f32 %v2983, %v3233
        %v3342 = vadd.f32 %v2984, %v3236
        %v3343 = vadd.f32 %v2985, %v3241
        %v3344 = vadd.f32 %v2986, %v3244
        %v3345 = vadd.f32 %v2987, %v3249
        %v3346 = vadd.f32 %v2988, %v3252
        %v3347 = vadd.f32 %v2989, %v3257
        %v3348 = vadd.f32 %v2990, %v3260
        %v3349 = vadd.f32 %v2991, %v3265
        %v3350 = vadd.f32 %v2992, %v3268
        %v3351 = vadd.f32 %v2993, %v3273
        %v3352 = vadd.f32 %v2994, %v3276
        %v3353 = vadd.f32 %v2995, %v3281
        %v3354 = vadd.f32 %v2996, %v3284
        %v3355 = vadd.f32 %v2997, %v3289
        %v3356 = vadd.f32 %v2998, %v3292
        %v3357 = vadd.f32 %v2999, %v3297
        %v3358 = vadd.f32 %v3000, %v3300
        %v3359 = vadd.f32 %v3001, %v3305
        %v3360 = vadd.f32 %v3002, %v3308
        %v3361 = vadd.f32 %v3003, %v3313
        %v3362 = vadd.f32 %v3004, %v3316
        %v3363 = vadd.f32 %v3005, %v3321
        %v3364 = vadd.f32 %v3006, %v3324
        %v3365 = vadd.f32 %v3007, %v3329
        %v3366 = vadd.f32 %v3008, %v3332
        %v3367 = vld [vmem:[%s2] sm:$0x1]
        %v3369 = vlaneseq
        %v3370 = vshrl.u32 %v3369, 7
        %v3371 = vsub.s32 0, %v3370
        %v3372 = vrot.slane %v3367, %v3371
        %v3374 = vadd.f32 %v3335, %v3372
        %v3375 = vadd.f32 %v3336, %v3372
        %v3376 = vadd.f32 %v3337, %v3372
        %v3377 = vadd.f32 %v3338, %v3372
        %v3378 = vadd.f32 %v3339, %v3372
        %v3379 = vadd.f32 %v3340, %v3372
        %v3380 = vadd.f32 %v3341, %v3372
        %v3381 = vadd.f32 %v3342, %v3372
        %v3382 = vadd.f32 %v3343, %v3372
        %v3383 = vadd.f32 %v3344, %v3372
        %v3384 = vadd.f32 %v3345, %v3372
        %v3385 = vadd.f32 %v3346, %v3372
        %v3386 = vadd.f32 %v3347, %v3372
        %v3387 = vadd.f32 %v3348, %v3372
        %v3388 = vadd.f32 %v3349, %v3372
        %v3389 = vadd.f32 %v3350, %v3372
        %v3390 = vadd.f32 %v3351, %v3372
        %v3391 = vadd.f32 %v3352, %v3372
        %v3392 = vadd.f32 %v3353, %v3372
        %v3393 = vadd.f32 %v3354, %v3372
        %v3394 = vadd.f32 %v3355, %v3372
        %v3395 = vadd.f32 %v3356, %v3372
        %v3396 = vadd.f32 %v3357, %v3372
        %v3397 = vadd.f32 %v3358, %v3372
        %v3398 = vadd.f32 %v3359, %v3372
        %v3399 = vadd.f32 %v3360, %v3372
        %v3400 = vadd.f32 %v3361, %v3372
        %v3401 = vadd.f32 %v3362, %v3372
        %v3402 = vadd.f32 %v3363, %v3372
        %v3403 = vadd.f32 %v3364, %v3372
        %v3404 = vadd.f32 %v3365, %v3372
        %v3405 = vadd.f32 %v3366, %v3372
        %v3406 = vadd.f32 %v3374, %v3375
        %v3407 = vadd.f32 %v3406, %v3376
        %v3408 = vadd.f32 %v3407, %v3377
        %v3409 = vadd.f32 %v3408, %v3378
        %v3410 = vadd.f32 %v3409, %v3379
        %v3411 = vadd.f32 %v3410, %v3380
        %v3412 = vadd.f32 %v3411, %v3381
        %v3413 = vadd.f32 %v3412, %v3382
        %v3414 = vadd.f32 %v3413, %v3383
        %v3415 = vadd.f32 %v3414, %v3384
        %v3416 = vadd.f32 %v3415, %v3385
        %v3417 = vadd.f32 %v3416, %v3386
        %v3418 = vadd.f32 %v3417, %v3387
        %v3419 = vadd.f32 %v3418, %v3388
        %v3420 = vadd.f32 %v3419, %v3389
        %v3421 = vadd.f32 %v3420, %v3390
        %v3422 = vadd.f32 %v3421, %v3391
        %v3423 = vadd.f32 %v3422, %v3392
        %v3424 = vadd.f32 %v3423, %v3393
        %v3425 = vadd.f32 %v3424, %v3394
        %v3426 = vadd.f32 %v3425, %v3395
        %v3427 = vadd.f32 %v3426, %v3396
        %v3428 = vadd.f32 %v3427, %v3397
        %v3429 = vadd.f32 %v3428, %v3398
        %v3430 = vadd.f32 %v3429, %v3399
        %v3431 = vadd.f32 %v3430, %v3400
        %v3432 = vadd.f32 %v3431, %v3401
        %v3433 = vadd.f32 %v3432, %v3402
        %v3434 = vadd.f32 %v3433, %v3403
        %v3435 = vadd.f32 %v3434, %v3404
        %v3436 = vadd.f32 %v3435, %v3405
        %v3437 = vrot.slane %v3436, 4
        %v3438 = vadd.f32 %v3436, %v3437
        %v3439 = vrot.slane %v3438, 2
        %v3440 = vadd.f32 %v3438, %v3439
        %v3441 = vrot.slane %v3440, 1
        %v3442 = vadd.f32 %v3440, %v3441
        %v3443 = vmul.f32 %v3442, 0.00390625
        %v3444 = vsub.f32 %v3374, %v3443
        %v3445 = vsub.f32 %v3375, %v3443
        %v3446 = vsub.f32 %v3376, %v3443
        %v3447 = vsub.f32 %v3377, %v3443
        %v3448 = vsub.f32 %v3378, %v3443
        %v3449 = vsub.f32 %v3379, %v3443
        %v3450 = vsub.f32 %v3380, %v3443
        %v3451 = vsub.f32 %v3381, %v3443
        %v3452 = vsub.f32 %v3382, %v3443
        %v3453 = vsub.f32 %v3383, %v3443
        %v3454 = vsub.f32 %v3384, %v3443
        %v3455 = vsub.f32 %v3385, %v3443
        %v3456 = vsub.f32 %v3386, %v3443
        %v3457 = vsub.f32 %v3387, %v3443
        %v3458 = vsub.f32 %v3388, %v3443
        %v3459 = vsub.f32 %v3389, %v3443
        %v3460 = vsub.f32 %v3390, %v3443
        %v3461 = vsub.f32 %v3391, %v3443
        %v3462 = vsub.f32 %v3392, %v3443
        %v3463 = vsub.f32 %v3393, %v3443
        %v3464 = vsub.f32 %v3394, %v3443
        %v3465 = vsub.f32 %v3395, %v3443
        %v3466 = vsub.f32 %v3396, %v3443
        %v3467 = vsub.f32 %v3397, %v3443
        %v3468 = vsub.f32 %v3398, %v3443
        %v3469 = vsub.f32 %v3399, %v3443
        %v3470 = vsub.f32 %v3400, %v3443
        %v3471 = vsub.f32 %v3401, %v3443
        %v3472 = vsub.f32 %v3402, %v3443
        %v3473 = vsub.f32 %v3403, %v3443
        %v3474 = vsub.f32 %v3404, %v3443
        %v3475 = vsub.f32 %v3405, %v3443
        %v3476 = vmul.f32 %v3444, %v3444
        %v3477 = vmul.f32 %v3445, %v3445
        %v3478 = vmul.f32 %v3446, %v3446
        %v3479 = vmul.f32 %v3447, %v3447
        %v3480 = vmul.f32 %v3448, %v3448
        %v3481 = vmul.f32 %v3449, %v3449
        %v3482 = vmul.f32 %v3450, %v3450
        %v3483 = vmul.f32 %v3451, %v3451
        %v3484 = vmul.f32 %v3452, %v3452
        %v3485 = vmul.f32 %v3453, %v3453
        %v3486 = vmul.f32 %v3454, %v3454
        %v3487 = vmul.f32 %v3455, %v3455
        %v3488 = vmul.f32 %v3456, %v3456
        %v3489 = vmul.f32 %v3457, %v3457
        %v3490 = vmul.f32 %v3458, %v3458
        %v3491 = vmul.f32 %v3459, %v3459
        %v3492 = vmul.f32 %v3460, %v3460
        %v3493 = vmul.f32 %v3461, %v3461
        %v3494 = vmul.f32 %v3462, %v3462
        %v3495 = vmul.f32 %v3463, %v3463
        %v3496 = vmul.f32 %v3464, %v3464
        %v3497 = vmul.f32 %v3465, %v3465
        %v3498 = vmul.f32 %v3466, %v3466
        %v3499 = vmul.f32 %v3467, %v3467
        %v3500 = vmul.f32 %v3468, %v3468
        %v3501 = vmul.f32 %v3469, %v3469
        %v3502 = vmul.f32 %v3470, %v3470
        %v3503 = vmul.f32 %v3471, %v3471
        %v3504 = vmul.f32 %v3472, %v3472
        %v3505 = vmul.f32 %v3473, %v3473
        %v3506 = vmul.f32 %v3474, %v3474
        %v3507 = vmul.f32 %v3475, %v3475
        %v3508 = vadd.f32 %v3476, %v3477
        %v3509 = vadd.f32 %v3508, %v3478
        %v3510 = vadd.f32 %v3509, %v3479
        %v3511 = vadd.f32 %v3510, %v3480
        %v3512 = vadd.f32 %v3511, %v3481
        %v3513 = vadd.f32 %v3512, %v3482
        %v3514 = vadd.f32 %v3513, %v3483
        %v3515 = vadd.f32 %v3514, %v3484
        %v3516 = vadd.f32 %v3515, %v3485
        %v3517 = vadd.f32 %v3516, %v3486
        %v3518 = vadd.f32 %v3517, %v3487
        %v3519 = vadd.f32 %v3518, %v3488
        %v3520 = vadd.f32 %v3519, %v3489
        %v3521 = vadd.f32 %v3520, %v3490
        %v3522 = vadd.f32 %v3521, %v3491
        %v3523 = vadd.f32 %v3522, %v3492
        %v3524 = vadd.f32 %v3523, %v3493
        %v3525 = vadd.f32 %v3524, %v3494
        %v3526 = vadd.f32 %v3525, %v3495
        %v3527 = vadd.f32 %v3526, %v3496
        %v3528 = vadd.f32 %v3527, %v3497
        %v3529 = vadd.f32 %v3528, %v3498
        %v3530 = vadd.f32 %v3529, %v3499
        %v3531 = vadd.f32 %v3530, %v3500
        %v3532 = vadd.f32 %v3531, %v3501
        %v3533 = vadd.f32 %v3532, %v3502
        %v3534 = vadd.f32 %v3533, %v3503
        %v3535 = vadd.f32 %v3534, %v3504
        %v3536 = vadd.f32 %v3535, %v3505
        %v3537 = vadd.f32 %v3536, %v3506
        %v3538 = vadd.f32 %v3537, %v3507
        %v3539 = vrot.slane %v3538, 4
        %v3540 = vadd.f32 %v3538, %v3539
        %v3541 = vrot.slane %v3540, 2
        %v3542 = vadd.f32 %v3540, %v3541
        %v3543 = vrot.slane %v3542, 1
        %v3544 = vadd.f32 %v3542, %v3543
        %3545 = vst [vmem:[%s193] sm:$0x1] %v3442
        %3546 = vst [vmem:[%s199] sm:$0x1] %v3544
        %s3547 = sand.u32 %s98, 1
        %s3548 = scalar_lea.sflag [#allocation3], %s3547
        %s3549 = sand.u32 %s98, 1
        %s3550 = scalar_lea.vmem [#allocation2], %s3549
        %s3551 = sand.u32 %s124, 1
        %s3552 = scalar_lea.sflag [#allocation5], %s3551
        %s3553 = sand.u32 %s124, 1
        %s3554 = scalar_lea.vmem [#allocation4], %s3553
        // Predicated region
        $region33: #{tpu_custom_call.1} parent=31 // pred_check
          %p3555 = pneg %p108
        $region34: #{tpu_custom_call.1} parent=31 // pred_check_branch
          %3557 = sbr.rel (%p3555) target = $region36
        $region35: #{tpu_custom_call.1} parent=31 // pred_region
          %s3559 = ssub.s32 16, 16
          %3560 = vsyncadd %s3548, %s3559
          %s3561 = smul.addr %s22, 16
          %s3562 = scalar_lea.hbm %s3, %s3561
          %s3564 = sshll.u32 %s3550, 4
          %s3565 = int_to_ptr.vmem [resolvable:$true] %s3564
          %3567 = dma.vmem_to_hbm [thread:$0]  %s3565, 16, %s3562, %s3548
        $region36: #{tpu_custom_call.1} parent=31 // pred_fallthru
          _
        // Predicated region
        $region37: #{tpu_custom_call.1} parent=31 // pred_check
          %p3568 = pneg %p134
        $region38: #{tpu_custom_call.1} parent=31 // pred_check_branch
          %3570 = sbr.rel (%p3568) target = $region40
        $region39: #{tpu_custom_call.1} parent=31 // pred_region
          %s3572 = ssub.s32 16, 16
          %3573 = vsyncadd %s3552, %s3572
          %s3574 = smul.addr %s22, 16
          %s3575 = scalar_lea.hbm %s4, %s3574
          %s3577 = sshll.u32 %s3554, 4
          %s3578 = int_to_ptr.vmem [resolvable:$true] %s3577
          %3580 = dma.vmem_to_hbm [thread:$0]  %s3578, 16, %s3575, %s3552
        $region40: #{tpu_custom_call.1} parent=31 // pred_fallthru
          _
      $region32: #{tpu_custom_call.1} parent=5 // pred_fallthru
        _
      %p3581 = scmp.le.s32.totalorder 2, %s17
      // Predicated region
      $region41: #{tpu_custom_call.1} parent=5 // pred_check
        %p3582 = pneg %p3581
      $region42: #{tpu_custom_call.1} parent=5 // pred_check_branch
        %3584 = sbr.rel (%p3582) target = $region44
      $region43: #{tpu_custom_call.1} parent=5 // pred_region
        %s3585 = ssub.s32 %s17, 2
        // Predicated region
        $region45: #{tpu_custom_call.1} parent=43 // pred_check
          %p3586 = pneg %p114
        $region46: #{tpu_custom_call.1} parent=43 // pred_check_branch
          %3588 = sbr.rel (%p3586) target = $region48
        $region47: #{tpu_custom_call.1} parent=43 // pred_region
          %s3589 = sand.u32 %s99, 1
          %s3590 = scalar_lea.sflag [#allocation3], %s3589
          %s3591 = sand.u32 %s99, 1
          %s3592 = scalar_lea.vmem [#allocation2], %s3591
          %3593 = dma.done %s3590, 16
        $region48: #{tpu_custom_call.1} parent=43 // pred_fallthru
          _
        // Predicated region
        $region49: #{tpu_custom_call.1} parent=43 // pred_check
          %p3594 = pneg %p140
        $region50: #{tpu_custom_call.1} parent=43 // pred_check_branch
          %3596 = sbr.rel (%p3594) target = $region52
        $region51: #{tpu_custom_call.1} parent=43 // pred_region
          %s3597 = sand.u32 %s125, 1
          %s3598 = scalar_lea.sflag [#allocation5], %s3597
          %s3599 = sand.u32 %s125, 1
          %s3600 = scalar_lea.vmem [#allocation4], %s3599
          %3601 = dma.done %s3598, 16
        $region52: #{tpu_custom_call.1} parent=43 // pred_fallthru
          _
      $region44: #{tpu_custom_call.1} parent=5 // pred_fallthru
        _
    $region6: #{tpu_custom_call.1} parent=1 // loop_footer
      %s21 = sadd.s32 1, %s17
    $region7: #{tpu_custom_call.1} parent=1 // loop_footer_branch
      %16 = sbr.rel target = $region3
    $region8: #{tpu_custom_call.1} parent=1 // loop_exit
      _
    %3602 = vsyncpa [#allocation3], 1
    %s3603 = scalar_lea.sflag [#allocation3], 1
    %3604 = vsyncpa %s3603, 1
    %3605 = vsyncpa [#allocation5], 1
    %s3606 = scalar_lea.sflag [#allocation5], 1
    %3607 = vsyncpa %s3606, 1

</llo_original>
